<compile_context>
chip_gen: v6e
topology: v6e:2x2x1
jax: 0.10.0
libtpu: 0.0.40
codegen_flags: <defaults>
</compile_context>

<pallas_src>
import math

import jax
import jax.numpy as jnp
from jax.experimental import pallas as pl

# ---- model hyper-parameters (small, consistent with the module's config) ----
B = 2            # batch
S = 8            # sequence length
H = 32           # hidden_size
NH = 4           # num_attention_heads
HD = H // NH     # attention_head_size
I = 64           # intermediate_size
NLAYERS = 2      # num_hidden_layers
MAX_POS = 128    # max_position_embeddings
TYPE_VOCAB = 2   # type_vocab_size
EPS = 1e-12

_INV_SQRT2 = 1.0 / math.sqrt(2.0)
_ATTN_SCALE = 1.0 / math.sqrt(HD)

# bf16 weight-slab row layout (per layer): rows are 16-row-tile aligned.
_W_ROWS = 3 * H + I            # 160
_W_COLS = 3 * H                # 96
_ROW_WQKV = 0                  # (H,   3H)
_ROW_WAO = H                   # (H,    H)
_ROW_WI = 2 * H                # (H,    I)
_ROW_WO = 3 * H                # (I,    H)

# f32 vector-table rows (width 3H, zero padded): 2 embedding-LN rows then
# 8 rows per layer: [bqkv, bi, bao, ln1w, ln1b, bo, ln2w, ln2b]
_V_EMB_W, _V_EMB_B = 0, 1
_V_LAYER0 = 2
_V_PER_LAYER = 8


# --------------------------- in-kernel helpers ---------------------------
def _layer_norm(x, w, b):
    # TF-style layernorm (eps inside the sqrt); rsqrt goes to the EUP slot.
    u = jnp.mean(x, axis=-1, keepdims=True)
    d = x - u
    s = jnp.mean(d * d, axis=-1, keepdims=True)
    return w * (d * jax.lax.rsqrt(s + EPS)) + b


def _gelu(x):
    return x * 0.5 * (1.0 + jax.lax.erf(x * _INV_SQRT2))


# --------------------------- fused Pallas kernel ---------------------------
def cross_model_kernel(x_ref, mask_ref, w_ref, v_ref, out_ref):
    # x_ref:    (B*S, H) f32   input + position + type embeddings (pre-summed)
    # mask_ref: (B, S, S) f32  additive attention mask, pre-broadcast
    # w_ref:    (L, 160, 96) bf16 weight slab (Q weights pre-scaled by 1/sqrt(HD))
    # v_ref:    (2 + 8L, 96) f32 bias / LayerNorm row table
    # out_ref:  (L, B*S, H) f32 per-layer encoder outputs
    mask = mask_ref[...]                                       # (B, S, S)

    # --- embeddings: LayerNorm (dropout omitted: eval mode => identity) ---
    hidden = _layer_norm(x_ref[...],
                         v_ref[_V_EMB_W:_V_EMB_W + 1, 0:H],
                         v_ref[_V_EMB_B:_V_EMB_B + 1, 0:H])

    for l in range(NLAYERS):                                   # static unroll
        r = _V_LAYER0 + _V_PER_LAYER * l
        bqkv = v_ref[r + 0:r + 1, 0:3 * H]                     # (1, 96)
        bi = v_ref[r + 1:r + 2, 0:I]                           # (1, 64)
        bao = v_ref[r + 2:r + 3, 0:H]
        ln1w = v_ref[r + 3:r + 4, 0:H]
        ln1b = v_ref[r + 4:r + 5, 0:H]
        bo = v_ref[r + 5:r + 6, 0:H]
        ln2w = v_ref[r + 6:r + 7, 0:H]
        ln2b = v_ref[r + 7:r + 8, 0:H]

        wqkv = w_ref[l, _ROW_WQKV:_ROW_WQKV + H, 0:3 * H]      # (32, 96) bf16
        wao = w_ref[l, _ROW_WAO:_ROW_WAO + H, 0:H]             # (32, 32) bf16
        wi = w_ref[l, _ROW_WI:_ROW_WI + H, 0:I]                # (32, 64) bf16
        wo = w_ref[l, _ROW_WO:_ROW_WO + I, 0:H]                # (64, 32) bf16

        # --- fused QKV projection: one (B*S, H) @ (H, 3H) bf16 matmul ---
        hb = hidden.astype(jnp.bfloat16)
        qkv = jnp.dot(hb, wqkv, preferred_element_type=jnp.float32) + bqkv
        qkv_b = qkv.astype(jnp.bfloat16).reshape(B, S, 3 * H)  # leading split

        # --- per-head attention; contexts stay in vregs (no VMEM scratch) ---
        ctx_heads = []
        for h in range(NH):                                    # static unroll
            qh = qkv_b[:, :, h * HD:(h + 1) * HD]              # (B, S, HD)
            kh = qkv_b[:, :, H + h * HD:H + (h + 1) * HD]
            vh = qkv_b[:, :, 2 * H + h * HD:2 * H + (h + 1) * HD]
            # 1/sqrt(HD) already folded into wq/bq at pack time
            s = jnp.einsum('bqd,bkd->bqk', qh, kh,
                           preferred_element_type=jnp.float32) + mask
            m = jnp.max(s, axis=-1, keepdims=True)
            e = jnp.exp(s - m)
            p = e / jnp.sum(e, axis=-1, keepdims=True)         # exact divide
            ctx_heads.append(
                jnp.einsum('bqk,bkd->bqd', p.astype(jnp.bfloat16), vh,
                           preferred_element_type=jnp.float32))
        ctx = jnp.concatenate(ctx_heads, axis=-1).reshape(B * S, H)

        # --- CrossSelfOutput: dense + residual + LN ---
        att = jnp.dot(ctx.astype(jnp.bfloat16), wao,
                      preferred_element_type=jnp.float32) + bao
        att = _layer_norm(att + hidden, ln1w, ln1b)

        # --- CrossIntermediate: dense + gelu ---
        inter = _gelu(jnp.dot(att.astype(jnp.bfloat16), wi,
                              preferred_element_type=jnp.float32) + bi)

        # --- CrossOutput: dense + residual + LN ---
        out = jnp.dot(inter.astype(jnp.bfloat16), wo,
                      preferred_element_type=jnp.float32) + bo
        hidden = _layer_norm(out + att, ln2w, ln2b)

        out_ref[l] = hidden                                    # per-layer output


# --------------------------- pallas_call wrapper ---------------------------
@jax.jit
def _forward_impl(x2d, mask3, wslab, vtab):
    # No grid / no BlockSpecs: single invocation, whole operands in VMEM,
    # no pipeline prologue/epilogue or double-buffering.
    return pl.pallas_call(
        cross_model_kernel,
        out_shape=jax.ShapeDtypeStruct((NLAYERS, B * S, H), jnp.float32),
    )(x2d, mask3, wslab, vtab)


def cross_model_forward(concat_input, concat_type, attention_mask, params,
                        output_all_encoded_layers=True):
    """Mirrors CrossModel.forward (single fused Pallas call)."""
    if attention_mask is None:
        attention_mask = jnp.ones((B, S), jnp.float32)
    if concat_type is None:
        concat_type = jnp.zeros((B, S), jnp.int32)

    # extended attention mask: (1 - m) * -10000, materialized once at the
    # score shape (B, S, S) so the kernel never emits a broadcast.
    ext_mask = (1.0 - attention_mask.astype(jnp.float32)) * -10000.0   # (B, S)
    mask3 = jnp.broadcast_to(ext_mask[:, None, :], (B, S, S))

    # embedding-table gathers + sum stay in plain JAX (tiny); LN in kernel.
    pos = params["pos_emb"][jnp.arange(S)]                             # (S, H)
    typ = params["type_emb"][concat_type]                              # (B, S, H)
    x2d = (concat_input.astype(jnp.float32) + pos[None, :, :] + typ
           ).reshape(B * S, H)

    pk = params["packed"]
    stacked = _forward_impl(x2d, mask3, pk["wslab"], pk["vtab"])
    stacked = stacked.reshape(NLAYERS, B, S, H)

    encoded_layers = [stacked[l] for l in range(NLAYERS)]
    if not output_all_encoded_layers:
        return encoded_layers[-1]
    return encoded_layers


# ------------------- parameter packing / deterministic init -------------------
def _row(v):
    r = jnp.zeros((_W_COLS,), jnp.float32)
    return r.at[:v.shape[0]].set(v.astype(jnp.float32))


def pack_params(params):
    layers = params["layers"]
    scale = jnp.float32(_ATTN_SCALE)

    blocks, vrows = [], [_row(params["emb_lnw"]), _row(params["emb_lnb"])]
    for l in layers:
        # fold attention scale into Q weight & bias (host-side, one time)
        wqkv = jnp.concatenate([l["wq"] * scale, l["wk"], l["wv"]], axis=1)
        blk = jnp.zeros((_W_ROWS, _W_COLS), jnp.float32)
        blk = blk.at[_ROW_WQKV:_ROW_WQKV + H, 0:3 * H].set(wqkv)
        blk = blk.at[_ROW_WAO:_ROW_WAO + H, 0:H].set(l["wao"])
        blk = blk.at[_ROW_WI:_ROW_WI + H, 0:I].set(l["wi"])
        blk = blk.at[_ROW_WO:_ROW_WO + I, 0:H].set(l["wo"])
        blocks.append(blk)

        bqkv = jnp.concatenate([l["bq"] * scale, l["bk"], l["bv"]])
        vrows += [_row(bqkv), _row(l["bi"]), _row(l["bao"]),
                  _row(l["ln1w"]), _row(l["ln1b"]), _row(l["bo"]),
                  _row(l["ln2w"]), _row(l["ln2b"])]

    wslab = jnp.stack(blocks).astype(jnp.bfloat16)        # (L, 160, 96) bf16
    vtab = jnp.stack(vrows)                               # (2+8L, 96) f32
    return dict(wslab=wslab, vtab=vtab)


def init_params(key):
    def nrm(k, shape, scale=0.02):
        return (scale * jax.random.normal(k, shape)).astype(jnp.float32)

    keys = jax.random.split(key, 2 + NLAYERS)
    layers = []
    for l in range(NLAYERS):
        lk = jax.random.split(keys[2 + l], 6)
        layers.append({
            "wq": nrm(lk[0], (H, H)), "bq": jnp.zeros((H,), jnp.float32),
            "wk": nrm(lk[1], (H, H)), "bk": jnp.zeros((H,), jnp.float32),
            "wv": nrm(lk[2], (H, H)), "bv": jnp.zeros((H,), jnp.float32),
            "wao": nrm(lk[3], (H, H)), "bao": jnp.zeros((H,), jnp.float32),
            "ln1w": jnp.ones((H,), jnp.float32),
            "ln1b": jnp.zeros((H,), jnp.float32),
            "wi": nrm(lk[4], (H, I)), "bi": jnp.zeros((I,), jnp.float32),
            "wo": nrm(lk[5], (I, H)), "bo": jnp.zeros((H,), jnp.float32),
            "ln2w": jnp.ones((H,), jnp.float32),
            "ln2b": jnp.zeros((H,), jnp.float32),
        })
    params = {
        "pos_emb": nrm(keys[0], (MAX_POS, H)),
        "type_emb": nrm(keys[1], (TYPE_VOCAB, H)),
        "emb_lnw": jnp.ones((H,), jnp.float32),
        "emb_lnb": jnp.zeros((H,), jnp.float32),
        "layers": layers,
    }
    params["packed"] = pack_params(params)
    return params


if __name__ == "__main__":
    key = jax.random.PRNGKey(0)
    k_param, k_input = jax.random.split(key)

    params = init_params(k_param)
    concat_input = jax.random.normal(k_input, (B, S, H), jnp.float32)
    concat_type = jnp.zeros((B, S), jnp.int32)
    attention_mask = jnp.ones((B, S), jnp.float32)

    encoded_layers = cross_model_forward(concat_input, concat_type,
                                         attention_mask, params,
                                         output_all_encoded_layers=True)
    for out in encoded_layers:
        jax.block_until_ready(out)
    assert len(encoded_layers) == NLAYERS
    assert encoded_layers[-1].shape == (B, S, H)
    assert all(bool(jnp.all(jnp.isfinite(o))) for o in encoded_layers)
    print("KERNEL_OK")
</pallas_src>

<mosaic_0001>
module attributes {stable_mosaic.version = 11 : i64} {
  func.func @cross_model_kernel(%arg0: memref<16x32xf32, #tpu.memory_space<vmem>>, %arg1: memref<2x8x8xf32, #tpu.memory_space<vmem>>, %arg2: memref<2x160x96xbf16, #tpu.memory_space<vmem>>, %arg3: memref<18x96xf32, #tpu.memory_space<vmem>>, %arg4: memref<2x16x32xf32, #tpu.memory_space<vmem>>) attributes {dimension_semantics = [], scalar_prefetch = 0 : i64, scratch_operands = 0 : i64, tpu.core_type = #tpu.core_type<tc>} {
    %c0 = arith.constant 0 : index
    %c0_0 = arith.constant 0 : index
    %c0_1 = arith.constant 0 : index
    %0 = vector.load %arg1[%c0, %c0_0, %c0_1] : memref<2x8x8xf32, #tpu.memory_space<vmem>>, vector<2x8x8xf32>
    %c0_2 = arith.constant 0 : index
    %c0_3 = arith.constant 0 : index
    %1 = vector.load %arg0[%c0_2, %c0_3] : memref<16x32xf32, #tpu.memory_space<vmem>>, vector<16x32xf32>
    %c0_4 = arith.constant 0 : index
    %c0_5 = arith.constant 0 : index
    %2 = vector.load %arg3[%c0_4, %c0_5] : memref<18x96xf32, #tpu.memory_space<vmem>>, vector<1x32xf32>
    %c1 = arith.constant 1 : index
    %c0_6 = arith.constant 0 : index
    %3 = vector.load %arg3[%c1, %c0_6] : memref<18x96xf32, #tpu.memory_space<vmem>>, vector<1x32xf32>
    %cst = arith.constant dense<0.000000e+00> : vector<16xf32>
    %4 = vector.multi_reduction <add>, %1, %cst [1] : vector<16x32xf32> to vector<16xf32>
    %5 = vector.shape_cast %4 : vector<16xf32> to vector<16x1xf32>
    %cst_7 = arith.constant 3.200000e+01 : f32
    %6 = vector.broadcast %cst_7 : f32 to vector<16x1xf32>
    %7 = arith.divf %5, %6 : vector<16x1xf32>
    %8 = vector.broadcast %7 : vector<16x1xf32> to vector<16x32xf32>
    %9 = arith.subf %1, %8 : vector<16x32xf32>
    %10 = arith.mulf %9, %9 : vector<16x32xf32>
    %cst_8 = arith.constant dense<0.000000e+00> : vector<16xf32>
    %11 = vector.multi_reduction <add>, %10, %cst_8 [1] : vector<16x32xf32> to vector<16xf32>
    %12 = vector.shape_cast %11 : vector<16xf32> to vector<16x1xf32>
    %cst_9 = arith.constant 3.200000e+01 : f32
    %13 = vector.broadcast %cst_9 : f32 to vector<16x1xf32>
    %14 = arith.divf %12, %13 : vector<16x1xf32>
    %cst_10 = arith.constant 9.99999996E-13 : f32
    %15 = vector.broadcast %cst_10 : f32 to vector<16x1xf32>
    %16 = arith.addf %14, %15 : vector<16x1xf32>
    %17 = math.rsqrt %16 : vector<16x1xf32>
    %18 = vector.broadcast %17 : vector<16x1xf32> to vector<16x32xf32>
    %19 = arith.mulf %9, %18 : vector<16x32xf32>
    %20 = vector.broadcast %2 : vector<1x32xf32> to vector<16x32xf32>
    %21 = arith.mulf %20, %19 : vector<16x32xf32>
    %22 = vector.broadcast %3 : vector<1x32xf32> to vector<16x32xf32>
    %23 = arith.addf %21, %22 : vector<16x32xf32>
    %c2 = arith.constant 2 : index
    %c0_11 = arith.constant 0 : index
    %24 = vector.load %arg3[%c2, %c0_11] : memref<18x96xf32, #tpu.memory_space<vmem>>, vector<1x96xf32>
    %c3 = arith.constant 3 : index
    %c0_12 = arith.constant 0 : index
    %25 = vector.load %arg3[%c3, %c0_12] : memref<18x96xf32, #tpu.memory_space<vmem>>, vector<1x64xf32>
    %c4 = arith.constant 4 : index
    %c0_13 = arith.constant 0 : index
    %26 = vector.load %arg3[%c4, %c0_13] : memref<18x96xf32, #tpu.memory_space<vmem>>, vector<1x32xf32>
    %c5 = arith.constant 5 : index
    %c0_14 = arith.constant 0 : index
    %27 = vector.load %arg3[%c5, %c0_14] : memref<18x96xf32, #tpu.memory_space<vmem>>, vector<1x32xf32>
    %c6 = arith.constant 6 : index
    %c0_15 = arith.constant 0 : index
    %28 = vector.load %arg3[%c6, %c0_15] : memref<18x96xf32, #tpu.memory_space<vmem>>, vector<1x32xf32>
    %c7 = arith.constant 7 : index
    %c0_16 = arith.constant 0 : index
    %29 = vector.load %arg3[%c7, %c0_16] : memref<18x96xf32, #tpu.memory_space<vmem>>, vector<1x32xf32>
    %c8 = arith.constant 8 : index
    %c0_17 = arith.constant 0 : index
    %30 = vector.load %arg3[%c8, %c0_17] : memref<18x96xf32, #tpu.memory_space<vmem>>, vector<1x32xf32>
    %c9 = arith.constant 9 : index
    %c0_18 = arith.constant 0 : index
    %31 = vector.load %arg3[%c9, %c0_18] : memref<18x96xf32, #tpu.memory_space<vmem>>, vector<1x32xf32>
    %c0_19 = arith.constant 0 : index
    %c0_20 = arith.constant 0 : index
    %c0_21 = arith.constant 0 : index
    %32 = vector.load %arg2[%c0_19, %c0_20, %c0_21] : memref<2x160x96xbf16, #tpu.memory_space<vmem>>, vector<1x32x96xbf16>
    %33 = vector.shape_cast %32 : vector<1x32x96xbf16> to vector<32x96xbf16>
    %c0_22 = arith.constant 0 : index
    %c32 = arith.constant 32 : index
    %c0_23 = arith.constant 0 : index
    %34 = vector.load %arg2[%c0_22, %c32, %c0_23] : memref<2x160x96xbf16, #tpu.memory_space<vmem>>, vector<1x32x32xbf16>
    %35 = vector.shape_cast %34 : vector<1x32x32xbf16> to vector<32x32xbf16>
    %c0_24 = arith.constant 0 : index
    %c64 = arith.constant 64 : index
    %c0_25 = arith.constant 0 : index
    %36 = vector.load %arg2[%c0_24, %c64, %c0_25] : memref<2x160x96xbf16, #tpu.memory_space<vmem>>, vector<1x32x64xbf16>
    %37 = vector.shape_cast %36 : vector<1x32x64xbf16> to vector<32x64xbf16>
    %c0_26 = arith.constant 0 : index
    %c96 = arith.constant 96 : index
    %c0_27 = arith.constant 0 : index
    %38 = vector.load %arg2[%c0_26, %c96, %c0_27] : memref<2x160x96xbf16, #tpu.memory_space<vmem>>, vector<1x64x32xbf16>
    %39 = vector.shape_cast %38 : vector<1x64x32xbf16> to vector<64x32xbf16>
    %40 = arith.truncf %23 : vector<16x32xf32> to vector<16x32xbf16>
    %cst_28 = arith.constant dense<0.000000e+00> : vector<16x96xf32>
    %41 = tpu.matmul %40, %33, %cst_28 {dimension_numbers = #tpu.dot_dimension_numbers<[1], [0], [0], [1], [0, 0, 1, 1], [], []>} : vector<16x32xbf16>, vector<32x96xbf16>, vector<16x96xf32> -> vector<16x96xf32>
    %42 = vector.broadcast %24 : vector<1x96xf32> to vector<16x96xf32>
    %43 = arith.addf %41, %42 : vector<16x96xf32>
    %44 = arith.truncf %43 : vector<16x96xf32> to vector<16x96xbf16>
    %45 = vector.shape_cast %44 : vector<16x96xbf16> to vector<2x8x96xbf16>
    %46 = vector.extract_strided_slice %45 {offsets = [0, 0, 0], sizes = [2, 8, 8], strides = [1, 1, 1]} : vector<2x8x96xbf16> to vector<2x8x8xbf16>
    %47 = vector.extract_strided_slice %45 {offsets = [0, 0, 32], sizes = [2, 8, 8], strides = [1, 1, 1]} : vector<2x8x96xbf16> to vector<2x8x8xbf16>
    %48 = vector.extract_strided_slice %45 {offsets = [0, 0, 64], sizes = [2, 8, 8], strides = [1, 1, 1]} : vector<2x8x96xbf16> to vector<2x8x8xbf16>
    "tpu.trace_start"() <{level = 10 : i32, message = "bqd,bkd->bqk"}> : () -> ()
    %cst_29 = arith.constant dense<0.000000e+00> : vector<2x8x8xf32>
    %49 = tpu.matmul %46, %47, %cst_29 {dimension_numbers = #tpu.dot_dimension_numbers<[2], [2], [1], [1], [0, 0, 0, 1, 1, 1], [0], [0]>} : vector<2x8x8xbf16>, vector<2x8x8xbf16>, vector<2x8x8xf32> -> vector<2x8x8xf32>
    "tpu.trace_stop"() : () -> ()
    %50 = arith.addf %49, %0 : vector<2x8x8xf32>
    %cst_30 = arith.constant dense<0xFF800000> : vector<2x8xf32>
    %51 = vector.multi_reduction <maximumf>, %50, %cst_30 [2] : vector<2x8x8xf32> to vector<2x8xf32>
    %52 = vector.shape_cast %51 : vector<2x8xf32> to vector<2x8x1xf32>
    %53 = vector.broadcast %52 : vector<2x8x1xf32> to vector<2x8x8xf32>
    %54 = arith.subf %50, %53 : vector<2x8x8xf32>
    %55 = math.exp %54 : vector<2x8x8xf32>
    %cst_31 = arith.constant dense<0.000000e+00> : vector<2x8xf32>
    %56 = vector.multi_reduction <add>, %55, %cst_31 [2] : vector<2x8x8xf32> to vector<2x8xf32>
    %57 = vector.shape_cast %56 : vector<2x8xf32> to vector<2x8x1xf32>
    %58 = vector.broadcast %57 : vector<2x8x1xf32> to vector<2x8x8xf32>
    %59 = arith.divf %55, %58 : vector<2x8x8xf32>
    %60 = arith.truncf %59 : vector<2x8x8xf32> to vector<2x8x8xbf16>
    "tpu.trace_start"() <{level = 10 : i32, message = "bqk,bkd->bqd"}> : () -> ()
    %cst_32 = arith.constant dense<0.000000e+00> : vector<2x8x8xf32>
    %61 = tpu.matmul %60, %48, %cst_32 {dimension_numbers = #tpu.dot_dimension_numbers<[2], [1], [1], [2], [0, 0, 0, 1, 1, 2], [0], [0]>} : vector<2x8x8xbf16>, vector<2x8x8xbf16>, vector<2x8x8xf32> -> vector<2x8x8xf32>
    "tpu.trace_stop"() : () -> ()
    %62 = vector.extract_strided_slice %45 {offsets = [0, 0, 8], sizes = [2, 8, 8], strides = [1, 1, 1]} : vector<2x8x96xbf16> to vector<2x8x8xbf16>
    %63 = vector.extract_strided_slice %45 {offsets = [0, 0, 40], sizes = [2, 8, 8], strides = [1, 1, 1]} : vector<2x8x96xbf16> to vector<2x8x8xbf16>
    %64 = vector.extract_strided_slice %45 {offsets = [0, 0, 72], sizes = [2, 8, 8], strides = [1, 1, 1]} : vector<2x8x96xbf16> to vector<2x8x8xbf16>
    "tpu.trace_start"() <{level = 10 : i32, message = "bqd,bkd->bqk"}> : () -> ()
    %cst_33 = arith.constant dense<0.000000e+00> : vector<2x8x8xf32>
    %65 = tpu.matmul %62, %63, %cst_33 {dimension_numbers = #tpu.dot_dimension_numbers<[2], [2], [1], [1], [0, 0, 0, 1, 1, 1], [0], [0]>} : vector<2x8x8xbf16>, vector<2x8x8xbf16>, vector<2x8x8xf32> -> vector<2x8x8xf32>
    "tpu.trace_stop"() : () -> ()
    %66 = arith.addf %65, %0 : vector<2x8x8xf32>
    %cst_34 = arith.constant dense<0xFF800000> : vector<2x8xf32>
    %67 = vector.multi_reduction <maximumf>, %66, %cst_34 [2] : vector<2x8x8xf32> to vector<2x8xf32>
    %68 = vector.shape_cast %67 : vector<2x8xf32> to vector<2x8x1xf32>
    %69 = vector.broadcast %68 : vector<2x8x1xf32> to vector<2x8x8xf32>
    %70 = arith.subf %66, %69 : vector<2x8x8xf32>
    %71 = math.exp %70 : vector<2x8x8xf32>
    %cst_35 = arith.constant dense<0.000000e+00> : vector<2x8xf32>
    %72 = vector.multi_reduction <add>, %71, %cst_35 [2] : vector<2x8x8xf32> to vector<2x8xf32>
    %73 = vector.shape_cast %72 : vector<2x8xf32> to vector<2x8x1xf32>
    %74 = vector.broadcast %73 : vector<2x8x1xf32> to vector<2x8x8xf32>
    %75 = arith.divf %71, %74 : vector<2x8x8xf32>
    %76 = arith.truncf %75 : vector<2x8x8xf32> to vector<2x8x8xbf16>
    "tpu.trace_start"() <{level = 10 : i32, message = "bqk,bkd->bqd"}> : () -> ()
    %cst_36 = arith.constant dense<0.000000e+00> : vector<2x8x8xf32>
    %77 = tpu.matmul %76, %64, %cst_36 {dimension_numbers = #tpu.dot_dimension_numbers<[2], [1], [1], [2], [0, 0, 0, 1, 1, 2], [0], [0]>} : vector<2x8x8xbf16>, vector<2x8x8xbf16>, vector<2x8x8xf32> -> vector<2x8x8xf32>
    "tpu.trace_stop"() : () -> ()
    %78 = vector.extract_strided_slice %45 {offsets = [0, 0, 16], sizes = [2, 8, 8], strides = [1, 1, 1]} : vector<2x8x96xbf16> to vector<2x8x8xbf16>
    %79 = vector.extract_strided_slice %45 {offsets = [0, 0, 48], sizes = [2, 8, 8], strides = [1, 1, 1]} : vector<2x8x96xbf16> to vector<2x8x8xbf16>
    %80 = vector.extract_strided_slice %45 {offsets = [0, 0, 80], sizes = [2, 8, 8], strides = [1, 1, 1]} : vector<2x8x96xbf16> to vector<2x8x8xbf16>
    "tpu.trace_start"() <{level = 10 : i32, message = "bqd,bkd->bqk"}> : () -> ()
    %cst_37 = arith.constant dense<0.000000e+00> : vector<2x8x8xf32>
    %81 = tpu.matmul %78, %79, %cst_37 {dimension_numbers = #tpu.dot_dimension_numbers<[2], [2], [1], [1], [0, 0, 0, 1, 1, 1], [0], [0]>} : vector<2x8x8xbf16>, vector<2x8x8xbf16>, vector<2x8x8xf32> -> vector<2x8x8xf32>
    "tpu.trace_stop"() : () -> ()
    %82 = arith.addf %81, %0 : vector<2x8x8xf32>
    %cst_38 = arith.constant dense<0xFF800000> : vector<2x8xf32>
    %83 = vector.multi_reduction <maximumf>, %82, %cst_38 [2] : vector<2x8x8xf32> to vector<2x8xf32>
    %84 = vector.shape_cast %83 : vector<2x8xf32> to vector<2x8x1xf32>
    %85 = vector.broadcast %84 : vector<2x8x1xf32> to vector<2x8x8xf32>
    %86 = arith.subf %82, %85 : vector<2x8x8xf32>
    %87 = math.exp %86 : vector<2x8x8xf32>
    %cst_39 = arith.constant dense<0.000000e+00> : vector<2x8xf32>
    %88 = vector.multi_reduction <add>, %87, %cst_39 [2] : vector<2x8x8xf32> to vector<2x8xf32>
    %89 = vector.shape_cast %88 : vector<2x8xf32> to vector<2x8x1xf32>
    %90 = vector.broadcast %89 : vector<2x8x1xf32> to vector<2x8x8xf32>
    %91 = arith.divf %87, %90 : vector<2x8x8xf32>
    %92 = arith.truncf %91 : vector<2x8x8xf32> to vector<2x8x8xbf16>
    "tpu.trace_start"() <{level = 10 : i32, message = "bqk,bkd->bqd"}> : () -> ()
    %cst_40 = arith.constant dense<0.000000e+00> : vector<2x8x8xf32>
    %93 = tpu.matmul %92, %80, %cst_40 {dimension_numbers = #tpu.dot_dimension_numbers<[2], [1], [1], [2], [0, 0, 0, 1, 1, 2], [0], [0]>} : vector<2x8x8xbf16>, vector<2x8x8xbf16>, vector<2x8x8xf32> -> vector<2x8x8xf32>
    "tpu.trace_stop"() : () -> ()
    %94 = vector.extract_strided_slice %45 {offsets = [0, 0, 24], sizes = [2, 8, 8], strides = [1, 1, 1]} : vector<2x8x96xbf16> to vector<2x8x8xbf16>
    %95 = vector.extract_strided_slice %45 {offsets = [0, 0, 56], sizes = [2, 8, 8], strides = [1, 1, 1]} : vector<2x8x96xbf16> to vector<2x8x8xbf16>
    %96 = vector.extract_strided_slice %45 {offsets = [0, 0, 88], sizes = [2, 8, 8], strides = [1, 1, 1]} : vector<2x8x96xbf16> to vector<2x8x8xbf16>
    "tpu.trace_start"() <{level = 10 : i32, message = "bqd,bkd->bqk"}> : () -> ()
    %cst_41 = arith.constant dense<0.000000e+00> : vector<2x8x8xf32>
    %97 = tpu.matmul %94, %95, %cst_41 {dimension_numbers = #tpu.dot_dimension_numbers<[2], [2], [1], [1], [0, 0, 0, 1, 1, 1], [0], [0]>} : vector<2x8x8xbf16>, vector<2x8x8xbf16>, vector<2x8x8xf32> -> vector<2x8x8xf32>
    "tpu.trace_stop"() : () -> ()
    %98 = arith.addf %97, %0 : vector<2x8x8xf32>
    %cst_42 = arith.constant dense<0xFF800000> : vector<2x8xf32>
    %99 = vector.multi_reduction <maximumf>, %98, %cst_42 [2] : vector<2x8x8xf32> to vector<2x8xf32>
    %100 = vector.shape_cast %99 : vector<2x8xf32> to vector<2x8x1xf32>
    %101 = vector.broadcast %100 : vector<2x8x1xf32> to vector<2x8x8xf32>
    %102 = arith.subf %98, %101 : vector<2x8x8xf32>
    %103 = math.exp %102 : vector<2x8x8xf32>
    %cst_43 = arith.constant dense<0.000000e+00> : vector<2x8xf32>
    %104 = vector.multi_reduction <add>, %103, %cst_43 [2] : vector<2x8x8xf32> to vector<2x8xf32>
    %105 = vector.shape_cast %104 : vector<2x8xf32> to vector<2x8x1xf32>
    %106 = vector.broadcast %105 : vector<2x8x1xf32> to vector<2x8x8xf32>
    %107 = arith.divf %103, %106 : vector<2x8x8xf32>
    %108 = arith.truncf %107 : vector<2x8x8xf32> to vector<2x8x8xbf16>
    "tpu.trace_start"() <{level = 10 : i32, message = "bqk,bkd->bqd"}> : () -> ()
    %cst_44 = arith.constant dense<0.000000e+00> : vector<2x8x8xf32>
    %109 = tpu.matmul %108, %96, %cst_44 {dimension_numbers = #tpu.dot_dimension_numbers<[2], [1], [1], [2], [0, 0, 0, 1, 1, 2], [0], [0]>} : vector<2x8x8xbf16>, vector<2x8x8xbf16>, vector<2x8x8xf32> -> vector<2x8x8xf32>
    "tpu.trace_stop"() : () -> ()
    %110 = tpu.concatenate %61, %77, %93, %109 in 2 : vector<2x8x8xf32>, vector<2x8x8xf32>, vector<2x8x8xf32>, vector<2x8x8xf32> -> vector<2x8x32xf32>
    %111 = vector.shape_cast %110 : vector<2x8x32xf32> to vector<16x32xf32>
    %112 = arith.truncf %111 : vector<16x32xf32> to vector<16x32xbf16>
    %cst_45 = arith.constant dense<0.000000e+00> : vector<16x32xf32>
    %113 = tpu.matmul %112, %35, %cst_45 {dimension_numbers = #tpu.dot_dimension_numbers<[1], [0], [0], [1], [0, 0, 1, 1], [], []>} : vector<16x32xbf16>, vector<32x32xbf16>, vector<16x32xf32> -> vector<16x32xf32>
    %114 = vector.broadcast %26 : vector<1x32xf32> to vector<16x32xf32>
    %115 = arith.addf %113, %114 : vector<16x32xf32>
    %116 = arith.addf %115, %23 : vector<16x32xf32>
    %cst_46 = arith.constant dense<0.000000e+00> : vector<16xf32>
    %117 = vector.multi_reduction <add>, %116, %cst_46 [1] : vector<16x32xf32> to vector<16xf32>
    %118 = vector.shape_cast %117 : vector<16xf32> to vector<16x1xf32>
    %cst_47 = arith.constant 3.200000e+01 : f32
    %119 = vector.broadcast %cst_47 : f32 to vector<16x1xf32>
    %120 = arith.divf %118, %119 : vector<16x1xf32>
    %121 = vector.broadcast %120 : vector<16x1xf32> to vector<16x32xf32>
    %122 = arith.subf %116, %121 : vector<16x32xf32>
    %123 = arith.mulf %122, %122 : vector<16x32xf32>
    %cst_48 = arith.constant dense<0.000000e+00> : vector<16xf32>
    %124 = vector.multi_reduction <add>, %123, %cst_48 [1] : vector<16x32xf32> to vector<16xf32>
    %125 = vector.shape_cast %124 : vector<16xf32> to vector<16x1xf32>
    %cst_49 = arith.constant 3.200000e+01 : f32
    %126 = vector.broadcast %cst_49 : f32 to vector<16x1xf32>
    %127 = arith.divf %125, %126 : vector<16x1xf32>
    %cst_50 = arith.constant 9.99999996E-13 : f32
    %128 = vector.broadcast %cst_50 : f32 to vector<16x1xf32>
    %129 = arith.addf %127, %128 : vector<16x1xf32>
    %130 = math.rsqrt %129 : vector<16x1xf32>
    %131 = vector.broadcast %130 : vector<16x1xf32> to vector<16x32xf32>
    %132 = arith.mulf %122, %131 : vector<16x32xf32>
    %133 = vector.broadcast %27 : vector<1x32xf32> to vector<16x32xf32>
    %134 = arith.mulf %133, %132 : vector<16x32xf32>
    %135 = vector.broadcast %28 : vector<1x32xf32> to vector<16x32xf32>
    %136 = arith.addf %134, %135 : vector<16x32xf32>
    %137 = arith.truncf %136 : vector<16x32xf32> to vector<16x32xbf16>
    %cst_51 = arith.constant dense<0.000000e+00> : vector<16x64xf32>
    %138 = tpu.matmul %137, %37, %cst_51 {dimension_numbers = #tpu.dot_dimension_numbers<[1], [0], [0], [1], [0, 0, 1, 1], [], []>} : vector<16x32xbf16>, vector<32x64xbf16>, vector<16x64xf32> -> vector<16x64xf32>
    %139 = vector.broadcast %25 : vector<1x64xf32> to vector<16x64xf32>
    %140 = arith.addf %138, %139 : vector<16x64xf32>
    %cst_52 = arith.constant 5.000000e-01 : f32
    %141 = vector.broadcast %cst_52 : f32 to vector<16x64xf32>
    %142 = arith.mulf %140, %141 : vector<16x64xf32>
    %cst_53 = arith.constant 0.707106769 : f32
    %143 = vector.broadcast %cst_53 : f32 to vector<16x64xf32>
    %144 = arith.mulf %140, %143 : vector<16x64xf32>
    %145 = math.erf %144 : vector<16x64xf32>
    %cst_54 = arith.constant 1.000000e+00 : f32
    %146 = vector.broadcast %cst_54 : f32 to vector<16x64xf32>
    %147 = arith.addf %146, %145 : vector<16x64xf32>
    %148 = arith.mulf %142, %147 : vector<16x64xf32>
    %149 = arith.truncf %148 : vector<16x64xf32> to vector<16x64xbf16>
    %cst_55 = arith.constant dense<0.000000e+00> : vector<16x32xf32>
    %150 = tpu.matmul %149, %39, %cst_55 {dimension_numbers = #tpu.dot_dimension_numbers<[1], [0], [0], [1], [0, 0, 1, 1], [], []>} : vector<16x64xbf16>, vector<64x32xbf16>, vector<16x32xf32> -> vector<16x32xf32>
    %151 = vector.broadcast %29 : vector<1x32xf32> to vector<16x32xf32>
    %152 = arith.addf %150, %151 : vector<16x32xf32>
    %153 = arith.addf %152, %136 : vector<16x32xf32>
    %cst_56 = arith.constant dense<0.000000e+00> : vector<16xf32>
    %154 = vector.multi_reduction <add>, %153, %cst_56 [1] : vector<16x32xf32> to vector<16xf32>
    %155 = vector.shape_cast %154 : vector<16xf32> to vector<16x1xf32>
    %cst_57 = arith.constant 3.200000e+01 : f32
    %156 = vector.broadcast %cst_57 : f32 to vector<16x1xf32>
    %157 = arith.divf %155, %156 : vector<16x1xf32>
    %158 = vector.broadcast %157 : vector<16x1xf32> to vector<16x32xf32>
    %159 = arith.subf %153, %158 : vector<16x32xf32>
    %160 = arith.mulf %159, %159 : vector<16x32xf32>
    %cst_58 = arith.constant dense<0.000000e+00> : vector<16xf32>
    %161 = vector.multi_reduction <add>, %160, %cst_58 [1] : vector<16x32xf32> to vector<16xf32>
    %162 = vector.shape_cast %161 : vector<16xf32> to vector<16x1xf32>
    %cst_59 = arith.constant 3.200000e+01 : f32
    %163 = vector.broadcast %cst_59 : f32 to vector<16x1xf32>
    %164 = arith.divf %162, %163 : vector<16x1xf32>
    %cst_60 = arith.constant 9.99999996E-13 : f32
    %165 = vector.broadcast %cst_60 : f32 to vector<16x1xf32>
    %166 = arith.addf %164, %165 : vector<16x1xf32>
    %167 = math.rsqrt %166 : vector<16x1xf32>
    %168 = vector.broadcast %167 : vector<16x1xf32> to vector<16x32xf32>
    %169 = arith.mulf %159, %168 : vector<16x32xf32>
    %170 = vector.broadcast %30 : vector<1x32xf32> to vector<16x32xf32>
    %171 = arith.mulf %170, %169 : vector<16x32xf32>
    %172 = vector.broadcast %31 : vector<1x32xf32> to vector<16x32xf32>
    %173 = arith.addf %171, %172 : vector<16x32xf32>
    %c0_61 = arith.constant 0 : index
    %c0_62 = arith.constant 0 : index
    %c0_63 = arith.constant 0 : index
    %174 = vector.load %arg4[%c0_61, %c0_62, %c0_63] : memref<2x16x32xf32, #tpu.memory_space<vmem>>, vector<1x16x32xf32>
    %175 = vector.shape_cast %174 : vector<1x16x32xf32> to vector<16x32xf32>
    %176 = vector.shape_cast %173 : vector<16x32xf32> to vector<1x16x32xf32>
    tpu.vector_store %arg4[%c0_61, %c0_62, %c0_63], %176 {strides = array<i32>} : memref<2x16x32xf32, #tpu.memory_space<vmem>>, vector<1x16x32xf32>,
    %c10 = arith.constant 10 : index
    %c0_64 = arith.constant 0 : index
    %177 = vector.load %arg3[%c10, %c0_64] : memref<18x96xf32, #tpu.memory_space<vmem>>, vector<1x96xf32>
    %c11 = arith.constant 11 : index
    %c0_65 = arith.constant 0 : index
    %178 = vector.load %arg3[%c11, %c0_65] : memref<18x96xf32, #tpu.memory_space<vmem>>, vector<1x64xf32>
    %c12 = arith.constant 12 : index
    %c0_66 = arith.constant 0 : index
    %179 = vector.load %arg3[%c12, %c0_66] : memref<18x96xf32, #tpu.memory_space<vmem>>, vector<1x32xf32>
    %c13 = arith.constant 13 : index
    %c0_67 = arith.constant 0 : index
    %180 = vector.load %arg3[%c13, %c0_67] : memref<18x96xf32, #tpu.memory_space<vmem>>, vector<1x32xf32>
    %c14 = arith.constant 14 : index
    %c0_68 = arith.constant 0 : index
    %181 = vector.load %arg3[%c14, %c0_68] : memref<18x96xf32, #tpu.memory_space<vmem>>, vector<1x32xf32>
    %c15 = arith.constant 15 : index
    %c0_69 = arith.constant 0 : index
    %182 = vector.load %arg3[%c15, %c0_69] : memref<18x96xf32, #tpu.memory_space<vmem>>, vector<1x32xf32>
    %c16 = arith.constant 16 : index
    %c0_70 = arith.constant 0 : index
    %183 = vector.load %arg3[%c16, %c0_70] : memref<18x96xf32, #tpu.memory_space<vmem>>, vector<1x32xf32>
    %c17 = arith.constant 17 : index
    %c0_71 = arith.constant 0 : index
    %184 = vector.load %arg3[%c17, %c0_71] : memref<18x96xf32, #tpu.memory_space<vmem>>, vector<1x32xf32>
    %c1_72 = arith.constant 1 : index
    %c0_73 = arith.constant 0 : index
    %c0_74 = arith.constant 0 : index
    %185 = vector.load %arg2[%c1_72, %c0_73, %c0_74] : memref<2x160x96xbf16, #tpu.memory_space<vmem>>, vector<1x32x96xbf16>
    %186 = vector.shape_cast %185 : vector<1x32x96xbf16> to vector<32x96xbf16>
    %c1_75 = arith.constant 1 : index
    %c32_76 = arith.constant 32 : index
    %c0_77 = arith.constant 0 : index
    %187 = vector.load %arg2[%c1_75, %c32_76, %c0_77] : memref<2x160x96xbf16, #tpu.memory_space<vmem>>, vector<1x32x32xbf16>
    %188 = vector.shape_cast %187 : vector<1x32x32xbf16> to vector<32x32xbf16>
    %c1_78 = arith.constant 1 : index
    %c64_79 = arith.constant 64 : index
    %c0_80 = arith.constant 0 : index
    %189 = vector.load %arg2[%c1_78, %c64_79, %c0_80] : memref<2x160x96xbf16, #tpu.memory_space<vmem>>, vector<1x32x64xbf16>
    %190 = vector.shape_cast %189 : vector<1x32x64xbf16> to vector<32x64xbf16>
    %c1_81 = arith.constant 1 : index
    %c96_82 = arith.constant 96 : index
    %c0_83 = arith.constant 0 : index
    %191 = vector.load %arg2[%c1_81, %c96_82, %c0_83] : memref<2x160x96xbf16, #tpu.memory_space<vmem>>, vector<1x64x32xbf16>
    %192 = vector.shape_cast %191 : vector<1x64x32xbf16> to vector<64x32xbf16>
    %193 = arith.truncf %173 : vector<16x32xf32> to vector<16x32xbf16>
    %cst_84 = arith.constant dense<0.000000e+00> : vector<16x96xf32>
    %194 = tpu.matmul %193, %186, %cst_84 {dimension_numbers = #tpu.dot_dimension_numbers<[1], [0], [0], [1], [0, 0, 1, 1], [], []>} : vector<16x32xbf16>, vector<32x96xbf16>, vector<16x96xf32> -> vector<16x96xf32>
    %195 = vector.broadcast %177 : vector<1x96xf32> to vector<16x96xf32>
    %196 = arith.addf %194, %195 : vector<16x96xf32>
    %197 = arith.truncf %196 : vector<16x96xf32> to vector<16x96xbf16>
    %198 = vector.shape_cast %197 : vector<16x96xbf16> to vector<2x8x96xbf16>
    %199 = vector.extract_strided_slice %198 {offsets = [0, 0, 0], sizes = [2, 8, 8], strides = [1, 1, 1]} : vector<2x8x96xbf16> to vector<2x8x8xbf16>
    %200 = vector.extract_strided_slice %198 {offsets = [0, 0, 32], sizes = [2, 8, 8], strides = [1, 1, 1]} : vector<2x8x96xbf16> to vector<2x8x8xbf16>
    %201 = vector.extract_strided_slice %198 {offsets = [0, 0, 64], sizes = [2, 8, 8], strides = [1, 1, 1]} : vector<2x8x96xbf16> to vector<2x8x8xbf16>
    "tpu.trace_start"() <{level = 10 : i32, message = "bqd,bkd->bqk"}> : () -> ()
    %cst_85 = arith.constant dense<0.000000e+00> : vector<2x8x8xf32>
    %202 = tpu.matmul %199, %200, %cst_85 {dimension_numbers = #tpu.dot_dimension_numbers<[2], [2], [1], [1], [0, 0, 0, 1, 1, 1], [0], [0]>} : vector<2x8x8xbf16>, vector<2x8x8xbf16>, vector<2x8x8xf32> -> vector<2x8x8xf32>
    "tpu.trace_stop"() : () -> ()
    %203 = arith.addf %202, %0 : vector<2x8x8xf32>
    %cst_86 = arith.constant dense<0xFF800000> : vector<2x8xf32>
    %204 = vector.multi_reduction <maximumf>, %203, %cst_86 [2] : vector<2x8x8xf32> to vector<2x8xf32>
    %205 = vector.shape_cast %204 : vector<2x8xf32> to vector<2x8x1xf32>
    %206 = vector.broadcast %205 : vector<2x8x1xf32> to vector<2x8x8xf32>
    %207 = arith.subf %203, %206 : vector<2x8x8xf32>
    %208 = math.exp %207 : vector<2x8x8xf32>
    %cst_87 = arith.constant dense<0.000000e+00> : vector<2x8xf32>
    %209 = vector.multi_reduction <add>, %208, %cst_87 [2] : vector<2x8x8xf32> to vector<2x8xf32>
    %210 = vector.shape_cast %209 : vector<2x8xf32> to vector<2x8x1xf32>
    %211 = vector.broadcast %210 : vector<2x8x1xf32> to vector<2x8x8xf32>
    %212 = arith.divf %208, %211 : vector<2x8x8xf32>
    %213 = arith.truncf %212 : vector<2x8x8xf32> to vector<2x8x8xbf16>
    "tpu.trace_start"() <{level = 10 : i32, message = "bqk,bkd->bqd"}> : () -> ()
    %cst_88 = arith.constant dense<0.000000e+00> : vector<2x8x8xf32>
    %214 = tpu.matmul %213, %201, %cst_88 {dimension_numbers = #tpu.dot_dimension_numbers<[2], [1], [1], [2], [0, 0, 0, 1, 1, 2], [0], [0]>} : vector<2x8x8xbf16>, vector<2x8x8xbf16>, vector<2x8x8xf32> -> vector<2x8x8xf32>
    "tpu.trace_stop"() : () -> ()
    %215 = vector.extract_strided_slice %198 {offsets = [0, 0, 8], sizes = [2, 8, 8], strides = [1, 1, 1]} : vector<2x8x96xbf16> to vector<2x8x8xbf16>
    %216 = vector.extract_strided_slice %198 {offsets = [0, 0, 40], sizes = [2, 8, 8], strides = [1, 1, 1]} : vector<2x8x96xbf16> to vector<2x8x8xbf16>
    %217 = vector.extract_strided_slice %198 {offsets = [0, 0, 72], sizes = [2, 8, 8], strides = [1, 1, 1]} : vector<2x8x96xbf16> to vector<2x8x8xbf16>
    "tpu.trace_start"() <{level = 10 : i32, message = "bqd,bkd->bqk"}> : () -> ()
    %cst_89 = arith.constant dense<0.000000e+00> : vector<2x8x8xf32>
    %218 = tpu.matmul %215, %216, %cst_89 {dimension_numbers = #tpu.dot_dimension_numbers<[2], [2], [1], [1], [0, 0, 0, 1, 1, 1], [0], [0]>} : vector<2x8x8xbf16>, vector<2x8x8xbf16>, vector<2x8x8xf32> -> vector<2x8x8xf32>
    "tpu.trace_stop"() : () -> ()
    %219 = arith.addf %218, %0 : vector<2x8x8xf32>
    %cst_90 = arith.constant dense<0xFF800000> : vector<2x8xf32>
    %220 = vector.multi_reduction <maximumf>, %219, %cst_90 [2] : vector<2x8x8xf32> to vector<2x8xf32>
    %221 = vector.shape_cast %220 : vector<2x8xf32> to vector<2x8x1xf32>
    %222 = vector.broadcast %221 : vector<2x8x1xf32> to vector<2x8x8xf32>
    %223 = arith.subf %219, %222 : vector<2x8x8xf32>
    %224 = math.exp %223 : vector<2x8x8xf32>
    %cst_91 = arith.constant dense<0.000000e+00> : vector<2x8xf32>
    %225 = vector.multi_reduction <add>, %224, %cst_91 [2] : vector<2x8x8xf32> to vector<2x8xf32>
    %226 = vector.shape_cast %225 : vector<2x8xf32> to vector<2x8x1xf32>
    %227 = vector.broadcast %226 : vector<2x8x1xf32> to vector<2x8x8xf32>
    %228 = arith.divf %224, %227 : vector<2x8x8xf32>
    %229 = arith.truncf %228 : vector<2x8x8xf32> to vector<2x8x8xbf16>
    "tpu.trace_start"() <{level = 10 : i32, message = "bqk,bkd->bqd"}> : () -> ()
    %cst_92 = arith.constant dense<0.000000e+00> : vector<2x8x8xf32>
    %230 = tpu.matmul %229, %217, %cst_92 {dimension_numbers = #tpu.dot_dimension_numbers<[2], [1], [1], [2], [0, 0, 0, 1, 1, 2], [0], [0]>} : vector<2x8x8xbf16>, vector<2x8x8xbf16>, vector<2x8x8xf32> -> vector<2x8x8xf32>
    "tpu.trace_stop"() : () -> ()
    %231 = vector.extract_strided_slice %198 {offsets = [0, 0, 16], sizes = [2, 8, 8], strides = [1, 1, 1]} : vector<2x8x96xbf16> to vector<2x8x8xbf16>
    %232 = vector.extract_strided_slice %198 {offsets = [0, 0, 48], sizes = [2, 8, 8], strides = [1, 1, 1]} : vector<2x8x96xbf16> to vector<2x8x8xbf16>
    %233 = vector.extract_strided_slice %198 {offsets = [0, 0, 80], sizes = [2, 8, 8], strides = [1, 1, 1]} : vector<2x8x96xbf16> to vector<2x8x8xbf16>
    "tpu.trace_start"() <{level = 10 : i32, message = "bqd,bkd->bqk"}> : () -> ()
    %cst_93 = arith.constant dense<0.000000e+00> : vector<2x8x8xf32>
    %234 = tpu.matmul %231, %232, %cst_93 {dimension_numbers = #tpu.dot_dimension_numbers<[2], [2], [1], [1], [0, 0, 0, 1, 1, 1], [0], [0]>} : vector<2x8x8xbf16>, vector<2x8x8xbf16>, vector<2x8x8xf32> -> vector<2x8x8xf32>
    "tpu.trace_stop"() : () -> ()
    %235 = arith.addf %234, %0 : vector<2x8x8xf32>
    %cst_94 = arith.constant dense<0xFF800000> : vector<2x8xf32>
    %236 = vector.multi_reduction <maximumf>, %235, %cst_94 [2] : vector<2x8x8xf32> to vector<2x8xf32>
    %237 = vector.shape_cast %236 : vector<2x8xf32> to vector<2x8x1xf32>
    %238 = vector.broadcast %237 : vector<2x8x1xf32> to vector<2x8x8xf32>
    %239 = arith.subf %235, %238 : vector<2x8x8xf32>
    %240 = math.exp %239 : vector<2x8x8xf32>
    %cst_95 = arith.constant dense<0.000000e+00> : vector<2x8xf32>
    %241 = vector.multi_reduction <add>, %240, %cst_95 [2] : vector<2x8x8xf32> to vector<2x8xf32>
    %242 = vector.shape_cast %241 : vector<2x8xf32> to vector<2x8x1xf32>
    %243 = vector.broadcast %242 : vector<2x8x1xf32> to vector<2x8x8xf32>
    %244 = arith.divf %240, %243 : vector<2x8x8xf32>
    %245 = arith.truncf %244 : vector<2x8x8xf32> to vector<2x8x8xbf16>
    "tpu.trace_start"() <{level = 10 : i32, message = "bqk,bkd->bqd"}> : () -> ()
    %cst_96 = arith.constant dense<0.000000e+00> : vector<2x8x8xf32>
    %246 = tpu.matmul %245, %233, %cst_96 {dimension_numbers = #tpu.dot_dimension_numbers<[2], [1], [1], [2], [0, 0, 0, 1, 1, 2], [0], [0]>} : vector<2x8x8xbf16>, vector<2x8x8xbf16>, vector<2x8x8xf32> -> vector<2x8x8xf32>
    "tpu.trace_stop"() : () -> ()
    %247 = vector.extract_strided_slice %198 {offsets = [0, 0, 24], sizes = [2, 8, 8], strides = [1, 1, 1]} : vector<2x8x96xbf16> to vector<2x8x8xbf16>
    %248 = vector.extract_strided_slice %198 {offsets = [0, 0, 56], sizes = [2, 8, 8], strides = [1, 1, 1]} : vector<2x8x96xbf16> to vector<2x8x8xbf16>
    %249 = vector.extract_strided_slice %198 {offsets = [0, 0, 88], sizes = [2, 8, 8], strides = [1, 1, 1]} : vector<2x8x96xbf16> to vector<2x8x8xbf16>
    "tpu.trace_start"() <{level = 10 : i32, message = "bqd,bkd->bqk"}> : () -> ()
    %cst_97 = arith.constant dense<0.000000e+00> : vector<2x8x8xf32>
    %250 = tpu.matmul %247, %248, %cst_97 {dimension_numbers = #tpu.dot_dimension_numbers<[2], [2], [1], [1], [0, 0, 0, 1, 1, 1], [0], [0]>} : vector<2x8x8xbf16>, vector<2x8x8xbf16>, vector<2x8x8xf32> -> vector<2x8x8xf32>
    "tpu.trace_stop"() : () -> ()
    %251 = arith.addf %250, %0 : vector<2x8x8xf32>
    %cst_98 = arith.constant dense<0xFF800000> : vector<2x8xf32>
    %252 = vector.multi_reduction <maximumf>, %251, %cst_98 [2] : vector<2x8x8xf32> to vector<2x8xf32>
    %253 = vector.shape_cast %252 : vector<2x8xf32> to vector<2x8x1xf32>
    %254 = vector.broadcast %253 : vector<2x8x1xf32> to vector<2x8x8xf32>
    %255 = arith.subf %251, %254 : vector<2x8x8xf32>
    %256 = math.exp %255 : vector<2x8x8xf32>
    %cst_99 = arith.constant dense<0.000000e+00> : vector<2x8xf32>
    %257 = vector.multi_reduction <add>, %256, %cst_99 [2] : vector<2x8x8xf32> to vector<2x8xf32>
    %258 = vector.shape_cast %257 : vector<2x8xf32> to vector<2x8x1xf32>
    %259 = vector.broadcast %258 : vector<2x8x1xf32> to vector<2x8x8xf32>
    %260 = arith.divf %256, %259 : vector<2x8x8xf32>
    %261 = arith.truncf %260 : vector<2x8x8xf32> to vector<2x8x8xbf16>
    "tpu.trace_start"() <{level = 10 : i32, message = "bqk,bkd->bqd"}> : () -> ()
    %cst_100 = arith.constant dense<0.000000e+00> : vector<2x8x8xf32>
    %262 = tpu.matmul %261, %249, %cst_100 {dimension_numbers = #tpu.dot_dimension_numbers<[2], [1], [1], [2], [0, 0, 0, 1, 1, 2], [0], [0]>} : vector<2x8x8xbf16>, vector<2x8x8xbf16>, vector<2x8x8xf32> -> vector<2x8x8xf32>
    "tpu.trace_stop"() : () -> ()
    %263 = tpu.concatenate %214, %230, %246, %262 in 2 : vector<2x8x8xf32>, vector<2x8x8xf32>, vector<2x8x8xf32>, vector<2x8x8xf32> -> vector<2x8x32xf32>
    %264 = vector.shape_cast %263 : vector<2x8x32xf32> to vector<16x32xf32>
    %265 = arith.truncf %264 : vector<16x32xf32> to vector<16x32xbf16>
    %cst_101 = arith.constant dense<0.000000e+00> : vector<16x32xf32>
    %266 = tpu.matmul %265, %188, %cst_101 {dimension_numbers = #tpu.dot_dimension_numbers<[1], [0], [0], [1], [0, 0, 1, 1], [], []>} : vector<16x32xbf16>, vector<32x32xbf16>, vector<16x32xf32> -> vector<16x32xf32>
    %267 = vector.broadcast %179 : vector<1x32xf32> to vector<16x32xf32>
    %268 = arith.addf %266, %267 : vector<16x32xf32>
    %269 = arith.addf %268, %173 : vector<16x32xf32>
    %cst_102 = arith.constant dense<0.000000e+00> : vector<16xf32>
    %270 = vector.multi_reduction <add>, %269, %cst_102 [1] : vector<16x32xf32> to vector<16xf32>
    %271 = vector.shape_cast %270 : vector<16xf32> to vector<16x1xf32>
    %cst_103 = arith.constant 3.200000e+01 : f32
    %272 = vector.broadcast %cst_103 : f32 to vector<16x1xf32>
    %273 = arith.divf %271, %272 : vector<16x1xf32>
    %274 = vector.broadcast %273 : vector<16x1xf32> to vector<16x32xf32>
    %275 = arith.subf %269, %274 : vector<16x32xf32>
    %276 = arith.mulf %275, %275 : vector<16x32xf32>
    %cst_104 = arith.constant dense<0.000000e+00> : vector<16xf32>
    %277 = vector.multi_reduction <add>, %276, %cst_104 [1] : vector<16x32xf32> to vector<16xf32>
    %278 = vector.shape_cast %277 : vector<16xf32> to vector<16x1xf32>
    %cst_105 = arith.constant 3.200000e+01 : f32
    %279 = vector.broadcast %cst_105 : f32 to vector<16x1xf32>
    %280 = arith.divf %278, %279 : vector<16x1xf32>
    %cst_106 = arith.constant 9.99999996E-13 : f32
    %281 = vector.broadcast %cst_106 : f32 to vector<16x1xf32>
    %282 = arith.addf %280, %281 : vector<16x1xf32>
    %283 = math.rsqrt %282 : vector<16x1xf32>
    %284 = vector.broadcast %283 : vector<16x1xf32> to vector<16x32xf32>
    %285 = arith.mulf %275, %284 : vector<16x32xf32>
    %286 = vector.broadcast %180 : vector<1x32xf32> to vector<16x32xf32>
    %287 = arith.mulf %286, %285 : vector<16x32xf32>
    %288 = vector.broadcast %181 : vector<1x32xf32> to vector<16x32xf32>
    %289 = arith.addf %287, %288 : vector<16x32xf32>
    %290 = arith.truncf %289 : vector<16x32xf32> to vector<16x32xbf16>
    %cst_107 = arith.constant dense<0.000000e+00> : vector<16x64xf32>
    %291 = tpu.matmul %290, %190, %cst_107 {dimension_numbers = #tpu.dot_dimension_numbers<[1], [0], [0], [1], [0, 0, 1, 1], [], []>} : vector<16x32xbf16>, vector<32x64xbf16>, vector<16x64xf32> -> vector<16x64xf32>
    %292 = vector.broadcast %178 : vector<1x64xf32> to vector<16x64xf32>
    %293 = arith.addf %291, %292 : vector<16x64xf32>
    %cst_108 = arith.constant 5.000000e-01 : f32
    %294 = vector.broadcast %cst_108 : f32 to vector<16x64xf32>
    %295 = arith.mulf %293, %294 : vector<16x64xf32>
    %cst_109 = arith.constant 0.707106769 : f32
    %296 = vector.broadcast %cst_109 : f32 to vector<16x64xf32>
    %297 = arith.mulf %293, %296 : vector<16x64xf32>
    %298 = math.erf %297 : vector<16x64xf32>
    %cst_110 = arith.constant 1.000000e+00 : f32
    %299 = vector.broadcast %cst_110 : f32 to vector<16x64xf32>
    %300 = arith.addf %299, %298 : vector<16x64xf32>
    %301 = arith.mulf %295, %300 : vector<16x64xf32>
    %302 = arith.truncf %301 : vector<16x64xf32> to vector<16x64xbf16>
    %cst_111 = arith.constant dense<0.000000e+00> : vector<16x32xf32>
    %303 = tpu.matmul %302, %192, %cst_111 {dimension_numbers = #tpu.dot_dimension_numbers<[1], [0], [0], [1], [0, 0, 1, 1], [], []>} : vector<16x64xbf16>, vector<64x32xbf16>, vector<16x32xf32> -> vector<16x32xf32>
    %304 = vector.broadcast %182 : vector<1x32xf32> to vector<16x32xf32>
    %305 = arith.addf %303, %304 : vector<16x32xf32>
    %306 = arith.addf %305, %289 : vector<16x32xf32>
    %cst_112 = arith.constant dense<0.000000e+00> : vector<16xf32>
    %307 = vector.multi_reduction <add>, %306, %cst_112 [1] : vector<16x32xf32> to vector<16xf32>
    %308 = vector.shape_cast %307 : vector<16xf32> to vector<16x1xf32>
    %cst_113 = arith.constant 3.200000e+01 : f32
    %309 = vector.broadcast %cst_113 : f32 to vector<16x1xf32>
    %310 = arith.divf %308, %309 : vector<16x1xf32>
    %311 = vector.broadcast %310 : vector<16x1xf32> to vector<16x32xf32>
    %312 = arith.subf %306, %311 : vector<16x32xf32>
    %313 = arith.mulf %312, %312 : vector<16x32xf32>
    %cst_114 = arith.constant dense<0.000000e+00> : vector<16xf32>
    %314 = vector.multi_reduction <add>, %313, %cst_114 [1] : vector<16x32xf32> to vector<16xf32>
    %315 = vector.shape_cast %314 : vector<16xf32> to vector<16x1xf32>
    %cst_115 = arith.constant 3.200000e+01 : f32
    %316 = vector.broadcast %cst_115 : f32 to vector<16x1xf32>
    %317 = arith.divf %315, %316 : vector<16x1xf32>
    %cst_116 = arith.constant 9.99999996E-13 : f32
    %318 = vector.broadcast %cst_116 : f32 to vector<16x1xf32>
    %319 = arith.addf %317, %318 : vector<16x1xf32>
    %320 = math.rsqrt %319 : vector<16x1xf32>
    %321 = vector.broadcast %320 : vector<16x1xf32> to vector<16x32xf32>
    %322 = arith.mulf %312, %321 : vector<16x32xf32>
    %323 = vector.broadcast %183 : vector<1x32xf32> to vector<16x32xf32>
    %324 = arith.mulf %323, %322 : vector<16x32xf32>
    %325 = vector.broadcast %184 : vector<1x32xf32> to vector<16x32xf32>
    %326 = arith.addf %324, %325 : vector<16x32xf32>
    %c1_117 = arith.constant 1 : index
    %c0_118 = arith.constant 0 : index
    %c0_119 = arith.constant 0 : index
    %327 = vector.load %arg4[%c1_117, %c0_118, %c0_119] : memref<2x16x32xf32, #tpu.memory_space<vmem>>, vector<1x16x32xf32>
    %328 = vector.shape_cast %327 : vector<1x16x32xf32> to vector<16x32xf32>
    %329 = vector.shape_cast %326 : vector<16x32xf32> to vector<1x16x32xf32>
    tpu.vector_store %arg4[%c1_117, %c0_118, %c0_119], %329 {strides = array<i32>} : memref<2x16x32xf32, #tpu.memory_space<vmem>>, vector<1x16x32xf32>,
    return
  }
}

</mosaic_0001>

<llo_original>
// kernel: _forward_impl.1
$region0: #{_forward_impl.1}
  #allocation0 [shape = 'u32[]', space=smem, size = 0x4, offset = 0x4, fixed_abs, tag = 'smem constant byte address 0x4 - core index']
  #allocation1 [shape = 'u32[144,128]{1,0:T(1,128)}', space=vmem, size = 0x12000, scoped, tag = 'internal scratch']
  %s0 = inlined_call_operand.hbm [shape: f32[16,32], index: 0, kind: input, shape index: {}]
  %s1 = inlined_call_operand.hbm [shape: f32[2,8,8], index: 1, kind: input, shape index: {}]
  %s2 = inlined_call_operand.hbm [shape: bf16[2,160,96], index: 2, kind: input, shape index: {}]
  %s3 = inlined_call_operand.hbm [shape: f32[18,96], index: 3, kind: input, shape index: {}]
  %s4 = inlined_call_operand.hbm [shape: f32[2,16,32], index: 4, kind: output, shape index: {}]
  %s5 = sld [smem:[#allocation0]]
  $region42: #{_forward_impl.1} parent=0
    _
  %s7 = ssub.s32 1, %s5
  %s8 = scalar_select 0, %s7, %s5
  $region1: #{_forward_impl.1} parent=0
    #allocation2 [shape = 'u8[8192]{0}', space=vmem, size = 0x2000, scoped, tag = 'input window, operand 0, single buffered']
    #allocation3 [shape = 's32[1]{0}', space=sflag, size = 0x4, scoped, tag = 'scoped memory for _forward_impl.1']
    #allocation4 [shape = 's32[1]{0}', space=sflag, size = 0x4, scoped, tag = 'scoped memory for _forward_impl.1']
    #allocation5 [shape = 'u8[8192]{0}', space=vmem, size = 0x2000, scoped, tag = 'input window, operand 1, single buffered']
    #allocation6 [shape = 's32[1]{0}', space=sflag, size = 0x4, scoped, tag = 'scoped memory for _forward_impl.1']
    #allocation7 [shape = 'u8[81920]{0}', space=vmem, size = 0x14000, scoped, tag = 'input window, operand 2, single buffered']
    #allocation8 [shape = 'u8[12288]{0}', space=vmem, size = 0x3000, scoped, tag = 'input window, operand 3, single buffered']
    #allocation9 [shape = 's32[1]{0}', space=sflag, size = 0x4, scoped, tag = 'scoped memory for _forward_impl.1']
    #allocation10 [shape = 'u8[16384]{0}', space=vmem, size = 0x4000, scoped, tag = 'output window, operand 0, single buffered']
    %9 = vsyncpa [#allocation3], 0
    %10 = vsyncpa [#allocation6], 0
    %11 = vsyncpa [#allocation9], 0
    %12 = vsyncpa [#allocation4], 0
    // Predicated region
    $region2: #{_forward_impl.1} parent=1 // pred_check
      _
    $region3: #{_forward_impl.1} parent=1 // pred_check_branch
      %14 = sbr.rel (0) target = $region5
    $region4: #{_forward_impl.1} parent=1 // pred_region
      %s16 = ssub.s32 256, 256
      %17 = vsyncadd [#allocation3], %s16
      %s18 = sshll.u32 [#allocation2], 4
      %s19 = int_to_ptr.vmem [resolvable:$true] %s18
      %24 = dma.hbm_to_vmem [thread:$0]  %s0, 256, %s19, [#allocation3], 128, 128, 8
    $region5: #{_forward_impl.1} parent=1 // pred_fallthru
      _
    // Predicated region
    $region6: #{_forward_impl.1} parent=1 // pred_check
      _
    $region7: #{_forward_impl.1} parent=1 // pred_check_branch
      %26 = sbr.rel (0) target = $region9
    $region8: #{_forward_impl.1} parent=1 // pred_region
      %s28 = ssub.s32 256, 256
      %29 = vsyncadd [#allocation6], %s28
      %s30 = sshll.u32 [#allocation5], 4
      %s31 = int_to_ptr.vmem [resolvable:$true] %s30
      %36 = dma.hbm_to_vmem [thread:$0]  %s1, 256, %s31, [#allocation6], 128, 128, 8
    $region9: #{_forward_impl.1} parent=1 // pred_fallthru
      _
    // Predicated region
    $region10: #{_forward_impl.1} parent=1 // pred_check
      _
    $region11: #{_forward_impl.1} parent=1 // pred_check_branch
      %38 = sbr.rel (0) target = $region13
    $region12: #{_forward_impl.1} parent=1 // pred_region
      %s40 = ssub.s32 2560, 2560
      %41 = vsyncadd [#allocation6], %s40
      %s42 = sshll.u32 [#allocation7], 4
      %s43 = int_to_ptr.vmem [resolvable:$true] %s42
      %48 = dma.hbm_to_vmem [thread:$0]  %s2, 2560, %s43, [#allocation6], 64, 64, 4
    $region13: #{_forward_impl.1} parent=1 // pred_fallthru
      _
    // Predicated region
    $region14: #{_forward_impl.1} parent=1 // pred_check
      _
    $region15: #{_forward_impl.1} parent=1 // pred_check_branch
      %50 = sbr.rel (0) target = $region17
    $region16: #{_forward_impl.1} parent=1 // pred_region
      %s52 = ssub.s32 384, 384
      %53 = vsyncadd [#allocation9], %s52
      %s54 = sshll.u32 [#allocation8], 4
      %s55 = int_to_ptr.vmem [resolvable:$true] %s54
      %60 = dma.hbm_to_vmem [thread:$0]  %s3, 384, %s55, [#allocation9], 128, 128, 8
    $region17: #{_forward_impl.1} parent=1 // pred_fallthru
      _
    // Predicated region
    $region18: #{_forward_impl.1} parent=1 // pred_check
      _
    $region19: #{_forward_impl.1} parent=1 // pred_check_branch
      %62 = sbr.rel (0) target = $region21
    $region20: #{_forward_impl.1} parent=1 // pred_region
      %63 = dma.done [#allocation3], 256
    $region21: #{_forward_impl.1} parent=1 // pred_fallthru
      _
    // Predicated region
    $region22: #{_forward_impl.1} parent=1 // pred_check
      _
    $region23: #{_forward_impl.1} parent=1 // pred_check_branch
      %65 = sbr.rel (0) target = $region25
    $region24: #{_forward_impl.1} parent=1 // pred_region
      %66 = dma.done [#allocation6], 256
    $region25: #{_forward_impl.1} parent=1 // pred_fallthru
      _
    // Predicated region
    $region26: #{_forward_impl.1} parent=1 // pred_check
      _
    $region27: #{_forward_impl.1} parent=1 // pred_check_branch
      %68 = sbr.rel (0) target = $region29
    $region28: #{_forward_impl.1} parent=1 // pred_region
      %69 = dma.done [#allocation6], 2560
    $region29: #{_forward_impl.1} parent=1 // pred_fallthru
      _
    // Predicated region
    $region30: #{_forward_impl.1} parent=1 // pred_check
      _
    $region31: #{_forward_impl.1} parent=1 // pred_check_branch
      %71 = sbr.rel (0) target = $region33
    $region32: #{_forward_impl.1} parent=1 // pred_region
      %72 = dma.done [#allocation9], 384
    $region33: #{_forward_impl.1} parent=1 // pred_fallthru
      _
    %v74 = vld [vmem:[#allocation5] sm:$0xff]
    %v75 = vld [vmem:[#allocation5 + $0x8] sm:$0xff]
    %v76 = vld [vmem:[#allocation2] sm:$0xff]
    %v77 = vld [vmem:[#allocation2 + $0x8] sm:$0xff]
    %v78 = vld [vmem:[#allocation8] sm:$0x1]
    %v79 = vld [vmem:[#allocation8 + $0x1] sm:$0x1]
    %vm80 = vcmask 261120
    %v81 = vsel %vm80, %v76, 0.0
    %82 = vadd.xlane.f32.xlu0 %v81
    %v83 = vpop.xlane.xlu0 %82
    %v84 = vsel %vm80, %v77, 0.0
    %85 = vadd.xlane.f32.xlu0 %v84
    %v86 = vpop.xlane.xlu0 %85
    %v87 = vrcp.pop 32.0
    %v88 = vmul.f32 %v83, %v87
    %v89 = vmul.f32 %v86, %v87
    %v90 = vsub.f32 %v76, %v88
    %v91 = vsub.f32 %v77, %v89
    %v92 = vmul.f32 %v90, %v90
    %v93 = vmul.f32 %v91, %v91
    %v94 = vsel %vm80, %v92, 0.0
    %95 = vadd.xlane.f32.xlu0 %v94
    %v96 = vpop.xlane.xlu0 %95
    %v97 = vsel %vm80, %v93, 0.0
    %98 = vadd.xlane.f32.xlu0 %v97
    %v99 = vpop.xlane.xlu0 %98
    %v100 = vmul.f32 %v96, %v87
    %v101 = vmul.f32 %v99, %v87
    %v102 = vadd.f32 %v100, 1e-12
    %v103 = vadd.f32 %v101, 1e-12
    %v104 = vrsqrt.pop %v102
    %v105 = vrsqrt.pop %v103
    %v106 = vmul.f32 %v90, %v104
    %v107 = vmul.f32 %v91, %v105
    %v108 = vlaneseq
    %v109 = vshrl.u32 %v108, 7
    %v110 = vsub.s32 0, %v109
    %v111 = vrot.slane %v78, %v110
    %v112 = vmul.f32 %v111, %v106
    %v113 = vmul.f32 %v111, %v107
    %v114 = vlaneseq
    %v115 = vshrl.u32 %v114, 7
    %v116 = vsub.s32 0, %v115
    %v117 = vrot.slane %v79, %v116
    %v118 = vadd.f32 %v112, %v117
    %v119 = vadd.f32 %v113, %v117
    %v120 = vld [vmem:[#allocation8 + $0x2] sm:$0x1]
    %v121 = vld [vmem:[#allocation8 + $0x3] sm:$0x1]
    %v122 = vld [vmem:[#allocation8 + $0x4] sm:$0x1]
    %v123 = vld [vmem:[#allocation8 + $0x5] sm:$0x1]
    %v124 = vld [vmem:[#allocation8 + $0x6] sm:$0x1]
    %v125 = vld [vmem:[#allocation8 + $0x7] sm:$0x1]
    %v126 = vld [vmem:[#allocation8 + $0x8] sm:$0x1]
    %v127 = vld [vmem:[#allocation8 + $0x9] sm:$0x1]
    %v128 = vld [vmem:[#allocation7] sm:$0xf]
    %v129 = vld [vmem:[#allocation7 + $0x4] sm:$0xf]
    %v130 = vld [vmem:[#allocation7 + $0x8] sm:$0xf]
    %v131 = vld [vmem:[#allocation7 + $0xc] sm:$0xf]
    %v132 = vld [vmem:[#allocation7 + $0x10] sm:$0xf]
    %v133 = vld [vmem:[#allocation7 + $0x14] sm:$0xf]
    %v134 = vld [vmem:[#allocation7 + $0x18] sm:$0xf]
    %v135 = vld [vmem:[#allocation7 + $0x1c] sm:$0xf]
    %v136 = vld [vmem:[#allocation7 + $0x20] sm:$0xf]
    %v137 = vld [vmem:[#allocation7 + $0x24] sm:$0xf]
    %v138 = vld [vmem:[#allocation7 + $0x28] sm:$0xf]
    %v139 = vld [vmem:[#allocation7 + $0x2c] sm:$0xf]
    %v140 = vld [vmem:[#allocation7 + $0x30] sm:$0xf]
    %v141 = vld [vmem:[#allocation7 + $0x34] sm:$0xf]
    %v142 = vld [vmem:[#allocation7 + $0x38] sm:$0xf]
    %v143 = vld [vmem:[#allocation7 + $0x3c] sm:$0xf]
    %v144 = vld [vmem:[#allocation7 + $0x40] sm:$0xf]
    %v145 = vld [vmem:[#allocation7 + $0x44] sm:$0xf]
    %v146 = vld [vmem:[#allocation7 + $0x48] sm:$0xf]
    %v147 = vld [vmem:[#allocation7 + $0x4c] sm:$0xf]
    %v148 = vpack.c.bf16 %v119, %v118
    %v149 = vlaneseq
    %v150 = vshrl.u32 %v149, 7
    %v151 = vsub.s32 0, %v150
    %v152 = vrot.slane %v120, %v151
    %v157 = vunpack.c.l.b16 %v128
    %v158 = vunpack.c.l.b16 %v129
    %v159 = vunpack.c.l.b16 %v130
    %v160 = vunpack.c.l.b16 %v131
    %v161 = vpack.c.b16 %v158, %v157
    %v162 = vpack.c.b16 %v160, %v159
    %v166 = vsel %vm80, %v148, 0
    %168 = vmatprep.subr.bf16.mxu0 0
    %169 = vmatpush1.bf16.msra.mxu0 0
    %170 = vmatprep.subr.bf16.mxu0 0
    %171 = vmatpush1.bf16.msra.mxu0 0
    %172 = vmatprep.subr.bf16.mxu0 0
    %173 = vmatpush1.bf16.msra.mxu0 0
    %174 = vmatprep.subr.bf16.mxu0 0
    %175 = vmatpush1.bf16.msra.mxu0 0
    %176 = vmatprep.subr.bf16.mxu0 0
    %177 = vmatpush1.bf16.msra.mxu0 0
    %178 = vmatprep.subr.bf16.mxu0 0
    %179 = vmatpush1.bf16.msra.mxu0 0
    %180 = vmatprep.subr.bf16.mxu0 0
    %181 = vmatpush1.bf16.msra.mxu0 %v162
    %182 = vmatprep.subr.bf16.mxu0 0
    %183 = vmatpush1.bf16.msra.mxu0 %v161
    %184 = vmatprep.subr.bf16.mxu0 0
    %185 = vmatpush2.bf16.msra.mxu0 0
    %186 = vmatprep.subr.bf16.mxu0 0
    %187 = vmatpush2.bf16.msra.mxu0 0
    %188 = vmatprep.subr.bf16.mxu0 0
    %189 = vmatpush2.bf16.msra.mxu0 0
    %190 = vmatprep.subr.bf16.mxu0 0
    %191 = vmatpush2.bf16.msra.mxu0 0
    %192 = vmatprep.subr.bf16.mxu0 0
    %193 = vmatpush2.bf16.msra.mxu0 0
    %194 = vmatprep.subr.bf16.mxu0 0
    %195 = vmatpush2.bf16.msra.mxu0 0
    %196 = vmatprep.subr.bf16.mxu0 0
    %197 = vmatpush2.bf16.msra.mxu0 0
    %198 = vmatprep.subr.bf16.mxu0 0
    %199 = vmatpush2.bf16.msra.mxu0 0
    %200 = vmatprep.mubr.bf16.mxu0 0
    %201 = vmatmul.mubr.bf16.gmra.mxu0 %v166
    %v202 = vpop.f32.mrf.mxu0
    %v203 = vadd.f32 %v152, %v202
    %v204 = vpop.f32.mrf.mxu0
    %v205 = vpop.f32.mrf.mxu0
    %v206 = vadd.f32 %v152, %v205
    %v207 = vpop.f32.mrf.mxu0
    %208 = vdwg.mxu0
    %v209 = vpack.c.bf16 %v206, %v203
    %v211 = vunpack.c.l.b16 %v209
    %v212 = vunpack.c.h.b16 %v209
    %v213 = vpack.c.b16 %v211, %v211
    %v214 = vpack.c.b16 %v212, %v212
    %215 = vrot.lane.b32.xlu0 %v213, 96
    %v216 = vpop.permute.xlu0 %215
    %vm217 = vcmask 64512
    %v219 = vsel %vm217, %v213, 0
    %v222 = vsel %vm217, %v216, 0
    %224 = vmatprep.subr.bf16.mxu0 0
    %225 = vmatpush1.bf16.xpose.msra.mxu0 0
    %226 = vmatprep.subr.bf16.mxu0 0
    %227 = vmatpush1.bf16.xpose.msra.mxu0 0
    %228 = vmatprep.subr.bf16.mxu0 0
    %229 = vmatpush1.bf16.xpose.msra.mxu0 0
    %230 = vmatprep.subr.bf16.mxu0 0
    %231 = vmatpush1.bf16.xpose.msra.mxu0 0
    %232 = vmatprep.subr.bf16.mxu0 0
    %233 = vmatpush1.bf16.xpose.msra.mxu0 0
    %234 = vmatprep.subr.bf16.mxu0 0
    %235 = vmatpush1.bf16.xpose.msra.mxu0 0
    %236 = vmatprep.subr.bf16.mxu0 0
    %237 = vmatpush1.bf16.xpose.msra.mxu0 0
    %238 = vmatprep.subr.bf16.mxu0 0
    %239 = vmatpush1.bf16.xpose.msra.mxu0 %v222
    %240 = vmatprep.subr.bf16.mxu0 0
    %241 = vmatpush2.bf16.xpose.msra.mxu0 0
    %242 = vmatprep.subr.bf16.mxu0 0
    %243 = vmatpush2.bf16.xpose.msra.mxu0 0
    %244 = vmatprep.subr.bf16.mxu0 0
    %245 = vmatpush2.bf16.xpose.msra.mxu0 0
    %246 = vmatprep.subr.bf16.mxu0 0
    %247 = vmatpush2.bf16.xpose.msra.mxu0 0
    %248 = vmatprep.subr.bf16.mxu0 0
    %249 = vmatpush2.bf16.xpose.msra.mxu0 0
    %250 = vmatprep.subr.bf16.mxu0 0
    %251 = vmatpush2.bf16.xpose.msra.mxu0 0
    %252 = vmatprep.subr.bf16.mxu0 0
    %253 = vmatpush2.bf16.xpose.msra.mxu0 0
    %254 = vmatprep.subr.bf16.mxu0 0
    %255 = vmatpush2.bf16.xpose.msra.mxu0 0
    %256 = vmatprep.mubr.bf16.mxu0 0
    %257 = vmatmul.mubr.bf16.gmra.mxu0 %v219
    %v258 = vpop.f32.mrf.mxu0
    %v259 = vadd.f32 %v74, %v258
    %v260 = vpop.f32.mrf.mxu0
    %v261 = vpop.f32.mrf.mxu0
    %v262 = vpop.f32.mrf.mxu0
    %263 = vdwg.mxu0
    %264 = vrot.lane.b32.xlu0 %v214, 96
    %v265 = vpop.permute.xlu0 %264
    %v267 = vsel %vm217, %v214, 0
    %v270 = vsel %vm217, %v265, 0
    %272 = vmatprep.subr.bf16.mxu0 0
    %273 = vmatpush1.bf16.xpose.msra.mxu0 0
    %274 = vmatprep.subr.bf16.mxu0 0
    %275 = vmatpush1.bf16.xpose.msra.mxu0 0
    %276 = vmatprep.subr.bf16.mxu0 0
    %277 = vmatpush1.bf16.xpose.msra.mxu0 0
    %278 = vmatprep.subr.bf16.mxu0 0
    %279 = vmatpush1.bf16.xpose.msra.mxu0 0
    %280 = vmatprep.subr.bf16.mxu0 0
    %281 = vmatpush1.bf16.xpose.msra.mxu0 0
    %282 = vmatprep.subr.bf16.mxu0 0
    %283 = vmatpush1.bf16.xpose.msra.mxu0 0
    %284 = vmatprep.subr.bf16.mxu0 0
    %285 = vmatpush1.bf16.xpose.msra.mxu0 0
    %286 = vmatprep.subr.bf16.mxu0 0
    %287 = vmatpush1.bf16.xpose.msra.mxu0 %v270
    %288 = vmatprep.subr.bf16.mxu0 0
    %289 = vmatpush2.bf16.xpose.msra.mxu0 0
    %290 = vmatprep.subr.bf16.mxu0 0
    %291 = vmatpush2.bf16.xpose.msra.mxu0 0
    %292 = vmatprep.subr.bf16.mxu0 0
    %293 = vmatpush2.bf16.xpose.msra.mxu0 0
    %294 = vmatprep.subr.bf16.mxu0 0
    %295 = vmatpush2.bf16.xpose.msra.mxu0 0
    %296 = vmatprep.subr.bf16.mxu0 0
    %297 = vmatpush2.bf16.xpose.msra.mxu0 0
    %298 = vmatprep.subr.bf16.mxu0 0
    %299 = vmatpush2.bf16.xpose.msra.mxu0 0
    %300 = vmatprep.subr.bf16.mxu0 0
    %301 = vmatpush2.bf16.xpose.msra.mxu0 0
    %302 = vmatprep.subr.bf16.mxu0 0
    %303 = vmatpush2.bf16.xpose.msra.mxu0 0
    %304 = vmatprep.mubr.bf16.mxu0 0
    %305 = vmatmul.mubr.bf16.gmra.mxu0 %v267
    %v306 = vpop.f32.mrf.mxu0
    %v307 = vadd.f32 %v75, %v306
    %v308 = vpop.f32.mrf.mxu0
    %v309 = vpop.f32.mrf.mxu0
    %v310 = vpop.f32.mrf.mxu0
    %311 = vdwg.mxu0
    %v312 = vsel %vm217, %v259, -inf
    %313 = vmax.xlane.f32.xlu0 %v312
    %v314 = vpop.xlane.xlu0 %313
    %v315 = vsel %vm217, %v307, -inf
    %316 = vmax.xlane.f32.xlu0 %v315
    %v317 = vpop.xlane.xlu0 %316
    %v318 = vsub.f32 %v259, %v314
    %v319 = vsub.f32 %v307, %v317
    %v320 = vmul.f32 %v318, 1.442695
    %v321 = vpow.pop %v320
    %v322 = vmul.f32 %v319, 1.442695
    %v323 = vpow.pop %v322
    %v324 = vsel %vm217, %v321, 0.0
    %325 = vadd.xlane.f32.xlu0 %v324
    %v326 = vpop.xlane.xlu0 %325
    %v327 = vsel %vm217, %v323, 0.0
    %328 = vadd.xlane.f32.xlu0 %v327
    %v329 = vpop.xlane.xlu0 %328
    %v330 = vrcp.pop %v326
    %v331 = vmul.f32 %v321, %v330
    %v332 = vrcp.pop %v329
    %v333 = vmul.f32 %v323, %v332
    %v334 = vpack.c.bf16 %v331, %v331
    %v335 = vpack.c.bf16 %v333, %v333
    %336 = vrot.lane.b32.xlu0 %v213, 64
    %v337 = vpop.permute.xlu0 %336
    %v339 = vsel %vm217, %v334, 0
    %vm341 = vcmask 1043456
    %v343 = vsel %vm341, %v337, 0
    %345 = vmatprep.subr.bf16.mxu0 0
    %346 = vmatpush1.bf16.msra.mxu0 0
    %347 = vmatprep.subr.bf16.mxu0 0
    %348 = vmatpush1.bf16.msra.mxu0 0
    %349 = vmatprep.subr.bf16.mxu0 0
    %350 = vmatpush1.bf16.msra.mxu0 0
    %351 = vmatprep.subr.bf16.mxu0 0
    %352 = vmatpush1.bf16.msra.mxu0 0
    %353 = vmatprep.subr.bf16.mxu0 0
    %354 = vmatpush1.bf16.msra.mxu0 0
    %355 = vmatprep.subr.bf16.mxu0 0
    %356 = vmatpush1.bf16.msra.mxu0 0
    %357 = vmatprep.subr.bf16.mxu0 0
    %358 = vmatpush1.bf16.msra.mxu0 0
    %359 = vmatprep.subr.bf16.mxu0 0
    %360 = vmatpush1.bf16.msra.mxu0 %v343
    %361 = vmatprep.subr.bf16.mxu0 0
    %362 = vmatpush2.bf16.msra.mxu0 0
    %363 = vmatprep.subr.bf16.mxu0 0
    %364 = vmatpush2.bf16.msra.mxu0 0
    %365 = vmatprep.subr.bf16.mxu0 0
    %366 = vmatpush2.bf16.msra.mxu0 0
    %367 = vmatprep.subr.bf16.mxu0 0
    %368 = vmatpush2.bf16.msra.mxu0 0
    %369 = vmatprep.subr.bf16.mxu0 0
    %370 = vmatpush2.bf16.msra.mxu0 0
    %371 = vmatprep.subr.bf16.mxu0 0
    %372 = vmatpush2.bf16.msra.mxu0 0
    %373 = vmatprep.subr.bf16.mxu0 0
    %374 = vmatpush2.bf16.msra.mxu0 0
    %375 = vmatprep.subr.bf16.mxu0 0
    %376 = vmatpush2.bf16.msra.mxu0 0
    %377 = vmatprep.mubr.bf16.mxu0 0
    %378 = vmatmul.mubr.bf16.gmra.mxu0 %v339
    %v379 = vpop.f32.mrf.mxu0
    %v380 = vadd.f32 0.0, %v379
    %v381 = vpop.f32.mrf.mxu0
    %v382 = vpop.f32.mrf.mxu0
    %v383 = vpop.f32.mrf.mxu0
    %384 = vdwg.mxu0
    %385 = vrot.lane.b32.xlu0 %v214, 64
    %v386 = vpop.permute.xlu0 %385
    %v388 = vsel %vm217, %v335, 0
    %v391 = vsel %vm341, %v386, 0
    %393 = vmatprep.subr.bf16.mxu0 0
    %394 = vmatpush1.bf16.msra.mxu0 0
    %395 = vmatprep.subr.bf16.mxu0 0
    %396 = vmatpush1.bf16.msra.mxu0 0
    %397 = vmatprep.subr.bf16.mxu0 0
    %398 = vmatpush1.bf16.msra.mxu0 0
    %399 = vmatprep.subr.bf16.mxu0 0
    %400 = vmatpush1.bf16.msra.mxu0 0
    %401 = vmatprep.subr.bf16.mxu0 0
    %402 = vmatpush1.bf16.msra.mxu0 0
    %403 = vmatprep.subr.bf16.mxu0 0
    %404 = vmatpush1.bf16.msra.mxu0 0
    %405 = vmatprep.subr.bf16.mxu0 0
    %406 = vmatpush1.bf16.msra.mxu0 0
    %407 = vmatprep.subr.bf16.mxu0 0
    %408 = vmatpush1.bf16.msra.mxu0 %v391
    %409 = vmatprep.subr.bf16.mxu0 0
    %410 = vmatpush2.bf16.msra.mxu0 0
    %411 = vmatprep.subr.bf16.mxu0 0
    %412 = vmatpush2.bf16.msra.mxu0 0
    %413 = vmatprep.subr.bf16.mxu0 0
    %414 = vmatpush2.bf16.msra.mxu0 0
    %415 = vmatprep.subr.bf16.mxu0 0
    %416 = vmatpush2.bf16.msra.mxu0 0
    %417 = vmatprep.subr.bf16.mxu0 0
    %418 = vmatpush2.bf16.msra.mxu0 0
    %419 = vmatprep.subr.bf16.mxu0 0
    %420 = vmatpush2.bf16.msra.mxu0 0
    %421 = vmatprep.subr.bf16.mxu0 0
    %422 = vmatpush2.bf16.msra.mxu0 0
    %423 = vmatprep.subr.bf16.mxu0 0
    %424 = vmatpush2.bf16.msra.mxu0 0
    %425 = vmatprep.mubr.bf16.mxu0 0
    %426 = vmatmul.mubr.bf16.gmra.mxu0 %v388
    %v427 = vpop.f32.mrf.mxu0
    %v428 = vadd.f32 0.0, %v427
    %v429 = vpop.f32.mrf.mxu0
    %v430 = vpop.f32.mrf.mxu0
    %v431 = vpop.f32.mrf.mxu0
    %432 = vdwg.mxu0
    %433 = vrot.lane.b32.xlu0 %v213, 120
    %v434 = vpop.permute.xlu0 %433
    %435 = vrot.lane.b32.xlu0 %v213, 88
    %v436 = vpop.permute.xlu0 %435
    %v438 = vsel %vm217, %v434, 0
    %v441 = vsel %vm217, %v436, 0
    %443 = vmatprep.subr.bf16.mxu0 0
    %444 = vmatpush1.bf16.xpose.msra.mxu0 0
    %445 = vmatprep.subr.bf16.mxu0 0
    %446 = vmatpush1.bf16.xpose.msra.mxu0 0
    %447 = vmatprep.subr.bf16.mxu0 0
    %448 = vmatpush1.bf16.xpose.msra.mxu0 0
    %449 = vmatprep.subr.bf16.mxu0 0
    %450 = vmatpush1.bf16.xpose.msra.mxu0 0
    %451 = vmatprep.subr.bf16.mxu0 0
    %452 = vmatpush1.bf16.xpose.msra.mxu0 0
    %453 = vmatprep.subr.bf16.mxu0 0
    %454 = vmatpush1.bf16.xpose.msra.mxu0 0
    %455 = vmatprep.subr.bf16.mxu0 0
    %456 = vmatpush1.bf16.xpose.msra.mxu0 0
    %457 = vmatprep.subr.bf16.mxu0 0
    %458 = vmatpush1.bf16.xpose.msra.mxu0 %v441
    %459 = vmatprep.subr.bf16.mxu0 0
    %460 = vmatpush2.bf16.xpose.msra.mxu0 0
    %461 = vmatprep.subr.bf16.mxu0 0
    %462 = vmatpush2.bf16.xpose.msra.mxu0 0
    %463 = vmatprep.subr.bf16.mxu0 0
    %464 = vmatpush2.bf16.xpose.msra.mxu0 0
    %465 = vmatprep.subr.bf16.mxu0 0
    %466 = vmatpush2.bf16.xpose.msra.mxu0 0
    %467 = vmatprep.subr.bf16.mxu0 0
    %468 = vmatpush2.bf16.xpose.msra.mxu0 0
    %469 = vmatprep.subr.bf16.mxu0 0
    %470 = vmatpush2.bf16.xpose.msra.mxu0 0
    %471 = vmatprep.subr.bf16.mxu0 0
    %472 = vmatpush2.bf16.xpose.msra.mxu0 0
    %473 = vmatprep.subr.bf16.mxu0 0
    %474 = vmatpush2.bf16.xpose.msra.mxu0 0
    %475 = vmatprep.mubr.bf16.mxu0 0
    %476 = vmatmul.mubr.bf16.gmra.mxu0 %v438
    %v477 = vpop.f32.mrf.mxu0
    %v478 = vadd.f32 %v74, %v477
    %v479 = vpop.f32.mrf.mxu0
    %v480 = vpop.f32.mrf.mxu0
    %v481 = vpop.f32.mrf.mxu0
    %482 = vdwg.mxu0
    %483 = vrot.lane.b32.xlu0 %v214, 120
    %v484 = vpop.permute.xlu0 %483
    %485 = vrot.lane.b32.xlu0 %v214, 88
    %v486 = vpop.permute.xlu0 %485
    %v488 = vsel %vm217, %v484, 0
    %v491 = vsel %vm217, %v486, 0
    %493 = vmatprep.subr.bf16.mxu0 0
    %494 = vmatpush1.bf16.xpose.msra.mxu0 0
    %495 = vmatprep.subr.bf16.mxu0 0
    %496 = vmatpush1.bf16.xpose.msra.mxu0 0
    %497 = vmatprep.subr.bf16.mxu0 0
    %498 = vmatpush1.bf16.xpose.msra.mxu0 0
    %499 = vmatprep.subr.bf16.mxu0 0
    %500 = vmatpush1.bf16.xpose.msra.mxu0 0
    %501 = vmatprep.subr.bf16.mxu0 0
    %502 = vmatpush1.bf16.xpose.msra.mxu0 0
    %503 = vmatprep.subr.bf16.mxu0 0
    %504 = vmatpush1.bf16.xpose.msra.mxu0 0
    %505 = vmatprep.subr.bf16.mxu0 0
    %506 = vmatpush1.bf16.xpose.msra.mxu0 0
    %507 = vmatprep.subr.bf16.mxu0 0
    %508 = vmatpush1.bf16.xpose.msra.mxu0 %v491
    %509 = vmatprep.subr.bf16.mxu0 0
    %510 = vmatpush2.bf16.xpose.msra.mxu0 0
    %511 = vmatprep.subr.bf16.mxu0 0
    %512 = vmatpush2.bf16.xpose.msra.mxu0 0
    %513 = vmatprep.subr.bf16.mxu0 0
    %514 = vmatpush2.bf16.xpose.msra.mxu0 0
    %515 = vmatprep.subr.bf16.mxu0 0
    %516 = vmatpush2.bf16.xpose.msra.mxu0 0
    %517 = vmatprep.subr.bf16.mxu0 0
    %518 = vmatpush2.bf16.xpose.msra.mxu0 0
    %519 = vmatprep.subr.bf16.mxu0 0
    %520 = vmatpush2.bf16.xpose.msra.mxu0 0
    %521 = vmatprep.subr.bf16.mxu0 0
    %522 = vmatpush2.bf16.xpose.msra.mxu0 0
    %523 = vmatprep.subr.bf16.mxu0 0
    %524 = vmatpush2.bf16.xpose.msra.mxu0 0
    %525 = vmatprep.mubr.bf16.mxu0 0
    %526 = vmatmul.mubr.bf16.gmra.mxu0 %v488
    %v527 = vpop.f32.mrf.mxu0
    %v528 = vadd.f32 %v75, %v527
    %v529 = vpop.f32.mrf.mxu0
    %v530 = vpop.f32.mrf.mxu0
    %v531 = vpop.f32.mrf.mxu0
    %532 = vdwg.mxu0
    %v533 = vsel %vm217, %v478, -inf
    %534 = vmax.xlane.f32.xlu0 %v533
    %v535 = vpop.xlane.xlu0 %534
    %v536 = vsel %vm217, %v528, -inf
    %537 = vmax.xlane.f32.xlu0 %v536
    %v538 = vpop.xlane.xlu0 %537
    %v539 = vsub.f32 %v478, %v535
    %v540 = vsub.f32 %v528, %v538
    %v541 = vmul.f32 %v539, 1.442695
    %v542 = vpow.pop %v541
    %v543 = vmul.f32 %v540, 1.442695
    %v544 = vpow.pop %v543
    %v545 = vsel %vm217, %v542, 0.0
    %546 = vadd.xlane.f32.xlu0 %v545
    %v547 = vpop.xlane.xlu0 %546
    %v548 = vsel %vm217, %v544, 0.0
    %549 = vadd.xlane.f32.xlu0 %v548
    %v550 = vpop.xlane.xlu0 %549
    %v551 = vrcp.pop %v547
    %v552 = vmul.f32 %v542, %v551
    %v553 = vrcp.pop %v550
    %v554 = vmul.f32 %v544, %v553
    %v555 = vpack.c.bf16 %v552, %v552
    %v556 = vpack.c.bf16 %v554, %v554
    %557 = vrot.lane.b32.xlu0 %v213, 56
    %v558 = vpop.permute.xlu0 %557
    %v560 = vsel %vm217, %v555, 0
    %v563 = vsel %vm341, %v558, 0
    %565 = vmatprep.subr.bf16.mxu0 0
    %566 = vmatpush1.bf16.msra.mxu0 0
    %567 = vmatprep.subr.bf16.mxu0 0
    %568 = vmatpush1.bf16.msra.mxu0 0
    %569 = vmatprep.subr.bf16.mxu0 0
    %570 = vmatpush1.bf16.msra.mxu0 0
    %571 = vmatprep.subr.bf16.mxu0 0
    %572 = vmatpush1.bf16.msra.mxu0 0
    %573 = vmatprep.subr.bf16.mxu0 0
    %574 = vmatpush1.bf16.msra.mxu0 0
    %575 = vmatprep.subr.bf16.mxu0 0
    %576 = vmatpush1.bf16.msra.mxu0 0
    %577 = vmatprep.subr.bf16.mxu0 0
    %578 = vmatpush1.bf16.msra.mxu0 0
    %579 = vmatprep.subr.bf16.mxu0 0
    %580 = vmatpush1.bf16.msra.mxu0 %v563
    %581 = vmatprep.subr.bf16.mxu0 0
    %582 = vmatpush2.bf16.msra.mxu0 0
    %583 = vmatprep.subr.bf16.mxu0 0
    %584 = vmatpush2.bf16.msra.mxu0 0
    %585 = vmatprep.subr.bf16.mxu0 0
    %586 = vmatpush2.bf16.msra.mxu0 0
    %587 = vmatprep.subr.bf16.mxu0 0
    %588 = vmatpush2.bf16.msra.mxu0 0
    %589 = vmatprep.subr.bf16.mxu0 0
    %590 = vmatpush2.bf16.msra.mxu0 0
    %591 = vmatprep.subr.bf16.mxu0 0
    %592 = vmatpush2.bf16.msra.mxu0 0
    %593 = vmatprep.subr.bf16.mxu0 0
    %594 = vmatpush2.bf16.msra.mxu0 0
    %595 = vmatprep.subr.bf16.mxu0 0
    %596 = vmatpush2.bf16.msra.mxu0 0
    %597 = vmatprep.mubr.bf16.mxu0 0
    %598 = vmatmul.mubr.bf16.gmra.mxu0 %v560
    %v599 = vpop.f32.mrf.mxu0
    %v600 = vadd.f32 0.0, %v599
    %v601 = vpop.f32.mrf.mxu0
    %v602 = vpop.f32.mrf.mxu0
    %v603 = vpop.f32.mrf.mxu0
    %604 = vdwg.mxu0
    %605 = vrot.lane.b32.xlu0 %v214, 56
    %v606 = vpop.permute.xlu0 %605
    %v608 = vsel %vm217, %v556, 0
    %v611 = vsel %vm341, %v606, 0
    %613 = vmatprep.subr.bf16.mxu0 0
    %614 = vmatpush1.bf16.msra.mxu0 0
    %615 = vmatprep.subr.bf16.mxu0 0
    %616 = vmatpush1.bf16.msra.mxu0 0
    %617 = vmatprep.subr.bf16.mxu0 0
    %618 = vmatpush1.bf16.msra.mxu0 0
    %619 = vmatprep.subr.bf16.mxu0 0
    %620 = vmatpush1.bf16.msra.mxu0 0
    %621 = vmatprep.subr.bf16.mxu0 0
    %622 = vmatpush1.bf16.msra.mxu0 0
    %623 = vmatprep.subr.bf16.mxu0 0
    %624 = vmatpush1.bf16.msra.mxu0 0
    %625 = vmatprep.subr.bf16.mxu0 0
    %626 = vmatpush1.bf16.msra.mxu0 0
    %627 = vmatprep.subr.bf16.mxu0 0
    %628 = vmatpush1.bf16.msra.mxu0 %v611
    %629 = vmatprep.subr.bf16.mxu0 0
    %630 = vmatpush2.bf16.msra.mxu0 0
    %631 = vmatprep.subr.bf16.mxu0 0
    %632 = vmatpush2.bf16.msra.mxu0 0
    %633 = vmatprep.subr.bf16.mxu0 0
    %634 = vmatpush2.bf16.msra.mxu0 0
    %635 = vmatprep.subr.bf16.mxu0 0
    %636 = vmatpush2.bf16.msra.mxu0 0
    %637 = vmatprep.subr.bf16.mxu0 0
    %638 = vmatpush2.bf16.msra.mxu0 0
    %639 = vmatprep.subr.bf16.mxu0 0
    %640 = vmatpush2.bf16.msra.mxu0 0
    %641 = vmatprep.subr.bf16.mxu0 0
    %642 = vmatpush2.bf16.msra.mxu0 0
    %643 = vmatprep.subr.bf16.mxu0 0
    %644 = vmatpush2.bf16.msra.mxu0 0
    %645 = vmatprep.mubr.bf16.mxu0 0
    %646 = vmatmul.mubr.bf16.gmra.mxu0 %v608
    %v647 = vpop.f32.mrf.mxu0
    %v648 = vadd.f32 0.0, %v647
    %v649 = vpop.f32.mrf.mxu0
    %v650 = vpop.f32.mrf.mxu0
    %v651 = vpop.f32.mrf.mxu0
    %652 = vdwg.mxu0
    %653 = vrot.lane.b32.xlu0 %v213, 112
    %v654 = vpop.permute.xlu0 %653
    %655 = vrot.lane.b32.xlu0 %v213, 80
    %v656 = vpop.permute.xlu0 %655
    %v658 = vsel %vm217, %v654, 0
    %v661 = vsel %vm217, %v656, 0
    %663 = vmatprep.subr.bf16.mxu0 0
    %664 = vmatpush1.bf16.xpose.msra.mxu0 0
    %665 = vmatprep.subr.bf16.mxu0 0
    %666 = vmatpush1.bf16.xpose.msra.mxu0 0
    %667 = vmatprep.subr.bf16.mxu0 0
    %668 = vmatpush1.bf16.xpose.msra.mxu0 0
    %669 = vmatprep.subr.bf16.mxu0 0
    %670 = vmatpush1.bf16.xpose.msra.mxu0 0
    %671 = vmatprep.subr.bf16.mxu0 0
    %672 = vmatpush1.bf16.xpose.msra.mxu0 0
    %673 = vmatprep.subr.bf16.mxu0 0
    %674 = vmatpush1.bf16.xpose.msra.mxu0 0
    %675 = vmatprep.subr.bf16.mxu0 0
    %676 = vmatpush1.bf16.xpose.msra.mxu0 0
    %677 = vmatprep.subr.bf16.mxu0 0
    %678 = vmatpush1.bf16.xpose.msra.mxu0 %v661
    %679 = vmatprep.subr.bf16.mxu0 0
    %680 = vmatpush2.bf16.xpose.msra.mxu0 0
    %681 = vmatprep.subr.bf16.mxu0 0
    %682 = vmatpush2.bf16.xpose.msra.mxu0 0
    %683 = vmatprep.subr.bf16.mxu0 0
    %684 = vmatpush2.bf16.xpose.msra.mxu0 0
    %685 = vmatprep.subr.bf16.mxu0 0
    %686 = vmatpush2.bf16.xpose.msra.mxu0 0
    %687 = vmatprep.subr.bf16.mxu0 0
    %688 = vmatpush2.bf16.xpose.msra.mxu0 0
    %689 = vmatprep.subr.bf16.mxu0 0
    %690 = vmatpush2.bf16.xpose.msra.mxu0 0
    %691 = vmatprep.subr.bf16.mxu0 0
    %692 = vmatpush2.bf16.xpose.msra.mxu0 0
    %693 = vmatprep.subr.bf16.mxu0 0
    %694 = vmatpush2.bf16.xpose.msra.mxu0 0
    %695 = vmatprep.mubr.bf16.mxu0 0
    %696 = vmatmul.mubr.bf16.gmra.mxu0 %v658
    %v697 = vpop.f32.mrf.mxu0
    %v698 = vadd.f32 %v74, %v697
    %v699 = vpop.f32.mrf.mxu0
    %v700 = vpop.f32.mrf.mxu0
    %v701 = vpop.f32.mrf.mxu0
    %702 = vdwg.mxu0
    %703 = vrot.lane.b32.xlu0 %v214, 112
    %v704 = vpop.permute.xlu0 %703
    %705 = vrot.lane.b32.xlu0 %v214, 80
    %v706 = vpop.permute.xlu0 %705
    %v708 = vsel %vm217, %v704, 0
    %v711 = vsel %vm217, %v706, 0
    %713 = vmatprep.subr.bf16.mxu0 0
    %714 = vmatpush1.bf16.xpose.msra.mxu0 0
    %715 = vmatprep.subr.bf16.mxu0 0
    %716 = vmatpush1.bf16.xpose.msra.mxu0 0
    %717 = vmatprep.subr.bf16.mxu0 0
    %718 = vmatpush1.bf16.xpose.msra.mxu0 0
    %719 = vmatprep.subr.bf16.mxu0 0
    %720 = vmatpush1.bf16.xpose.msra.mxu0 0
    %721 = vmatprep.subr.bf16.mxu0 0
    %722 = vmatpush1.bf16.xpose.msra.mxu0 0
    %723 = vmatprep.subr.bf16.mxu0 0
    %724 = vmatpush1.bf16.xpose.msra.mxu0 0
    %725 = vmatprep.subr.bf16.mxu0 0
    %726 = vmatpush1.bf16.xpose.msra.mxu0 0
    %727 = vmatprep.subr.bf16.mxu0 0
    %728 = vmatpush1.bf16.xpose.msra.mxu0 %v711
    %729 = vmatprep.subr.bf16.mxu0 0
    %730 = vmatpush2.bf16.xpose.msra.mxu0 0
    %731 = vmatprep.subr.bf16.mxu0 0
    %732 = vmatpush2.bf16.xpose.msra.mxu0 0
    %733 = vmatprep.subr.bf16.mxu0 0
    %734 = vmatpush2.bf16.xpose.msra.mxu0 0
    %735 = vmatprep.subr.bf16.mxu0 0
    %736 = vmatpush2.bf16.xpose.msra.mxu0 0
    %737 = vmatprep.subr.bf16.mxu0 0
    %738 = vmatpush2.bf16.xpose.msra.mxu0 0
    %739 = vmatprep.subr.bf16.mxu0 0
    %740 = vmatpush2.bf16.xpose.msra.mxu0 0
    %741 = vmatprep.subr.bf16.mxu0 0
    %742 = vmatpush2.bf16.xpose.msra.mxu0 0
    %743 = vmatprep.subr.bf16.mxu0 0
    %744 = vmatpush2.bf16.xpose.msra.mxu0 0
    %745 = vmatprep.mubr.bf16.mxu0 0
    %746 = vmatmul.mubr.bf16.gmra.mxu0 %v708
    %v747 = vpop.f32.mrf.mxu0
    %v748 = vadd.f32 %v75, %v747
    %v749 = vpop.f32.mrf.mxu0
    %v750 = vpop.f32.mrf.mxu0
    %v751 = vpop.f32.mrf.mxu0
    %752 = vdwg.mxu0
    %v753 = vsel %vm217, %v698, -inf
    %754 = vmax.xlane.f32.xlu0 %v753
    %v755 = vpop.xlane.xlu0 %754
    %v756 = vsel %vm217, %v748, -inf
    %757 = vmax.xlane.f32.xlu0 %v756
    %v758 = vpop.xlane.xlu0 %757
    %v759 = vsub.f32 %v698, %v755
    %v760 = vsub.f32 %v748, %v758
    %v761 = vmul.f32 %v759, 1.442695
    %v762 = vpow.pop %v761
    %v763 = vmul.f32 %v760, 1.442695
    %v764 = vpow.pop %v763
    %v765 = vsel %vm217, %v762, 0.0
    %766 = vadd.xlane.f32.xlu0 %v765
    %v767 = vpop.xlane.xlu0 %766
    %v768 = vsel %vm217, %v764, 0.0
    %769 = vadd.xlane.f32.xlu0 %v768
    %v770 = vpop.xlane.xlu0 %769
    %v771 = vrcp.pop %v767
    %v772 = vmul.f32 %v762, %v771
    %v773 = vrcp.pop %v770
    %v774 = vmul.f32 %v764, %v773
    %v775 = vpack.c.bf16 %v772, %v772
    %v776 = vpack.c.bf16 %v774, %v774
    %777 = vrot.lane.b32.xlu0 %v213, 48
    %v778 = vpop.permute.xlu0 %777
    %v780 = vsel %vm217, %v775, 0
    %v783 = vsel %vm341, %v778, 0
    %785 = vmatprep.subr.bf16.mxu0 0
    %786 = vmatpush1.bf16.msra.mxu0 0
    %787 = vmatprep.subr.bf16.mxu0 0
    %788 = vmatpush1.bf16.msra.mxu0 0
    %789 = vmatprep.subr.bf16.mxu0 0
    %790 = vmatpush1.bf16.msra.mxu0 0
    %791 = vmatprep.subr.bf16.mxu0 0
    %792 = vmatpush1.bf16.msra.mxu0 0
    %793 = vmatprep.subr.bf16.mxu0 0
    %794 = vmatpush1.bf16.msra.mxu0 0
    %795 = vmatprep.subr.bf16.mxu0 0
    %796 = vmatpush1.bf16.msra.mxu0 0
    %797 = vmatprep.subr.bf16.mxu0 0
    %798 = vmatpush1.bf16.msra.mxu0 0
    %799 = vmatprep.subr.bf16.mxu0 0
    %800 = vmatpush1.bf16.msra.mxu0 %v783
    %801 = vmatprep.subr.bf16.mxu0 0
    %802 = vmatpush2.bf16.msra.mxu0 0
    %803 = vmatprep.subr.bf16.mxu0 0
    %804 = vmatpush2.bf16.msra.mxu0 0
    %805 = vmatprep.subr.bf16.mxu0 0
    %806 = vmatpush2.bf16.msra.mxu0 0
    %807 = vmatprep.subr.bf16.mxu0 0
    %808 = vmatpush2.bf16.msra.mxu0 0
    %809 = vmatprep.subr.bf16.mxu0 0
    %810 = vmatpush2.bf16.msra.mxu0 0
    %811 = vmatprep.subr.bf16.mxu0 0
    %812 = vmatpush2.bf16.msra.mxu0 0
    %813 = vmatprep.subr.bf16.mxu0 0
    %814 = vmatpush2.bf16.msra.mxu0 0
    %815 = vmatprep.subr.bf16.mxu0 0
    %816 = vmatpush2.bf16.msra.mxu0 0
    %817 = vmatprep.mubr.bf16.mxu0 0
    %818 = vmatmul.mubr.bf16.gmra.mxu0 %v780
    %v819 = vpop.f32.mrf.mxu0
    %v820 = vadd.f32 0.0, %v819
    %v821 = vpop.f32.mrf.mxu0
    %v822 = vpop.f32.mrf.mxu0
    %v823 = vpop.f32.mrf.mxu0
    %824 = vdwg.mxu0
    %825 = vrot.lane.b32.xlu0 %v214, 48
    %v826 = vpop.permute.xlu0 %825
    %v828 = vsel %vm217, %v776, 0
    %v831 = vsel %vm341, %v826, 0
    %833 = vmatprep.subr.bf16.mxu0 0
    %834 = vmatpush1.bf16.msra.mxu0 0
    %835 = vmatprep.subr.bf16.mxu0 0
    %836 = vmatpush1.bf16.msra.mxu0 0
    %837 = vmatprep.subr.bf16.mxu0 0
    %838 = vmatpush1.bf16.msra.mxu0 0
    %839 = vmatprep.subr.bf16.mxu0 0
    %840 = vmatpush1.bf16.msra.mxu0 0
    %841 = vmatprep.subr.bf16.mxu0 0
    %842 = vmatpush1.bf16.msra.mxu0 0
    %843 = vmatprep.subr.bf16.mxu0 0
    %844 = vmatpush1.bf16.msra.mxu0 0
    %845 = vmatprep.subr.bf16.mxu0 0
    %846 = vmatpush1.bf16.msra.mxu0 0
    %847 = vmatprep.subr.bf16.mxu0 0
    %848 = vmatpush1.bf16.msra.mxu0 %v831
    %849 = vmatprep.subr.bf16.mxu0 0
    %850 = vmatpush2.bf16.msra.mxu0 0
    %851 = vmatprep.subr.bf16.mxu0 0
    %852 = vmatpush2.bf16.msra.mxu0 0
    %853 = vmatprep.subr.bf16.mxu0 0
    %854 = vmatpush2.bf16.msra.mxu0 0
    %855 = vmatprep.subr.bf16.mxu0 0
    %856 = vmatpush2.bf16.msra.mxu0 0
    %857 = vmatprep.subr.bf16.mxu0 0
    %858 = vmatpush2.bf16.msra.mxu0 0
    %859 = vmatprep.subr.bf16.mxu0 0
    %860 = vmatpush2.bf16.msra.mxu0 0
    %861 = vmatprep.subr.bf16.mxu0 0
    %862 = vmatpush2.bf16.msra.mxu0 0
    %863 = vmatprep.subr.bf16.mxu0 0
    %864 = vmatpush2.bf16.msra.mxu0 0
    %865 = vmatprep.mubr.bf16.mxu0 0
    %866 = vmatmul.mubr.bf16.gmra.mxu0 %v828
    %v867 = vpop.f32.mrf.mxu0
    %v868 = vadd.f32 0.0, %v867
    %v869 = vpop.f32.mrf.mxu0
    %v870 = vpop.f32.mrf.mxu0
    %v871 = vpop.f32.mrf.mxu0
    %872 = vdwg.mxu0
    %873 = vrot.lane.b32.xlu0 %v213, 104
    %v874 = vpop.permute.xlu0 %873
    %875 = vrot.lane.b32.xlu0 %v213, 72
    %v876 = vpop.permute.xlu0 %875
    %v878 = vsel %vm217, %v874, 0
    %v881 = vsel %vm217, %v876, 0
    %883 = vmatprep.subr.bf16.mxu0 0
    %884 = vmatpush1.bf16.xpose.msra.mxu0 0
    %885 = vmatprep.subr.bf16.mxu0 0
    %886 = vmatpush1.bf16.xpose.msra.mxu0 0
    %887 = vmatprep.subr.bf16.mxu0 0
    %888 = vmatpush1.bf16.xpose.msra.mxu0 0
    %889 = vmatprep.subr.bf16.mxu0 0
    %890 = vmatpush1.bf16.xpose.msra.mxu0 0
    %891 = vmatprep.subr.bf16.mxu0 0
    %892 = vmatpush1.bf16.xpose.msra.mxu0 0
    %893 = vmatprep.subr.bf16.mxu0 0
    %894 = vmatpush1.bf16.xpose.msra.mxu0 0
    %895 = vmatprep.subr.bf16.mxu0 0
    %896 = vmatpush1.bf16.xpose.msra.mxu0 0
    %897 = vmatprep.subr.bf16.mxu0 0
    %898 = vmatpush1.bf16.xpose.msra.mxu0 %v881
    %899 = vmatprep.subr.bf16.mxu0 0
    %900 = vmatpush2.bf16.xpose.msra.mxu0 0
    %901 = vmatprep.subr.bf16.mxu0 0
    %902 = vmatpush2.bf16.xpose.msra.mxu0 0
    %903 = vmatprep.subr.bf16.mxu0 0
    %904 = vmatpush2.bf16.xpose.msra.mxu0 0
    %905 = vmatprep.subr.bf16.mxu0 0
    %906 = vmatpush2.bf16.xpose.msra.mxu0 0
    %907 = vmatprep.subr.bf16.mxu0 0
    %908 = vmatpush2.bf16.xpose.msra.mxu0 0
    %909 = vmatprep.subr.bf16.mxu0 0
    %910 = vmatpush2.bf16.xpose.msra.mxu0 0
    %911 = vmatprep.subr.bf16.mxu0 0
    %912 = vmatpush2.bf16.xpose.msra.mxu0 0
    %913 = vmatprep.subr.bf16.mxu0 0
    %914 = vmatpush2.bf16.xpose.msra.mxu0 0
    %915 = vmatprep.mubr.bf16.mxu0 0
    %916 = vmatmul.mubr.bf16.gmra.mxu0 %v878
    %v917 = vpop.f32.mrf.mxu0
    %v918 = vadd.f32 %v74, %v917
    %v919 = vpop.f32.mrf.mxu0
    %v920 = vpop.f32.mrf.mxu0
    %v921 = vpop.f32.mrf.mxu0
    %922 = vdwg.mxu0
    %923 = vrot.lane.b32.xlu0 %v214, 104
    %v924 = vpop.permute.xlu0 %923
    %925 = vrot.lane.b32.xlu0 %v214, 72
    %v926 = vpop.permute.xlu0 %925
    %v928 = vsel %vm217, %v924, 0
    %v931 = vsel %vm217, %v926, 0
    %933 = vmatprep.subr.bf16.mxu0 0
    %934 = vmatpush1.bf16.xpose.msra.mxu0 0
    %935 = vmatprep.subr.bf16.mxu0 0
    %936 = vmatpush1.bf16.xpose.msra.mxu0 0
    %937 = vmatprep.subr.bf16.mxu0 0
    %938 = vmatpush1.bf16.xpose.msra.mxu0 0
    %939 = vmatprep.subr.bf16.mxu0 0
    %940 = vmatpush1.bf16.xpose.msra.mxu0 0
    %941 = vmatprep.subr.bf16.mxu0 0
    %942 = vmatpush1.bf16.xpose.msra.mxu0 0
    %943 = vmatprep.subr.bf16.mxu0 0
    %944 = vmatpush1.bf16.xpose.msra.mxu0 0
    %945 = vmatprep.subr.bf16.mxu0 0
    %946 = vmatpush1.bf16.xpose.msra.mxu0 0
    %947 = vmatprep.subr.bf16.mxu0 0
    %948 = vmatpush1.bf16.xpose.msra.mxu0 %v931
    %949 = vmatprep.subr.bf16.mxu0 0
    %950 = vmatpush2.bf16.xpose.msra.mxu0 0
    %951 = vmatprep.subr.bf16.mxu0 0
    %952 = vmatpush2.bf16.xpose.msra.mxu0 0
    %953 = vmatprep.subr.bf16.mxu0 0
    %954 = vmatpush2.bf16.xpose.msra.mxu0 0
    %955 = vmatprep.subr.bf16.mxu0 0
    %956 = vmatpush2.bf16.xpose.msra.mxu0 0
    %957 = vmatprep.subr.bf16.mxu0 0
    %958 = vmatpush2.bf16.xpose.msra.mxu0 0
    %959 = vmatprep.subr.bf16.mxu0 0
    %960 = vmatpush2.bf16.xpose.msra.mxu0 0
    %961 = vmatprep.subr.bf16.mxu0 0
    %962 = vmatpush2.bf16.xpose.msra.mxu0 0
    %963 = vmatprep.subr.bf16.mxu0 0
    %964 = vmatpush2.bf16.xpose.msra.mxu0 0
    %965 = vmatprep.mubr.bf16.mxu0 0
    %966 = vmatmul.mubr.bf16.gmra.mxu0 %v928
    %v967 = vpop.f32.mrf.mxu0
    %v968 = vadd.f32 %v75, %v967
    %v969 = vpop.f32.mrf.mxu0
    %v970 = vpop.f32.mrf.mxu0
    %v971 = vpop.f32.mrf.mxu0
    %972 = vdwg.mxu0
    %v973 = vsel %vm217, %v918, -inf
    %974 = vmax.xlane.f32.xlu0 %v973
    %v975 = vpop.xlane.xlu0 %974
    %v976 = vsel %vm217, %v968, -inf
    %977 = vmax.xlane.f32.xlu0 %v976
    %v978 = vpop.xlane.xlu0 %977
    %v979 = vsub.f32 %v918, %v975
    %v980 = vsub.f32 %v968, %v978
    %v981 = vmul.f32 %v979, 1.442695
    %v982 = vpow.pop %v981
    %v983 = vmul.f32 %v980, 1.442695
    %v984 = vpow.pop %v983
    %v985 = vsel %vm217, %v982, 0.0
    %986 = vadd.xlane.f32.xlu0 %v985
    %v987 = vpop.xlane.xlu0 %986
    %v988 = vsel %vm217, %v984, 0.0
    %989 = vadd.xlane.f32.xlu0 %v988
    %v990 = vpop.xlane.xlu0 %989
    %v991 = vrcp.pop %v987
    %v992 = vmul.f32 %v982, %v991
    %v993 = vrcp.pop %v990
    %v994 = vmul.f32 %v984, %v993
    %v995 = vpack.c.bf16 %v992, %v992
    %v996 = vpack.c.bf16 %v994, %v994
    %997 = vrot.lane.b32.xlu0 %v213, 40
    %v998 = vpop.permute.xlu0 %997
    %v1000 = vsel %vm217, %v995, 0
    %v1003 = vsel %vm341, %v998, 0
    %1005 = vmatprep.subr.bf16.mxu0 0
    %1006 = vmatpush1.bf16.msra.mxu0 0
    %1007 = vmatprep.subr.bf16.mxu0 0
    %1008 = vmatpush1.bf16.msra.mxu0 0
    %1009 = vmatprep.subr.bf16.mxu0 0
    %1010 = vmatpush1.bf16.msra.mxu0 0
    %1011 = vmatprep.subr.bf16.mxu0 0
    %1012 = vmatpush1.bf16.msra.mxu0 0
    %1013 = vmatprep.subr.bf16.mxu0 0
    %1014 = vmatpush1.bf16.msra.mxu0 0
    %1015 = vmatprep.subr.bf16.mxu0 0
    %1016 = vmatpush1.bf16.msra.mxu0 0
    %1017 = vmatprep.subr.bf16.mxu0 0
    %1018 = vmatpush1.bf16.msra.mxu0 0
    %1019 = vmatprep.subr.bf16.mxu0 0
    %1020 = vmatpush1.bf16.msra.mxu0 %v1003
    %1021 = vmatprep.subr.bf16.mxu0 0
    %1022 = vmatpush2.bf16.msra.mxu0 0
    %1023 = vmatprep.subr.bf16.mxu0 0
    %1024 = vmatpush2.bf16.msra.mxu0 0
    %1025 = vmatprep.subr.bf16.mxu0 0
    %1026 = vmatpush2.bf16.msra.mxu0 0
    %1027 = vmatprep.subr.bf16.mxu0 0
    %1028 = vmatpush2.bf16.msra.mxu0 0
    %1029 = vmatprep.subr.bf16.mxu0 0
    %1030 = vmatpush2.bf16.msra.mxu0 0
    %1031 = vmatprep.subr.bf16.mxu0 0
    %1032 = vmatpush2.bf16.msra.mxu0 0
    %1033 = vmatprep.subr.bf16.mxu0 0
    %1034 = vmatpush2.bf16.msra.mxu0 0
    %1035 = vmatprep.subr.bf16.mxu0 0
    %1036 = vmatpush2.bf16.msra.mxu0 0
    %1037 = vmatprep.mubr.bf16.mxu0 0
    %1038 = vmatmul.mubr.bf16.gmra.mxu0 %v1000
    %v1039 = vpop.f32.mrf.mxu0
    %v1040 = vadd.f32 0.0, %v1039
    %v1041 = vpop.f32.mrf.mxu0
    %v1042 = vpop.f32.mrf.mxu0
    %v1043 = vpop.f32.mrf.mxu0
    %1044 = vdwg.mxu0
    %1045 = vrot.lane.b32.xlu0 %v214, 40
    %v1046 = vpop.permute.xlu0 %1045
    %v1048 = vsel %vm217, %v996, 0
    %v1051 = vsel %vm341, %v1046, 0
    %1053 = vmatprep.subr.bf16.mxu0 0
    %1054 = vmatpush1.bf16.msra.mxu0 0
    %1055 = vmatprep.subr.bf16.mxu0 0
    %1056 = vmatpush1.bf16.msra.mxu0 0
    %1057 = vmatprep.subr.bf16.mxu0 0
    %1058 = vmatpush1.bf16.msra.mxu0 0
    %1059 = vmatprep.subr.bf16.mxu0 0
    %1060 = vmatpush1.bf16.msra.mxu0 0
    %1061 = vmatprep.subr.bf16.mxu0 0
    %1062 = vmatpush1.bf16.msra.mxu0 0
    %1063 = vmatprep.subr.bf16.mxu0 0
    %1064 = vmatpush1.bf16.msra.mxu0 0
    %1065 = vmatprep.subr.bf16.mxu0 0
    %1066 = vmatpush1.bf16.msra.mxu0 0
    %1067 = vmatprep.subr.bf16.mxu0 0
    %1068 = vmatpush1.bf16.msra.mxu0 %v1051
    %1069 = vmatprep.subr.bf16.mxu0 0
    %1070 = vmatpush2.bf16.msra.mxu0 0
    %1071 = vmatprep.subr.bf16.mxu0 0
    %1072 = vmatpush2.bf16.msra.mxu0 0
    %1073 = vmatprep.subr.bf16.mxu0 0
    %1074 = vmatpush2.bf16.msra.mxu0 0
    %1075 = vmatprep.subr.bf16.mxu0 0
    %1076 = vmatpush2.bf16.msra.mxu0 0
    %1077 = vmatprep.subr.bf16.mxu0 0
    %1078 = vmatpush2.bf16.msra.mxu0 0
    %1079 = vmatprep.subr.bf16.mxu0 0
    %1080 = vmatpush2.bf16.msra.mxu0 0
    %1081 = vmatprep.subr.bf16.mxu0 0
    %1082 = vmatpush2.bf16.msra.mxu0 0
    %1083 = vmatprep.subr.bf16.mxu0 0
    %1084 = vmatpush2.bf16.msra.mxu0 0
    %1085 = vmatprep.mubr.bf16.mxu0 0
    %1086 = vmatmul.mubr.bf16.gmra.mxu0 %v1048
    %v1087 = vpop.f32.mrf.mxu0
    %v1088 = vadd.f32 0.0, %v1087
    %v1089 = vpop.f32.mrf.mxu0
    %v1090 = vpop.f32.mrf.mxu0
    %v1091 = vpop.f32.mrf.mxu0
    %1092 = vdwg.mxu0
    %1095 = vrot.lane.b32.xlu0 %v600, 8
    %v1096 = vpop.permute.xlu0 %1095
    %1097 = vrot.lane.b32.xlu0 %v648, 8
    %v1098 = vpop.permute.xlu0 %1097
    %1103 = vrot.lane.b32.xlu0 %v820, 16
    %v1104 = vpop.permute.xlu0 %1103
    %1105 = vrot.lane.b32.xlu0 %v868, 16
    %v1106 = vpop.permute.xlu0 %1105
    %1111 = vrot.lane.b32.xlu0 %v1040, 24
    %v1112 = vpop.permute.xlu0 %1111
    %1113 = vrot.lane.b32.xlu0 %v1088, 24
    %v1114 = vpop.permute.xlu0 %1113
    %v1117 = vsel %vm217, %v380, %v1096
    %v1118 = vsel %vm217, %v428, %v1098
    %vm1119 = vcmask 130048
    %v1120 = vsel %vm1119, %v1117, %v1104
    %v1121 = vsel %vm1119, %v1118, %v1106
    %vm1122 = vcmask 195584
    %v1123 = vsel %vm1122, %v1120, %v1112
    %v1124 = vsel %vm1122, %v1121, %v1114
    %v1125 = vpack.c.bf16 %v1124, %v1123
    %v1126 = vlaneseq
    %v1127 = vshrl.u32 %v1126, 7
    %v1128 = vsub.s32 0, %v1127
    %v1129 = vrot.slane %v122, %v1128
    %v1134 = vunpack.c.l.b16 %v132
    %v1135 = vunpack.c.l.b16 %v133
    %v1136 = vunpack.c.l.b16 %v134
    %v1137 = vunpack.c.l.b16 %v135
    %v1138 = vpack.c.b16 %v1135, %v1134
    %v1139 = vpack.c.b16 %v1137, %v1136
    %v1143 = vsel %vm80, %v1125, 0
    %1145 = vmatprep.subr.bf16.mxu0 0
    %1146 = vmatpush1.bf16.msra.mxu0 0
    %1147 = vmatprep.subr.bf16.mxu0 0
    %1148 = vmatpush1.bf16.msra.mxu0 0
    %1149 = vmatprep.subr.bf16.mxu0 0
    %1150 = vmatpush1.bf16.msra.mxu0 0
    %1151 = vmatprep.subr.bf16.mxu0 0
    %1152 = vmatpush1.bf16.msra.mxu0 0
    %1153 = vmatprep.subr.bf16.mxu0 0
    %1154 = vmatpush1.bf16.msra.mxu0 0
    %1155 = vmatprep.subr.bf16.mxu0 0
    %1156 = vmatpush1.bf16.msra.mxu0 0
    %1157 = vmatprep.subr.bf16.mxu0 0
    %1158 = vmatpush1.bf16.msra.mxu0 %v1139
    %1159 = vmatprep.subr.bf16.mxu0 0
    %1160 = vmatpush1.bf16.msra.mxu0 %v1138
    %1161 = vmatprep.subr.bf16.mxu0 0
    %1162 = vmatpush2.bf16.msra.mxu0 0
    %1163 = vmatprep.subr.bf16.mxu0 0
    %1164 = vmatpush2.bf16.msra.mxu0 0
    %1165 = vmatprep.subr.bf16.mxu0 0
    %1166 = vmatpush2.bf16.msra.mxu0 0
    %1167 = vmatprep.subr.bf16.mxu0 0
    %1168 = vmatpush2.bf16.msra.mxu0 0
    %1169 = vmatprep.subr.bf16.mxu0 0
    %1170 = vmatpush2.bf16.msra.mxu0 0
    %1171 = vmatprep.subr.bf16.mxu0 0
    %1172 = vmatpush2.bf16.msra.mxu0 0
    %1173 = vmatprep.subr.bf16.mxu0 0
    %1174 = vmatpush2.bf16.msra.mxu0 0
    %1175 = vmatprep.subr.bf16.mxu0 0
    %1176 = vmatpush2.bf16.msra.mxu0 0
    %1177 = vmatprep.mubr.bf16.mxu0 0
    %1178 = vmatmul.mubr.bf16.gmra.mxu0 %v1143
    %v1179 = vpop.f32.mrf.mxu0
    %v1180 = vadd.f32 %v1129, %v1179
    %v1181 = vpop.f32.mrf.mxu0
    %v1182 = vpop.f32.mrf.mxu0
    %v1183 = vadd.f32 %v1129, %v1182
    %v1184 = vpop.f32.mrf.mxu0
    %1185 = vdwg.mxu0
    %v1186 = vadd.f32 %v1180, %v118
    %v1187 = vadd.f32 %v1183, %v119
    %v1188 = vsel %vm80, %v1186, 0.0
    %1189 = vadd.xlane.f32.xlu0 %v1188
    %v1190 = vpop.xlane.xlu0 %1189
    %v1191 = vsel %vm80, %v1187, 0.0
    %1192 = vadd.xlane.f32.xlu0 %v1191
    %v1193 = vpop.xlane.xlu0 %1192
    %v1194 = vmul.f32 %v1190, %v87
    %v1195 = vmul.f32 %v1193, %v87
    %v1196 = vsub.f32 %v1186, %v1194
    %v1197 = vsub.f32 %v1187, %v1195
    %v1198 = vmul.f32 %v1196, %v1196
    %v1199 = vmul.f32 %v1197, %v1197
    %v1200 = vsel %vm80, %v1198, 0.0
    %1201 = vadd.xlane.f32.xlu0 %v1200
    %v1202 = vpop.xlane.xlu0 %1201
    %v1203 = vsel %vm80, %v1199, 0.0
    %1204 = vadd.xlane.f32.xlu0 %v1203
    %v1205 = vpop.xlane.xlu0 %1204
    %v1206 = vmul.f32 %v1202, %v87
    %v1207 = vmul.f32 %v1205, %v87
    %v1208 = vadd.f32 %v1206, 1e-12
    %v1209 = vadd.f32 %v1207, 1e-12
    %v1210 = vrsqrt.pop %v1208
    %v1211 = vrsqrt.pop %v1209
    %v1212 = vmul.f32 %v1196, %v1210
    %v1213 = vmul.f32 %v1197, %v1211
    %v1214 = vlaneseq
    %v1215 = vshrl.u32 %v1214, 7
    %v1216 = vsub.s32 0, %v1215
    %v1217 = vrot.slane %v123, %v1216
    %v1218 = vmul.f32 %v1217, %v1212
    %v1219 = vmul.f32 %v1217, %v1213
    %v1220 = vlaneseq
    %v1221 = vshrl.u32 %v1220, 7
    %v1222 = vsub.s32 0, %v1221
    %v1223 = vrot.slane %v124, %v1222
    %v1224 = vadd.f32 %v1218, %v1223
    %v1225 = vadd.f32 %v1219, %v1223
    %v1226 = vpack.c.bf16 %v1225, %v1224
    %v1227 = vlaneseq
    %v1228 = vshrl.u32 %v1227, 7
    %v1229 = vsub.s32 0, %v1228
    %v1230 = vrot.slane %v121, %v1229
    %v1235 = vunpack.c.l.b16 %v136
    %v1236 = vunpack.c.l.b16 %v137
    %v1237 = vunpack.c.l.b16 %v138
    %v1238 = vunpack.c.l.b16 %v139
    %v1239 = vpack.c.b16 %v1236, %v1235
    %v1240 = vpack.c.b16 %v1238, %v1237
    %v1244 = vsel %vm80, %v1226, 0
    %1246 = vmatprep.subr.bf16.mxu0 0
    %1247 = vmatpush1.bf16.msra.mxu0 0
    %1248 = vmatprep.subr.bf16.mxu0 0
    %1249 = vmatpush1.bf16.msra.mxu0 0
    %1250 = vmatprep.subr.bf16.mxu0 0
    %1251 = vmatpush1.bf16.msra.mxu0 0
    %1252 = vmatprep.subr.bf16.mxu0 0
    %1253 = vmatpush1.bf16.msra.mxu0 0
    %1254 = vmatprep.subr.bf16.mxu0 0
    %1255 = vmatpush1.bf16.msra.mxu0 0
    %1256 = vmatprep.subr.bf16.mxu0 0
    %1257 = vmatpush1.bf16.msra.mxu0 0
    %1258 = vmatprep.subr.bf16.mxu0 0
    %1259 = vmatpush1.bf16.msra.mxu0 %v1240
    %1260 = vmatprep.subr.bf16.mxu0 0
    %1261 = vmatpush1.bf16.msra.mxu0 %v1239
    %1262 = vmatprep.subr.bf16.mxu0 0
    %1263 = vmatpush2.bf16.msra.mxu0 0
    %1264 = vmatprep.subr.bf16.mxu0 0
    %1265 = vmatpush2.bf16.msra.mxu0 0
    %1266 = vmatprep.subr.bf16.mxu0 0
    %1267 = vmatpush2.bf16.msra.mxu0 0
    %1268 = vmatprep.subr.bf16.mxu0 0
    %1269 = vmatpush2.bf16.msra.mxu0 0
    %1270 = vmatprep.subr.bf16.mxu0 0
    %1271 = vmatpush2.bf16.msra.mxu0 0
    %1272 = vmatprep.subr.bf16.mxu0 0
    %1273 = vmatpush2.bf16.msra.mxu0 0
    %1274 = vmatprep.subr.bf16.mxu0 0
    %1275 = vmatpush2.bf16.msra.mxu0 0
    %1276 = vmatprep.subr.bf16.mxu0 0
    %1277 = vmatpush2.bf16.msra.mxu0 0
    %1278 = vmatprep.mubr.bf16.mxu0 0
    %1279 = vmatmul.mubr.bf16.gmra.mxu0 %v1244
    %v1280 = vpop.f32.mrf.mxu0
    %v1281 = vadd.f32 %v1230, %v1280
    %v1282 = vpop.f32.mrf.mxu0
    %v1283 = vpop.f32.mrf.mxu0
    %v1284 = vadd.f32 %v1230, %v1283
    %v1285 = vpop.f32.mrf.mxu0
    %1286 = vdwg.mxu0
    %v1287 = vmul.f32 %v1281, 0.5
    %v1288 = vmul.f32 %v1284, 0.5
    %v1289 = vmul.f32 %v1281, 0.70710677
    %v1290 = vmul.f32 %v1284, 0.70710677
    %v1291 = verf.f32.pop %v1289
    %v1292 = verf.f32.pop %v1290
    %v1293 = vadd.f32 %v1291, 1.0
    %v1294 = vadd.f32 %v1292, 1.0
    %v1295 = vmul.f32 %v1287, %v1293
    %v1296 = vmul.f32 %v1288, %v1294
    %v1297 = vpack.c.bf16 %v1296, %v1295
    %v1298 = vlaneseq
    %v1299 = vshrl.u32 %v1298, 7
    %v1300 = vsub.s32 0, %v1299
    %v1301 = vrot.slane %v125, %v1300
    %v1310 = vunpack.c.l.b16 %v140
    %v1311 = vunpack.c.l.b16 %v141
    %v1312 = vunpack.c.l.b16 %v142
    %v1313 = vunpack.c.l.b16 %v143
    %v1314 = vunpack.c.l.b16 %v144
    %v1315 = vunpack.c.l.b16 %v145
    %v1316 = vunpack.c.l.b16 %v146
    %v1317 = vunpack.c.l.b16 %v147
    %v1318 = vpack.c.b16 %v1311, %v1310
    %v1319 = vpack.c.b16 %v1313, %v1312
    %v1320 = vpack.c.b16 %v1315, %v1314
    %v1321 = vpack.c.b16 %v1317, %v1316
    %vm1326 = vcmask 523264
    %v1328 = vsel %vm1326, %v1297, 0
    %1330 = vmatprep.subr.bf16.mxu0 0
    %1331 = vmatpush1.bf16.msra.mxu0 0
    %1332 = vmatprep.subr.bf16.mxu0 0
    %1333 = vmatpush1.bf16.msra.mxu0 0
    %1334 = vmatprep.subr.bf16.mxu0 0
    %1335 = vmatpush1.bf16.msra.mxu0 0
    %1336 = vmatprep.subr.bf16.mxu0 0
    %1337 = vmatpush1.bf16.msra.mxu0 0
    %1338 = vmatprep.subr.bf16.mxu0 0
    %1339 = vmatpush1.bf16.msra.mxu0 %v1321
    %1340 = vmatprep.subr.bf16.mxu0 0
    %1341 = vmatpush1.bf16.msra.mxu0 %v1320
    %1342 = vmatprep.subr.bf16.mxu0 0
    %1343 = vmatpush1.bf16.msra.mxu0 %v1319
    %1344 = vmatprep.subr.bf16.mxu0 0
    %1345 = vmatpush1.bf16.msra.mxu0 %v1318
    %1346 = vmatprep.subr.bf16.mxu0 0
    %1347 = vmatpush2.bf16.msra.mxu0 0
    %1348 = vmatprep.subr.bf16.mxu0 0
    %1349 = vmatpush2.bf16.msra.mxu0 0
    %1350 = vmatprep.subr.bf16.mxu0 0
    %1351 = vmatpush2.bf16.msra.mxu0 0
    %1352 = vmatprep.subr.bf16.mxu0 0
    %1353 = vmatpush2.bf16.msra.mxu0 0
    %1354 = vmatprep.subr.bf16.mxu0 0
    %1355 = vmatpush2.bf16.msra.mxu0 0
    %1356 = vmatprep.subr.bf16.mxu0 0
    %1357 = vmatpush2.bf16.msra.mxu0 0
    %1358 = vmatprep.subr.bf16.mxu0 0
    %1359 = vmatpush2.bf16.msra.mxu0 0
    %1360 = vmatprep.subr.bf16.mxu0 0
    %1361 = vmatpush2.bf16.msra.mxu0 0
    %1362 = vmatprep.mubr.bf16.mxu0 0
    %1363 = vmatmul.mubr.bf16.gmra.mxu0 %v1328
    %v1364 = vpop.f32.mrf.mxu0
    %v1365 = vadd.f32 %v1301, %v1364
    %v1366 = vpop.f32.mrf.mxu0
    %v1367 = vpop.f32.mrf.mxu0
    %v1368 = vadd.f32 %v1301, %v1367
    %v1369 = vpop.f32.mrf.mxu0
    %1370 = vdwg.mxu0
    %v1371 = vadd.f32 %v1365, %v1224
    %v1372 = vadd.f32 %v1368, %v1225
    %v1373 = vsel %vm80, %v1371, 0.0
    %1374 = vadd.xlane.f32.xlu0 %v1373
    %v1375 = vpop.xlane.xlu0 %1374
    %v1376 = vsel %vm80, %v1372, 0.0
    %1377 = vadd.xlane.f32.xlu0 %v1376
    %v1378 = vpop.xlane.xlu0 %1377
    %v1379 = vmul.f32 %v1375, %v87
    %v1380 = vmul.f32 %v1378, %v87
    %v1381 = vsub.f32 %v1371, %v1379
    %v1382 = vsub.f32 %v1372, %v1380
    %v1383 = vmul.f32 %v1381, %v1381
    %v1384 = vmul.f32 %v1382, %v1382
    %v1385 = vsel %vm80, %v1383, 0.0
    %1386 = vadd.xlane.f32.xlu0 %v1385
    %v1387 = vpop.xlane.xlu0 %1386
    %v1388 = vsel %vm80, %v1384, 0.0
    %1389 = vadd.xlane.f32.xlu0 %v1388
    %v1390 = vpop.xlane.xlu0 %1389
    %v1391 = vmul.f32 %v1387, %v87
    %v1392 = vmul.f32 %v1390, %v87
    %v1393 = vadd.f32 %v1391, 1e-12
    %v1394 = vadd.f32 %v1392, 1e-12
    %v1395 = vrsqrt.pop %v1393
    %v1396 = vrsqrt.pop %v1394
    %v1397 = vmul.f32 %v1381, %v1395
    %v1398 = vmul.f32 %v1382, %v1396
    %v1399 = vlaneseq
    %v1400 = vshrl.u32 %v1399, 7
    %v1401 = vsub.s32 0, %v1400
    %v1402 = vrot.slane %v126, %v1401
    %v1403 = vmul.f32 %v1402, %v1397
    %v1404 = vmul.f32 %v1402, %v1398
    %v1405 = vlaneseq
    %v1406 = vshrl.u32 %v1405, 7
    %v1407 = vsub.s32 0, %v1406
    %v1408 = vrot.slane %v127, %v1407
    %v1409 = vadd.f32 %v1403, %v1408
    %v1410 = vadd.f32 %v1404, %v1408
    %1411 = vst.msk [vmem:[#allocation10] sm:$0xff] %vm80, %v1409
    %1412 = vst.msk [vmem:[#allocation10 + $0x8] sm:$0xff] %vm80, %v1410
    %v1413 = vld [vmem:[#allocation8 + $0xa] sm:$0x1]
    %v1414 = vld [vmem:[#allocation8 + $0xb] sm:$0x1]
    %v1415 = vld [vmem:[#allocation8 + $0xc] sm:$0x1]
    %v1416 = vld [vmem:[#allocation8 + $0xd] sm:$0x1]
    %v1417 = vld [vmem:[#allocation8 + $0xe] sm:$0x1]
    %v1418 = vld [vmem:[#allocation8 + $0xf] sm:$0x1]
    %v1419 = vld [vmem:[#allocation8 + $0x10] sm:$0x1]
    %v1420 = vld [vmem:[#allocation8 + $0x11] sm:$0x1]
    %s1421 = scalar_lea.vmem [#allocation7], 80
    %v1422 = vld [vmem:[%s1421] sm:$0xf]
    %v1423 = vld [vmem:[%s1421 + $0x4] sm:$0xf]
    %v1424 = vld [vmem:[%s1421 + $0x8] sm:$0xf]
    %v1425 = vld [vmem:[%s1421 + $0xc] sm:$0xf]
    %v1426 = vld [vmem:[%s1421 + $0x10] sm:$0xf]
    %v1427 = vld [vmem:[%s1421 + $0x14] sm:$0xf]
    %v1428 = vld [vmem:[%s1421 + $0x18] sm:$0xf]
    %v1429 = vld [vmem:[%s1421 + $0x1c] sm:$0xf]
    %v1430 = vld [vmem:[%s1421 + $0x20] sm:$0xf]
    %v1431 = vld [vmem:[%s1421 + $0x24] sm:$0xf]
    %v1432 = vld [vmem:[%s1421 + $0x28] sm:$0xf]
    %v1433 = vld [vmem:[%s1421 + $0x2c] sm:$0xf]
    %v1434 = vld [vmem:[%s1421 + $0x30] sm:$0xf]
    %v1435 = vld [vmem:[%s1421 + $0x34] sm:$0xf]
    %v1436 = vld [vmem:[%s1421 + $0x38] sm:$0xf]
    %v1437 = vld [vmem:[%s1421 + $0x3c] sm:$0xf]
    %v1438 = vld [vmem:[%s1421 + $0x40] sm:$0xf]
    %v1439 = vld [vmem:[%s1421 + $0x44] sm:$0xf]
    %v1440 = vld [vmem:[%s1421 + $0x48] sm:$0xf]
    %v1441 = vld [vmem:[%s1421 + $0x4c] sm:$0xf]
    %v1442 = vpack.c.bf16 %v1410, %v1409
    %v1443 = vlaneseq
    %v1444 = vshrl.u32 %v1443, 7
    %v1445 = vsub.s32 0, %v1444
    %v1446 = vrot.slane %v1413, %v1445
    %v1451 = vunpack.c.l.b16 %v1422
    %v1452 = vunpack.c.l.b16 %v1423
    %v1453 = vunpack.c.l.b16 %v1424
    %v1454 = vunpack.c.l.b16 %v1425
    %v1455 = vpack.c.b16 %v1452, %v1451
    %v1456 = vpack.c.b16 %v1454, %v1453
    %v1460 = vsel %vm80, %v1442, 0
    %1462 = vmatprep.subr.bf16.mxu0 0
    %1463 = vmatpush1.bf16.msra.mxu0 0
    %1464 = vmatprep.subr.bf16.mxu0 0
    %1465 = vmatpush1.bf16.msra.mxu0 0
    %1466 = vmatprep.subr.bf16.mxu0 0
    %1467 = vmatpush1.bf16.msra.mxu0 0
    %1468 = vmatprep.subr.bf16.mxu0 0
    %1469 = vmatpush1.bf16.msra.mxu0 0
    %1470 = vmatprep.subr.bf16.mxu0 0
    %1471 = vmatpush1.bf16.msra.mxu0 0
    %1472 = vmatprep.subr.bf16.mxu0 0
    %1473 = vmatpush1.bf16.msra.mxu0 0
    %1474 = vmatprep.subr.bf16.mxu0 0
    %1475 = vmatpush1.bf16.msra.mxu0 %v1456
    %1476 = vmatprep.subr.bf16.mxu0 0
    %1477 = vmatpush1.bf16.msra.mxu0 %v1455
    %1478 = vmatprep.subr.bf16.mxu0 0
    %1479 = vmatpush2.bf16.msra.mxu0 0
    %1480 = vmatprep.subr.bf16.mxu0 0
    %1481 = vmatpush2.bf16.msra.mxu0 0
    %1482 = vmatprep.subr.bf16.mxu0 0
    %1483 = vmatpush2.bf16.msra.mxu0 0
    %1484 = vmatprep.subr.bf16.mxu0 0
    %1485 = vmatpush2.bf16.msra.mxu0 0
    %1486 = vmatprep.subr.bf16.mxu0 0
    %1487 = vmatpush2.bf16.msra.mxu0 0
    %1488 = vmatprep.subr.bf16.mxu0 0
    %1489 = vmatpush2.bf16.msra.mxu0 0
    %1490 = vmatprep.subr.bf16.mxu0 0
    %1491 = vmatpush2.bf16.msra.mxu0 0
    %1492 = vmatprep.subr.bf16.mxu0 0
    %1493 = vmatpush2.bf16.msra.mxu0 0
    %1494 = vmatprep.mubr.bf16.mxu0 0
    %1495 = vmatmul.mubr.bf16.gmra.mxu0 %v1460
    %v1496 = vpop.f32.mrf.mxu0
    %v1497 = vadd.f32 %v1446, %v1496
    %v1498 = vpop.f32.mrf.mxu0
    %v1499 = vpop.f32.mrf.mxu0
    %v1500 = vadd.f32 %v1446, %v1499
    %v1501 = vpop.f32.mrf.mxu0
    %1502 = vdwg.mxu0
    %v1503 = vpack.c.bf16 %v1500, %v1497
    %v1505 = vunpack.c.l.b16 %v1503
    %v1506 = vunpack.c.h.b16 %v1503
    %v1507 = vpack.c.b16 %v1505, %v1505
    %v1508 = vpack.c.b16 %v1506, %v1506
    %1509 = vrot.lane.b32.xlu0 %v1507, 96
    %v1510 = vpop.permute.xlu0 %1509
    %v1512 = vsel %vm217, %v1507, 0
    %v1515 = vsel %vm217, %v1510, 0
    %1517 = vmatprep.subr.bf16.mxu0 0
    %1518 = vmatpush1.bf16.xpose.msra.mxu0 0
    %1519 = vmatprep.subr.bf16.mxu0 0
    %1520 = vmatpush1.bf16.xpose.msra.mxu0 0
    %1521 = vmatprep.subr.bf16.mxu0 0
    %1522 = vmatpush1.bf16.xpose.msra.mxu0 0
    %1523 = vmatprep.subr.bf16.mxu0 0
    %1524 = vmatpush1.bf16.xpose.msra.mxu0 0
    %1525 = vmatprep.subr.bf16.mxu0 0
    %1526 = vmatpush1.bf16.xpose.msra.mxu0 0
    %1527 = vmatprep.subr.bf16.mxu0 0
    %1528 = vmatpush1.bf16.xpose.msra.mxu0 0
    %1529 = vmatprep.subr.bf16.mxu0 0
    %1530 = vmatpush1.bf16.xpose.msra.mxu0 0
    %1531 = vmatprep.subr.bf16.mxu0 0
    %1532 = vmatpush1.bf16.xpose.msra.mxu0 %v1515
    %1533 = vmatprep.subr.bf16.mxu0 0
    %1534 = vmatpush2.bf16.xpose.msra.mxu0 0
    %1535 = vmatprep.subr.bf16.mxu0 0
    %1536 = vmatpush2.bf16.xpose.msra.mxu0 0
    %1537 = vmatprep.subr.bf16.mxu0 0
    %1538 = vmatpush2.bf16.xpose.msra.mxu0 0
    %1539 = vmatprep.subr.bf16.mxu0 0
    %1540 = vmatpush2.bf16.xpose.msra.mxu0 0
    %1541 = vmatprep.subr.bf16.mxu0 0
    %1542 = vmatpush2.bf16.xpose.msra.mxu0 0
    %1543 = vmatprep.subr.bf16.mxu0 0
    %1544 = vmatpush2.bf16.xpose.msra.mxu0 0
    %1545 = vmatprep.subr.bf16.mxu0 0
    %1546 = vmatpush2.bf16.xpose.msra.mxu0 0
    %1547 = vmatprep.subr.bf16.mxu0 0
    %1548 = vmatpush2.bf16.xpose.msra.mxu0 0
    %1549 = vmatprep.mubr.bf16.mxu0 0
    %1550 = vmatmul.mubr.bf16.gmra.mxu0 %v1512
    %v1551 = vpop.f32.mrf.mxu0
    %v1552 = vadd.f32 %v74, %v1551
    %v1553 = vpop.f32.mrf.mxu0
    %v1554 = vpop.f32.mrf.mxu0
    %v1555 = vpop.f32.mrf.mxu0
    %1556 = vdwg.mxu0
    %1557 = vrot.lane.b32.xlu0 %v1508, 96
    %v1558 = vpop.permute.xlu0 %1557
    %v1560 = vsel %vm217, %v1508, 0
    %v1563 = vsel %vm217, %v1558, 0
    %1565 = vmatprep.subr.bf16.mxu0 0
    %1566 = vmatpush1.bf16.xpose.msra.mxu0 0
    %1567 = vmatprep.subr.bf16.mxu0 0
    %1568 = vmatpush1.bf16.xpose.msra.mxu0 0
    %1569 = vmatprep.subr.bf16.mxu0 0
    %1570 = vmatpush1.bf16.xpose.msra.mxu0 0
    %1571 = vmatprep.subr.bf16.mxu0 0
    %1572 = vmatpush1.bf16.xpose.msra.mxu0 0
    %1573 = vmatprep.subr.bf16.mxu0 0
    %1574 = vmatpush1.bf16.xpose.msra.mxu0 0
    %1575 = vmatprep.subr.bf16.mxu0 0
    %1576 = vmatpush1.bf16.xpose.msra.mxu0 0
    %1577 = vmatprep.subr.bf16.mxu0 0
    %1578 = vmatpush1.bf16.xpose.msra.mxu0 0
    %1579 = vmatprep.subr.bf16.mxu0 0
    %1580 = vmatpush1.bf16.xpose.msra.mxu0 %v1563
    %1581 = vmatprep.subr.bf16.mxu0 0
    %1582 = vmatpush2.bf16.xpose.msra.mxu0 0
    %1583 = vmatprep.subr.bf16.mxu0 0
    %1584 = vmatpush2.bf16.xpose.msra.mxu0 0
    %1585 = vmatprep.subr.bf16.mxu0 0
    %1586 = vmatpush2.bf16.xpose.msra.mxu0 0
    %1587 = vmatprep.subr.bf16.mxu0 0
    %1588 = vmatpush2.bf16.xpose.msra.mxu0 0
    %1589 = vmatprep.subr.bf16.mxu0 0
    %1590 = vmatpush2.bf16.xpose.msra.mxu0 0
    %1591 = vmatprep.subr.bf16.mxu0 0
    %1592 = vmatpush2.bf16.xpose.msra.mxu0 0
    %1593 = vmatprep.subr.bf16.mxu0 0
    %1594 = vmatpush2.bf16.xpose.msra.mxu0 0
    %1595 = vmatprep.subr.bf16.mxu0 0
    %1596 = vmatpush2.bf16.xpose.msra.mxu0 0
    %1597 = vmatprep.mubr.bf16.mxu0 0
    %1598 = vmatmul.mubr.bf16.gmra.mxu0 %v1560
    %v1599 = vpop.f32.mrf.mxu0
    %v1600 = vadd.f32 %v75, %v1599
    %v1601 = vpop.f32.mrf.mxu0
    %v1602 = vpop.f32.mrf.mxu0
    %v1603 = vpop.f32.mrf.mxu0
    %1604 = vdwg.mxu0
    %v1605 = vsel %vm217, %v1552, -inf
    %1606 = vmax.xlane.f32.xlu0 %v1605
    %v1607 = vpop.xlane.xlu0 %1606
    %v1608 = vsel %vm217, %v1600, -inf
    %1609 = vmax.xlane.f32.xlu0 %v1608
    %v1610 = vpop.xlane.xlu0 %1609
    %v1611 = vsub.f32 %v1552, %v1607
    %v1612 = vsub.f32 %v1600, %v1610
    %v1613 = vmul.f32 %v1611, 1.442695
    %v1614 = vpow.pop %v1613
    %v1615 = vmul.f32 %v1612, 1.442695
    %v1616 = vpow.pop %v1615
    %v1617 = vsel %vm217, %v1614, 0.0
    %1618 = vadd.xlane.f32.xlu0 %v1617
    %v1619 = vpop.xlane.xlu0 %1618
    %v1620 = vsel %vm217, %v1616, 0.0
    %1621 = vadd.xlane.f32.xlu0 %v1620
    %v1622 = vpop.xlane.xlu0 %1621
    %v1623 = vrcp.pop %v1619
    %v1624 = vmul.f32 %v1614, %v1623
    %v1625 = vrcp.pop %v1622
    %v1626 = vmul.f32 %v1616, %v1625
    %v1627 = vpack.c.bf16 %v1624, %v1624
    %v1628 = vpack.c.bf16 %v1626, %v1626
    %1629 = vrot.lane.b32.xlu0 %v1507, 64
    %v1630 = vpop.permute.xlu0 %1629
    %v1632 = vsel %vm217, %v1627, 0
    %v1635 = vsel %vm341, %v1630, 0
    %1637 = vmatprep.subr.bf16.mxu0 0
    %1638 = vmatpush1.bf16.msra.mxu0 0
    %1639 = vmatprep.subr.bf16.mxu0 0
    %1640 = vmatpush1.bf16.msra.mxu0 0
    %1641 = vmatprep.subr.bf16.mxu0 0
    %1642 = vmatpush1.bf16.msra.mxu0 0
    %1643 = vmatprep.subr.bf16.mxu0 0
    %1644 = vmatpush1.bf16.msra.mxu0 0
    %1645 = vmatprep.subr.bf16.mxu0 0
    %1646 = vmatpush1.bf16.msra.mxu0 0
    %1647 = vmatprep.subr.bf16.mxu0 0
    %1648 = vmatpush1.bf16.msra.mxu0 0
    %1649 = vmatprep.subr.bf16.mxu0 0
    %1650 = vmatpush1.bf16.msra.mxu0 0
    %1651 = vmatprep.subr.bf16.mxu0 0
    %1652 = vmatpush1.bf16.msra.mxu0 %v1635
    %1653 = vmatprep.subr.bf16.mxu0 0
    %1654 = vmatpush2.bf16.msra.mxu0 0
    %1655 = vmatprep.subr.bf16.mxu0 0
    %1656 = vmatpush2.bf16.msra.mxu0 0
    %1657 = vmatprep.subr.bf16.mxu0 0
    %1658 = vmatpush2.bf16.msra.mxu0 0
    %1659 = vmatprep.subr.bf16.mxu0 0
    %1660 = vmatpush2.bf16.msra.mxu0 0
    %1661 = vmatprep.subr.bf16.mxu0 0
    %1662 = vmatpush2.bf16.msra.mxu0 0
    %1663 = vmatprep.subr.bf16.mxu0 0
    %1664 = vmatpush2.bf16.msra.mxu0 0
    %1665 = vmatprep.subr.bf16.mxu0 0
    %1666 = vmatpush2.bf16.msra.mxu0 0
    %1667 = vmatprep.subr.bf16.mxu0 0
    %1668 = vmatpush2.bf16.msra.mxu0 0
    %1669 = vmatprep.mubr.bf16.mxu0 0
    %1670 = vmatmul.mubr.bf16.gmra.mxu0 %v1632
    %v1671 = vpop.f32.mrf.mxu0
    %v1672 = vadd.f32 0.0, %v1671
    %v1673 = vpop.f32.mrf.mxu0
    %v1674 = vpop.f32.mrf.mxu0
    %v1675 = vpop.f32.mrf.mxu0
    %1676 = vdwg.mxu0
    %1677 = vrot.lane.b32.xlu0 %v1508, 64
    %v1678 = vpop.permute.xlu0 %1677
    %v1680 = vsel %vm217, %v1628, 0
    %v1683 = vsel %vm341, %v1678, 0
    %1685 = vmatprep.subr.bf16.mxu0 0
    %1686 = vmatpush1.bf16.msra.mxu0 0
    %1687 = vmatprep.subr.bf16.mxu0 0
    %1688 = vmatpush1.bf16.msra.mxu0 0
    %1689 = vmatprep.subr.bf16.mxu0 0
    %1690 = vmatpush1.bf16.msra.mxu0 0
    %1691 = vmatprep.subr.bf16.mxu0 0
    %1692 = vmatpush1.bf16.msra.mxu0 0
    %1693 = vmatprep.subr.bf16.mxu0 0
    %1694 = vmatpush1.bf16.msra.mxu0 0
    %1695 = vmatprep.subr.bf16.mxu0 0
    %1696 = vmatpush1.bf16.msra.mxu0 0
    %1697 = vmatprep.subr.bf16.mxu0 0
    %1698 = vmatpush1.bf16.msra.mxu0 0
    %1699 = vmatprep.subr.bf16.mxu0 0
    %1700 = vmatpush1.bf16.msra.mxu0 %v1683
    %1701 = vmatprep.subr.bf16.mxu0 0
    %1702 = vmatpush2.bf16.msra.mxu0 0
    %1703 = vmatprep.subr.bf16.mxu0 0
    %1704 = vmatpush2.bf16.msra.mxu0 0
    %1705 = vmatprep.subr.bf16.mxu0 0
    %1706 = vmatpush2.bf16.msra.mxu0 0
    %1707 = vmatprep.subr.bf16.mxu0 0
    %1708 = vmatpush2.bf16.msra.mxu0 0
    %1709 = vmatprep.subr.bf16.mxu0 0
    %1710 = vmatpush2.bf16.msra.mxu0 0
    %1711 = vmatprep.subr.bf16.mxu0 0
    %1712 = vmatpush2.bf16.msra.mxu0 0
    %1713 = vmatprep.subr.bf16.mxu0 0
    %1714 = vmatpush2.bf16.msra.mxu0 0
    %1715 = vmatprep.subr.bf16.mxu0 0
    %1716 = vmatpush2.bf16.msra.mxu0 0
    %1717 = vmatprep.mubr.bf16.mxu0 0
    %1718 = vmatmul.mubr.bf16.gmra.mxu0 %v1680
    %v1719 = vpop.f32.mrf.mxu0
    %v1720 = vadd.f32 0.0, %v1719
    %v1721 = vpop.f32.mrf.mxu0
    %v1722 = vpop.f32.mrf.mxu0
    %v1723 = vpop.f32.mrf.mxu0
    %1724 = vdwg.mxu0
    %1725 = vrot.lane.b32.xlu0 %v1507, 120
    %v1726 = vpop.permute.xlu0 %1725
    %1727 = vrot.lane.b32.xlu0 %v1507, 88
    %v1728 = vpop.permute.xlu0 %1727
    %v1730 = vsel %vm217, %v1726, 0
    %v1733 = vsel %vm217, %v1728, 0
    %1735 = vmatprep.subr.bf16.mxu0 0
    %1736 = vmatpush1.bf16.xpose.msra.mxu0 0
    %1737 = vmatprep.subr.bf16.mxu0 0
    %1738 = vmatpush1.bf16.xpose.msra.mxu0 0
    %1739 = vmatprep.subr.bf16.mxu0 0
    %1740 = vmatpush1.bf16.xpose.msra.mxu0 0
    %1741 = vmatprep.subr.bf16.mxu0 0
    %1742 = vmatpush1.bf16.xpose.msra.mxu0 0
    %1743 = vmatprep.subr.bf16.mxu0 0
    %1744 = vmatpush1.bf16.xpose.msra.mxu0 0
    %1745 = vmatprep.subr.bf16.mxu0 0
    %1746 = vmatpush1.bf16.xpose.msra.mxu0 0
    %1747 = vmatprep.subr.bf16.mxu0 0
    %1748 = vmatpush1.bf16.xpose.msra.mxu0 0
    %1749 = vmatprep.subr.bf16.mxu0 0
    %1750 = vmatpush1.bf16.xpose.msra.mxu0 %v1733
    %1751 = vmatprep.subr.bf16.mxu0 0
    %1752 = vmatpush2.bf16.xpose.msra.mxu0 0
    %1753 = vmatprep.subr.bf16.mxu0 0
    %1754 = vmatpush2.bf16.xpose.msra.mxu0 0
    %1755 = vmatprep.subr.bf16.mxu0 0
    %1756 = vmatpush2.bf16.xpose.msra.mxu0 0
    %1757 = vmatprep.subr.bf16.mxu0 0
    %1758 = vmatpush2.bf16.xpose.msra.mxu0 0
    %1759 = vmatprep.subr.bf16.mxu0 0
    %1760 = vmatpush2.bf16.xpose.msra.mxu0 0
    %1761 = vmatprep.subr.bf16.mxu0 0
    %1762 = vmatpush2.bf16.xpose.msra.mxu0 0
    %1763 = vmatprep.subr.bf16.mxu0 0
    %1764 = vmatpush2.bf16.xpose.msra.mxu0 0
    %1765 = vmatprep.subr.bf16.mxu0 0
    %1766 = vmatpush2.bf16.xpose.msra.mxu0 0
    %1767 = vmatprep.mubr.bf16.mxu0 0
    %1768 = vmatmul.mubr.bf16.gmra.mxu0 %v1730
    %v1769 = vpop.f32.mrf.mxu0
    %v1770 = vadd.f32 %v74, %v1769
    %v1771 = vpop.f32.mrf.mxu0
    %v1772 = vpop.f32.mrf.mxu0
    %v1773 = vpop.f32.mrf.mxu0
    %1774 = vdwg.mxu0
    %1775 = vrot.lane.b32.xlu0 %v1508, 120
    %v1776 = vpop.permute.xlu0 %1775
    %1777 = vrot.lane.b32.xlu0 %v1508, 88
    %v1778 = vpop.permute.xlu0 %1777
    %v1780 = vsel %vm217, %v1776, 0
    %v1783 = vsel %vm217, %v1778, 0
    %1785 = vmatprep.subr.bf16.mxu0 0
    %1786 = vmatpush1.bf16.xpose.msra.mxu0 0
    %1787 = vmatprep.subr.bf16.mxu0 0
    %1788 = vmatpush1.bf16.xpose.msra.mxu0 0
    %1789 = vmatprep.subr.bf16.mxu0 0
    %1790 = vmatpush1.bf16.xpose.msra.mxu0 0
    %1791 = vmatprep.subr.bf16.mxu0 0
    %1792 = vmatpush1.bf16.xpose.msra.mxu0 0
    %1793 = vmatprep.subr.bf16.mxu0 0
    %1794 = vmatpush1.bf16.xpose.msra.mxu0 0
    %1795 = vmatprep.subr.bf16.mxu0 0
    %1796 = vmatpush1.bf16.xpose.msra.mxu0 0
    %1797 = vmatprep.subr.bf16.mxu0 0
    %1798 = vmatpush1.bf16.xpose.msra.mxu0 0
    %1799 = vmatprep.subr.bf16.mxu0 0
    %1800 = vmatpush1.bf16.xpose.msra.mxu0 %v1783
    %1801 = vmatprep.subr.bf16.mxu0 0
    %1802 = vmatpush2.bf16.xpose.msra.mxu0 0
    %1803 = vmatprep.subr.bf16.mxu0 0
    %1804 = vmatpush2.bf16.xpose.msra.mxu0 0
    %1805 = vmatprep.subr.bf16.mxu0 0
    %1806 = vmatpush2.bf16.xpose.msra.mxu0 0
    %1807 = vmatprep.subr.bf16.mxu0 0
    %1808 = vmatpush2.bf16.xpose.msra.mxu0 0
    %1809 = vmatprep.subr.bf16.mxu0 0
    %1810 = vmatpush2.bf16.xpose.msra.mxu0 0
    %1811 = vmatprep.subr.bf16.mxu0 0
    %1812 = vmatpush2.bf16.xpose.msra.mxu0 0
    %1813 = vmatprep.subr.bf16.mxu0 0
    %1814 = vmatpush2.bf16.xpose.msra.mxu0 0
    %1815 = vmatprep.subr.bf16.mxu0 0
    %1816 = vmatpush2.bf16.xpose.msra.mxu0 0
    %1817 = vmatprep.mubr.bf16.mxu0 0
    %1818 = vmatmul.mubr.bf16.gmra.mxu0 %v1780
    %v1819 = vpop.f32.mrf.mxu0
    %v1820 = vadd.f32 %v75, %v1819
    %v1821 = vpop.f32.mrf.mxu0
    %v1822 = vpop.f32.mrf.mxu0
    %v1823 = vpop.f32.mrf.mxu0
    %1824 = vdwg.mxu0
    %v1825 = vsel %vm217, %v1770, -inf
    %1826 = vmax.xlane.f32.xlu0 %v1825
    %v1827 = vpop.xlane.xlu0 %1826
    %v1828 = vsel %vm217, %v1820, -inf
    %1829 = vmax.xlane.f32.xlu0 %v1828
    %v1830 = vpop.xlane.xlu0 %1829
    %v1831 = vsub.f32 %v1770, %v1827
    %v1832 = vsub.f32 %v1820, %v1830
    %v1833 = vmul.f32 %v1831, 1.442695
    %v1834 = vpow.pop %v1833
    %v1835 = vmul.f32 %v1832, 1.442695
    %v1836 = vpow.pop %v1835
    %v1837 = vsel %vm217, %v1834, 0.0
    %1838 = vadd.xlane.f32.xlu0 %v1837
    %v1839 = vpop.xlane.xlu0 %1838
    %v1840 = vsel %vm217, %v1836, 0.0
    %1841 = vadd.xlane.f32.xlu0 %v1840
    %v1842 = vpop.xlane.xlu0 %1841
    %v1843 = vrcp.pop %v1839
    %v1844 = vmul.f32 %v1834, %v1843
    %v1845 = vrcp.pop %v1842
    %v1846 = vmul.f32 %v1836, %v1845
    %v1847 = vpack.c.bf16 %v1844, %v1844
    %v1848 = vpack.c.bf16 %v1846, %v1846
    %1849 = vrot.lane.b32.xlu0 %v1507, 56
    %v1850 = vpop.permute.xlu0 %1849
    %v1852 = vsel %vm217, %v1847, 0
    %v1855 = vsel %vm341, %v1850, 0
    %1857 = vmatprep.subr.bf16.mxu0 0
    %1858 = vmatpush1.bf16.msra.mxu0 0
    %1859 = vmatprep.subr.bf16.mxu0 0
    %1860 = vmatpush1.bf16.msra.mxu0 0
    %1861 = vmatprep.subr.bf16.mxu0 0
    %1862 = vmatpush1.bf16.msra.mxu0 0
    %1863 = vmatprep.subr.bf16.mxu0 0
    %1864 = vmatpush1.bf16.msra.mxu0 0
    %1865 = vmatprep.subr.bf16.mxu0 0
    %1866 = vmatpush1.bf16.msra.mxu0 0
    %1867 = vmatprep.subr.bf16.mxu0 0
    %1868 = vmatpush1.bf16.msra.mxu0 0
    %1869 = vmatprep.subr.bf16.mxu0 0
    %1870 = vmatpush1.bf16.msra.mxu0 0
    %1871 = vmatprep.subr.bf16.mxu0 0
    %1872 = vmatpush1.bf16.msra.mxu0 %v1855
    %1873 = vmatprep.subr.bf16.mxu0 0
    %1874 = vmatpush2.bf16.msra.mxu0 0
    %1875 = vmatprep.subr.bf16.mxu0 0
    %1876 = vmatpush2.bf16.msra.mxu0 0
    %1877 = vmatprep.subr.bf16.mxu0 0
    %1878 = vmatpush2.bf16.msra.mxu0 0
    %1879 = vmatprep.subr.bf16.mxu0 0
    %1880 = vmatpush2.bf16.msra.mxu0 0
    %1881 = vmatprep.subr.bf16.mxu0 0
    %1882 = vmatpush2.bf16.msra.mxu0 0
    %1883 = vmatprep.subr.bf16.mxu0 0
    %1884 = vmatpush2.bf16.msra.mxu0 0
    %1885 = vmatprep.subr.bf16.mxu0 0
    %1886 = vmatpush2.bf16.msra.mxu0 0
    %1887 = vmatprep.subr.bf16.mxu0 0
    %1888 = vmatpush2.bf16.msra.mxu0 0
    %1889 = vmatprep.mubr.bf16.mxu0 0
    %1890 = vmatmul.mubr.bf16.gmra.mxu0 %v1852
    %v1891 = vpop.f32.mrf.mxu0
    %v1892 = vadd.f32 0.0, %v1891
    %v1893 = vpop.f32.mrf.mxu0
    %v1894 = vpop.f32.mrf.mxu0
    %v1895 = vpop.f32.mrf.mxu0
    %1896 = vdwg.mxu0
    %1897 = vrot.lane.b32.xlu0 %v1508, 56
    %v1898 = vpop.permute.xlu0 %1897
    %v1900 = vsel %vm217, %v1848, 0
    %v1903 = vsel %vm341, %v1898, 0
    %1905 = vmatprep.subr.bf16.mxu0 0
    %1906 = vmatpush1.bf16.msra.mxu0 0
    %1907 = vmatprep.subr.bf16.mxu0 0
    %1908 = vmatpush1.bf16.msra.mxu0 0
    %1909 = vmatprep.subr.bf16.mxu0 0
    %1910 = vmatpush1.bf16.msra.mxu0 0
    %1911 = vmatprep.subr.bf16.mxu0 0
    %1912 = vmatpush1.bf16.msra.mxu0 0
    %1913 = vmatprep.subr.bf16.mxu0 0
    %1914 = vmatpush1.bf16.msra.mxu0 0
    %1915 = vmatprep.subr.bf16.mxu0 0
    %1916 = vmatpush1.bf16.msra.mxu0 0
    %1917 = vmatprep.subr.bf16.mxu0 0
    %1918 = vmatpush1.bf16.msra.mxu0 0
    %1919 = vmatprep.subr.bf16.mxu0 0
    %1920 = vmatpush1.bf16.msra.mxu0 %v1903
    %1921 = vmatprep.subr.bf16.mxu0 0
    %1922 = vmatpush2.bf16.msra.mxu0 0
    %1923 = vmatprep.subr.bf16.mxu0 0
    %1924 = vmatpush2.bf16.msra.mxu0 0
    %1925 = vmatprep.subr.bf16.mxu0 0
    %1926 = vmatpush2.bf16.msra.mxu0 0
    %1927 = vmatprep.subr.bf16.mxu0 0
    %1928 = vmatpush2.bf16.msra.mxu0 0
    %1929 = vmatprep.subr.bf16.mxu0 0
    %1930 = vmatpush2.bf16.msra.mxu0 0
    %1931 = vmatprep.subr.bf16.mxu0 0
    %1932 = vmatpush2.bf16.msra.mxu0 0
    %1933 = vmatprep.subr.bf16.mxu0 0
    %1934 = vmatpush2.bf16.msra.mxu0 0
    %1935 = vmatprep.subr.bf16.mxu0 0
    %1936 = vmatpush2.bf16.msra.mxu0 0
    %1937 = vmatprep.mubr.bf16.mxu0 0
    %1938 = vmatmul.mubr.bf16.gmra.mxu0 %v1900
    %v1939 = vpop.f32.mrf.mxu0
    %v1940 = vadd.f32 0.0, %v1939
    %v1941 = vpop.f32.mrf.mxu0
    %v1942 = vpop.f32.mrf.mxu0
    %v1943 = vpop.f32.mrf.mxu0
    %1944 = vdwg.mxu0
    %1945 = vrot.lane.b32.xlu0 %v1507, 112
    %v1946 = vpop.permute.xlu0 %1945
    %1947 = vrot.lane.b32.xlu0 %v1507, 80
    %v1948 = vpop.permute.xlu0 %1947
    %v1950 = vsel %vm217, %v1946, 0
    %v1953 = vsel %vm217, %v1948, 0
    %1955 = vmatprep.subr.bf16.mxu0 0
    %1956 = vmatpush1.bf16.xpose.msra.mxu0 0
    %1957 = vmatprep.subr.bf16.mxu0 0
    %1958 = vmatpush1.bf16.xpose.msra.mxu0 0
    %1959 = vmatprep.subr.bf16.mxu0 0
    %1960 = vmatpush1.bf16.xpose.msra.mxu0 0
    %1961 = vmatprep.subr.bf16.mxu0 0
    %1962 = vmatpush1.bf16.xpose.msra.mxu0 0
    %1963 = vmatprep.subr.bf16.mxu0 0
    %1964 = vmatpush1.bf16.xpose.msra.mxu0 0
    %1965 = vmatprep.subr.bf16.mxu0 0
    %1966 = vmatpush1.bf16.xpose.msra.mxu0 0
    %1967 = vmatprep.subr.bf16.mxu0 0
    %1968 = vmatpush1.bf16.xpose.msra.mxu0 0
    %1969 = vmatprep.subr.bf16.mxu0 0
    %1970 = vmatpush1.bf16.xpose.msra.mxu0 %v1953
    %1971 = vmatprep.subr.bf16.mxu0 0
    %1972 = vmatpush2.bf16.xpose.msra.mxu0 0
    %1973 = vmatprep.subr.bf16.mxu0 0
    %1974 = vmatpush2.bf16.xpose.msra.mxu0 0
    %1975 = vmatprep.subr.bf16.mxu0 0
    %1976 = vmatpush2.bf16.xpose.msra.mxu0 0
    %1977 = vmatprep.subr.bf16.mxu0 0
    %1978 = vmatpush2.bf16.xpose.msra.mxu0 0
    %1979 = vmatprep.subr.bf16.mxu0 0
    %1980 = vmatpush2.bf16.xpose.msra.mxu0 0
    %1981 = vmatprep.subr.bf16.mxu0 0
    %1982 = vmatpush2.bf16.xpose.msra.mxu0 0
    %1983 = vmatprep.subr.bf16.mxu0 0
    %1984 = vmatpush2.bf16.xpose.msra.mxu0 0
    %1985 = vmatprep.subr.bf16.mxu0 0
    %1986 = vmatpush2.bf16.xpose.msra.mxu0 0
    %1987 = vmatprep.mubr.bf16.mxu0 0
    %1988 = vmatmul.mubr.bf16.gmra.mxu0 %v1950
    %v1989 = vpop.f32.mrf.mxu0
    %v1990 = vadd.f32 %v74, %v1989
    %v1991 = vpop.f32.mrf.mxu0
    %v1992 = vpop.f32.mrf.mxu0
    %v1993 = vpop.f32.mrf.mxu0
    %1994 = vdwg.mxu0
    %1995 = vrot.lane.b32.xlu0 %v1508, 112
    %v1996 = vpop.permute.xlu0 %1995
    %1997 = vrot.lane.b32.xlu0 %v1508, 80
    %v1998 = vpop.permute.xlu0 %1997
    %v2000 = vsel %vm217, %v1996, 0
    %v2003 = vsel %vm217, %v1998, 0
    %2005 = vmatprep.subr.bf16.mxu0 0
    %2006 = vmatpush1.bf16.xpose.msra.mxu0 0
    %2007 = vmatprep.subr.bf16.mxu0 0
    %2008 = vmatpush1.bf16.xpose.msra.mxu0 0
    %2009 = vmatprep.subr.bf16.mxu0 0
    %2010 = vmatpush1.bf16.xpose.msra.mxu0 0
    %2011 = vmatprep.subr.bf16.mxu0 0
    %2012 = vmatpush1.bf16.xpose.msra.mxu0 0
    %2013 = vmatprep.subr.bf16.mxu0 0
    %2014 = vmatpush1.bf16.xpose.msra.mxu0 0
    %2015 = vmatprep.subr.bf16.mxu0 0
    %2016 = vmatpush1.bf16.xpose.msra.mxu0 0
    %2017 = vmatprep.subr.bf16.mxu0 0
    %2018 = vmatpush1.bf16.xpose.msra.mxu0 0
    %2019 = vmatprep.subr.bf16.mxu0 0
    %2020 = vmatpush1.bf16.xpose.msra.mxu0 %v2003
    %2021 = vmatprep.subr.bf16.mxu0 0
    %2022 = vmatpush2.bf16.xpose.msra.mxu0 0
    %2023 = vmatprep.subr.bf16.mxu0 0
    %2024 = vmatpush2.bf16.xpose.msra.mxu0 0
    %2025 = vmatprep.subr.bf16.mxu0 0
    %2026 = vmatpush2.bf16.xpose.msra.mxu0 0
    %2027 = vmatprep.subr.bf16.mxu0 0
    %2028 = vmatpush2.bf16.xpose.msra.mxu0 0
    %2029 = vmatprep.subr.bf16.mxu0 0
    %2030 = vmatpush2.bf16.xpose.msra.mxu0 0
    %2031 = vmatprep.subr.bf16.mxu0 0
    %2032 = vmatpush2.bf16.xpose.msra.mxu0 0
    %2033 = vmatprep.subr.bf16.mxu0 0
    %2034 = vmatpush2.bf16.xpose.msra.mxu0 0
    %2035 = vmatprep.subr.bf16.mxu0 0
    %2036 = vmatpush2.bf16.xpose.msra.mxu0 0
    %2037 = vmatprep.mubr.bf16.mxu0 0
    %2038 = vmatmul.mubr.bf16.gmra.mxu0 %v2000
    %v2039 = vpop.f32.mrf.mxu0
    %v2040 = vadd.f32 %v75, %v2039
    %v2041 = vpop.f32.mrf.mxu0
    %v2042 = vpop.f32.mrf.mxu0
    %v2043 = vpop.f32.mrf.mxu0
    %2044 = vdwg.mxu0
    %v2045 = vsel %vm217, %v1990, -inf
    %2046 = vmax.xlane.f32.xlu0 %v2045
    %v2047 = vpop.xlane.xlu0 %2046
    %v2048 = vsel %vm217, %v2040, -inf
    %2049 = vmax.xlane.f32.xlu0 %v2048
    %v2050 = vpop.xlane.xlu0 %2049
    %v2051 = vsub.f32 %v1990, %v2047
    %v2052 = vsub.f32 %v2040, %v2050
    %v2053 = vmul.f32 %v2051, 1.442695
    %v2054 = vpow.pop %v2053
    %v2055 = vmul.f32 %v2052, 1.442695
    %v2056 = vpow.pop %v2055
    %v2057 = vsel %vm217, %v2054, 0.0
    %2058 = vadd.xlane.f32.xlu0 %v2057
    %v2059 = vpop.xlane.xlu0 %2058
    %v2060 = vsel %vm217, %v2056, 0.0
    %2061 = vadd.xlane.f32.xlu0 %v2060
    %v2062 = vpop.xlane.xlu0 %2061
    %v2063 = vrcp.pop %v2059
    %v2064 = vmul.f32 %v2054, %v2063
    %v2065 = vrcp.pop %v2062
    %v2066 = vmul.f32 %v2056, %v2065
    %v2067 = vpack.c.bf16 %v2064, %v2064
    %v2068 = vpack.c.bf16 %v2066, %v2066
    %2069 = vrot.lane.b32.xlu0 %v1507, 48
    %v2070 = vpop.permute.xlu0 %2069
    %v2072 = vsel %vm217, %v2067, 0
    %v2075 = vsel %vm341, %v2070, 0
    %2077 = vmatprep.subr.bf16.mxu0 0
    %2078 = vmatpush1.bf16.msra.mxu0 0
    %2079 = vmatprep.subr.bf16.mxu0 0
    %2080 = vmatpush1.bf16.msra.mxu0 0
    %2081 = vmatprep.subr.bf16.mxu0 0
    %2082 = vmatpush1.bf16.msra.mxu0 0
    %2083 = vmatprep.subr.bf16.mxu0 0
    %2084 = vmatpush1.bf16.msra.mxu0 0
    %2085 = vmatprep.subr.bf16.mxu0 0
    %2086 = vmatpush1.bf16.msra.mxu0 0
    %2087 = vmatprep.subr.bf16.mxu0 0
    %2088 = vmatpush1.bf16.msra.mxu0 0
    %2089 = vmatprep.subr.bf16.mxu0 0
    %2090 = vmatpush1.bf16.msra.mxu0 0
    %2091 = vmatprep.subr.bf16.mxu0 0
    %2092 = vmatpush1.bf16.msra.mxu0 %v2075
    %2093 = vmatprep.subr.bf16.mxu0 0
    %2094 = vmatpush2.bf16.msra.mxu0 0
    %2095 = vmatprep.subr.bf16.mxu0 0
    %2096 = vmatpush2.bf16.msra.mxu0 0
    %2097 = vmatprep.subr.bf16.mxu0 0
    %2098 = vmatpush2.bf16.msra.mxu0 0
    %2099 = vmatprep.subr.bf16.mxu0 0
    %2100 = vmatpush2.bf16.msra.mxu0 0
    %2101 = vmatprep.subr.bf16.mxu0 0
    %2102 = vmatpush2.bf16.msra.mxu0 0
    %2103 = vmatprep.subr.bf16.mxu0 0
    %2104 = vmatpush2.bf16.msra.mxu0 0
    %2105 = vmatprep.subr.bf16.mxu0 0
    %2106 = vmatpush2.bf16.msra.mxu0 0
    %2107 = vmatprep.subr.bf16.mxu0 0
    %2108 = vmatpush2.bf16.msra.mxu0 0
    %2109 = vmatprep.mubr.bf16.mxu0 0
    %2110 = vmatmul.mubr.bf16.gmra.mxu0 %v2072
    %v2111 = vpop.f32.mrf.mxu0
    %v2112 = vadd.f32 0.0, %v2111
    %v2113 = vpop.f32.mrf.mxu0
    %v2114 = vpop.f32.mrf.mxu0
    %v2115 = vpop.f32.mrf.mxu0
    %2116 = vdwg.mxu0
    %2117 = vrot.lane.b32.xlu0 %v1508, 48
    %v2118 = vpop.permute.xlu0 %2117
    %v2120 = vsel %vm217, %v2068, 0
    %v2123 = vsel %vm341, %v2118, 0
    %2125 = vmatprep.subr.bf16.mxu0 0
    %2126 = vmatpush1.bf16.msra.mxu0 0
    %2127 = vmatprep.subr.bf16.mxu0 0
    %2128 = vmatpush1.bf16.msra.mxu0 0
    %2129 = vmatprep.subr.bf16.mxu0 0
    %2130 = vmatpush1.bf16.msra.mxu0 0
    %2131 = vmatprep.subr.bf16.mxu0 0
    %2132 = vmatpush1.bf16.msra.mxu0 0
    %2133 = vmatprep.subr.bf16.mxu0 0
    %2134 = vmatpush1.bf16.msra.mxu0 0
    %2135 = vmatprep.subr.bf16.mxu0 0
    %2136 = vmatpush1.bf16.msra.mxu0 0
    %2137 = vmatprep.subr.bf16.mxu0 0
    %2138 = vmatpush1.bf16.msra.mxu0 0
    %2139 = vmatprep.subr.bf16.mxu0 0
    %2140 = vmatpush1.bf16.msra.mxu0 %v2123
    %2141 = vmatprep.subr.bf16.mxu0 0
    %2142 = vmatpush2.bf16.msra.mxu0 0
    %2143 = vmatprep.subr.bf16.mxu0 0
    %2144 = vmatpush2.bf16.msra.mxu0 0
    %2145 = vmatprep.subr.bf16.mxu0 0
    %2146 = vmatpush2.bf16.msra.mxu0 0
    %2147 = vmatprep.subr.bf16.mxu0 0
    %2148 = vmatpush2.bf16.msra.mxu0 0
    %2149 = vmatprep.subr.bf16.mxu0 0
    %2150 = vmatpush2.bf16.msra.mxu0 0
    %2151 = vmatprep.subr.bf16.mxu0 0
    %2152 = vmatpush2.bf16.msra.mxu0 0
    %2153 = vmatprep.subr.bf16.mxu0 0
    %2154 = vmatpush2.bf16.msra.mxu0 0
    %2155 = vmatprep.subr.bf16.mxu0 0
    %2156 = vmatpush2.bf16.msra.mxu0 0
    %2157 = vmatprep.mubr.bf16.mxu0 0
    %2158 = vmatmul.mubr.bf16.gmra.mxu0 %v2120
    %v2159 = vpop.f32.mrf.mxu0
    %v2160 = vadd.f32 0.0, %v2159
    %v2161 = vpop.f32.mrf.mxu0
    %v2162 = vpop.f32.mrf.mxu0
    %v2163 = vpop.f32.mrf.mxu0
    %2164 = vdwg.mxu0
    %2165 = vrot.lane.b32.xlu0 %v1507, 104
    %v2166 = vpop.permute.xlu0 %2165
    %2167 = vrot.lane.b32.xlu0 %v1507, 72
    %v2168 = vpop.permute.xlu0 %2167
    %v2170 = vsel %vm217, %v2166, 0
    %v2173 = vsel %vm217, %v2168, 0
    %2175 = vmatprep.subr.bf16.mxu0 0
    %2176 = vmatpush1.bf16.xpose.msra.mxu0 0
    %2177 = vmatprep.subr.bf16.mxu0 0
    %2178 = vmatpush1.bf16.xpose.msra.mxu0 0
    %2179 = vmatprep.subr.bf16.mxu0 0
    %2180 = vmatpush1.bf16.xpose.msra.mxu0 0
    %2181 = vmatprep.subr.bf16.mxu0 0
    %2182 = vmatpush1.bf16.xpose.msra.mxu0 0
    %2183 = vmatprep.subr.bf16.mxu0 0
    %2184 = vmatpush1.bf16.xpose.msra.mxu0 0
    %2185 = vmatprep.subr.bf16.mxu0 0
    %2186 = vmatpush1.bf16.xpose.msra.mxu0 0
    %2187 = vmatprep.subr.bf16.mxu0 0
    %2188 = vmatpush1.bf16.xpose.msra.mxu0 0
    %2189 = vmatprep.subr.bf16.mxu0 0
    %2190 = vmatpush1.bf16.xpose.msra.mxu0 %v2173
    %2191 = vmatprep.subr.bf16.mxu0 0
    %2192 = vmatpush2.bf16.xpose.msra.mxu0 0
    %2193 = vmatprep.subr.bf16.mxu0 0
    %2194 = vmatpush2.bf16.xpose.msra.mxu0 0
    %2195 = vmatprep.subr.bf16.mxu0 0
    %2196 = vmatpush2.bf16.xpose.msra.mxu0 0
    %2197 = vmatprep.subr.bf16.mxu0 0
    %2198 = vmatpush2.bf16.xpose.msra.mxu0 0
    %2199 = vmatprep.subr.bf16.mxu0 0
    %2200 = vmatpush2.bf16.xpose.msra.mxu0 0
    %2201 = vmatprep.subr.bf16.mxu0 0
    %2202 = vmatpush2.bf16.xpose.msra.mxu0 0
    %2203 = vmatprep.subr.bf16.mxu0 0
    %2204 = vmatpush2.bf16.xpose.msra.mxu0 0
    %2205 = vmatprep.subr.bf16.mxu0 0
    %2206 = vmatpush2.bf16.xpose.msra.mxu0 0
    %2207 = vmatprep.mubr.bf16.mxu0 0
    %2208 = vmatmul.mubr.bf16.gmra.mxu0 %v2170
    %v2209 = vpop.f32.mrf.mxu0
    %v2210 = vadd.f32 %v74, %v2209
    %v2211 = vpop.f32.mrf.mxu0
    %v2212 = vpop.f32.mrf.mxu0
    %v2213 = vpop.f32.mrf.mxu0
    %2214 = vdwg.mxu0
    %2215 = vrot.lane.b32.xlu0 %v1508, 104
    %v2216 = vpop.permute.xlu0 %2215
    %2217 = vrot.lane.b32.xlu0 %v1508, 72
    %v2218 = vpop.permute.xlu0 %2217
    %v2220 = vsel %vm217, %v2216, 0
    %v2223 = vsel %vm217, %v2218, 0
    %2225 = vmatprep.subr.bf16.mxu0 0
    %2226 = vmatpush1.bf16.xpose.msra.mxu0 0
    %2227 = vmatprep.subr.bf16.mxu0 0
    %2228 = vmatpush1.bf16.xpose.msra.mxu0 0
    %2229 = vmatprep.subr.bf16.mxu0 0
    %2230 = vmatpush1.bf16.xpose.msra.mxu0 0
    %2231 = vmatprep.subr.bf16.mxu0 0
    %2232 = vmatpush1.bf16.xpose.msra.mxu0 0
    %2233 = vmatprep.subr.bf16.mxu0 0
    %2234 = vmatpush1.bf16.xpose.msra.mxu0 0
    %2235 = vmatprep.subr.bf16.mxu0 0
    %2236 = vmatpush1.bf16.xpose.msra.mxu0 0
    %2237 = vmatprep.subr.bf16.mxu0 0
    %2238 = vmatpush1.bf16.xpose.msra.mxu0 0
    %2239 = vmatprep.subr.bf16.mxu0 0
    %2240 = vmatpush1.bf16.xpose.msra.mxu0 %v2223
    %2241 = vmatprep.subr.bf16.mxu0 0
    %2242 = vmatpush2.bf16.xpose.msra.mxu0 0
    %2243 = vmatprep.subr.bf16.mxu0 0
    %2244 = vmatpush2.bf16.xpose.msra.mxu0 0
    %2245 = vmatprep.subr.bf16.mxu0 0
    %2246 = vmatpush2.bf16.xpose.msra.mxu0 0
    %2247 = vmatprep.subr.bf16.mxu0 0
    %2248 = vmatpush2.bf16.xpose.msra.mxu0 0
    %2249 = vmatprep.subr.bf16.mxu0 0
    %2250 = vmatpush2.bf16.xpose.msra.mxu0 0
    %2251 = vmatprep.subr.bf16.mxu0 0
    %2252 = vmatpush2.bf16.xpose.msra.mxu0 0
    %2253 = vmatprep.subr.bf16.mxu0 0
    %2254 = vmatpush2.bf16.xpose.msra.mxu0 0
    %2255 = vmatprep.subr.bf16.mxu0 0
    %2256 = vmatpush2.bf16.xpose.msra.mxu0 0
    %2257 = vmatprep.mubr.bf16.mxu0 0
    %2258 = vmatmul.mubr.bf16.gmra.mxu0 %v2220
    %v2259 = vpop.f32.mrf.mxu0
    %v2260 = vadd.f32 %v75, %v2259
    %v2261 = vpop.f32.mrf.mxu0
    %v2262 = vpop.f32.mrf.mxu0
    %v2263 = vpop.f32.mrf.mxu0
    %2264 = vdwg.mxu0
    %v2265 = vsel %vm217, %v2210, -inf
    %2266 = vmax.xlane.f32.xlu0 %v2265
    %v2267 = vpop.xlane.xlu0 %2266
    %v2268 = vsel %vm217, %v2260, -inf
    %2269 = vmax.xlane.f32.xlu0 %v2268
    %v2270 = vpop.xlane.xlu0 %2269
    %v2271 = vsub.f32 %v2210, %v2267
    %v2272 = vsub.f32 %v2260, %v2270
    %v2273 = vmul.f32 %v2271, 1.442695
    %v2274 = vpow.pop %v2273
    %v2275 = vmul.f32 %v2272, 1.442695
    %v2276 = vpow.pop %v2275
    %v2277 = vsel %vm217, %v2274, 0.0
    %2278 = vadd.xlane.f32.xlu0 %v2277
    %v2279 = vpop.xlane.xlu0 %2278
    %v2280 = vsel %vm217, %v2276, 0.0
    %2281 = vadd.xlane.f32.xlu0 %v2280
    %v2282 = vpop.xlane.xlu0 %2281
    %v2283 = vrcp.pop %v2279
    %v2284 = vmul.f32 %v2274, %v2283
    %v2285 = vrcp.pop %v2282
    %v2286 = vmul.f32 %v2276, %v2285
    %v2287 = vpack.c.bf16 %v2284, %v2284
    %v2288 = vpack.c.bf16 %v2286, %v2286
    %2289 = vrot.lane.b32.xlu0 %v1507, 40
    %v2290 = vpop.permute.xlu0 %2289
    %v2292 = vsel %vm217, %v2287, 0
    %v2295 = vsel %vm341, %v2290, 0
    %2297 = vmatprep.subr.bf16.mxu0 0
    %2298 = vmatpush1.bf16.msra.mxu0 0
    %2299 = vmatprep.subr.bf16.mxu0 0
    %2300 = vmatpush1.bf16.msra.mxu0 0
    %2301 = vmatprep.subr.bf16.mxu0 0
    %2302 = vmatpush1.bf16.msra.mxu0 0
    %2303 = vmatprep.subr.bf16.mxu0 0
    %2304 = vmatpush1.bf16.msra.mxu0 0
    %2305 = vmatprep.subr.bf16.mxu0 0
    %2306 = vmatpush1.bf16.msra.mxu0 0
    %2307 = vmatprep.subr.bf16.mxu0 0
    %2308 = vmatpush1.bf16.msra.mxu0 0
    %2309 = vmatprep.subr.bf16.mxu0 0
    %2310 = vmatpush1.bf16.msra.mxu0 0
    %2311 = vmatprep.subr.bf16.mxu0 0
    %2312 = vmatpush1.bf16.msra.mxu0 %v2295
    %2313 = vmatprep.subr.bf16.mxu0 0
    %2314 = vmatpush2.bf16.msra.mxu0 0
    %2315 = vmatprep.subr.bf16.mxu0 0
    %2316 = vmatpush2.bf16.msra.mxu0 0
    %2317 = vmatprep.subr.bf16.mxu0 0
    %2318 = vmatpush2.bf16.msra.mxu0 0
    %2319 = vmatprep.subr.bf16.mxu0 0
    %2320 = vmatpush2.bf16.msra.mxu0 0
    %2321 = vmatprep.subr.bf16.mxu0 0
    %2322 = vmatpush2.bf16.msra.mxu0 0
    %2323 = vmatprep.subr.bf16.mxu0 0
    %2324 = vmatpush2.bf16.msra.mxu0 0
    %2325 = vmatprep.subr.bf16.mxu0 0
    %2326 = vmatpush2.bf16.msra.mxu0 0
    %2327 = vmatprep.subr.bf16.mxu0 0
    %2328 = vmatpush2.bf16.msra.mxu0 0
    %2329 = vmatprep.mubr.bf16.mxu0 0
    %2330 = vmatmul.mubr.bf16.gmra.mxu0 %v2292
    %v2331 = vpop.f32.mrf.mxu0
    %v2332 = vadd.f32 0.0, %v2331
    %v2333 = vpop.f32.mrf.mxu0
    %v2334 = vpop.f32.mrf.mxu0
    %v2335 = vpop.f32.mrf.mxu0
    %2336 = vdwg.mxu0
    %2337 = vrot.lane.b32.xlu0 %v1508, 40
    %v2338 = vpop.permute.xlu0 %2337
    %v2340 = vsel %vm217, %v2288, 0
    %v2343 = vsel %vm341, %v2338, 0
    %2345 = vmatprep.subr.bf16.mxu0 0
    %2346 = vmatpush1.bf16.msra.mxu0 0
    %2347 = vmatprep.subr.bf16.mxu0 0
    %2348 = vmatpush1.bf16.msra.mxu0 0
    %2349 = vmatprep.subr.bf16.mxu0 0
    %2350 = vmatpush1.bf16.msra.mxu0 0
    %2351 = vmatprep.subr.bf16.mxu0 0
    %2352 = vmatpush1.bf16.msra.mxu0 0
    %2353 = vmatprep.subr.bf16.mxu0 0
    %2354 = vmatpush1.bf16.msra.mxu0 0
    %2355 = vmatprep.subr.bf16.mxu0 0
    %2356 = vmatpush1.bf16.msra.mxu0 0
    %2357 = vmatprep.subr.bf16.mxu0 0
    %2358 = vmatpush1.bf16.msra.mxu0 0
    %2359 = vmatprep.subr.bf16.mxu0 0
    %2360 = vmatpush1.bf16.msra.mxu0 %v2343
    %2361 = vmatprep.subr.bf16.mxu0 0
    %2362 = vmatpush2.bf16.msra.mxu0 0
    %2363 = vmatprep.subr.bf16.mxu0 0
    %2364 = vmatpush2.bf16.msra.mxu0 0
    %2365 = vmatprep.subr.bf16.mxu0 0
    %2366 = vmatpush2.bf16.msra.mxu0 0
    %2367 = vmatprep.subr.bf16.mxu0 0
    %2368 = vmatpush2.bf16.msra.mxu0 0
    %2369 = vmatprep.subr.bf16.mxu0 0
    %2370 = vmatpush2.bf16.msra.mxu0 0
    %2371 = vmatprep.subr.bf16.mxu0 0
    %2372 = vmatpush2.bf16.msra.mxu0 0
    %2373 = vmatprep.subr.bf16.mxu0 0
    %2374 = vmatpush2.bf16.msra.mxu0 0
    %2375 = vmatprep.subr.bf16.mxu0 0
    %2376 = vmatpush2.bf16.msra.mxu0 0
    %2377 = vmatprep.mubr.bf16.mxu0 0
    %2378 = vmatmul.mubr.bf16.gmra.mxu0 %v2340
    %v2379 = vpop.f32.mrf.mxu0
    %v2380 = vadd.f32 0.0, %v2379
    %v2381 = vpop.f32.mrf.mxu0
    %v2382 = vpop.f32.mrf.mxu0
    %v2383 = vpop.f32.mrf.mxu0
    %2384 = vdwg.mxu0
    %2387 = vrot.lane.b32.xlu0 %v1892, 8
    %v2388 = vpop.permute.xlu0 %2387
    %2389 = vrot.lane.b32.xlu0 %v1940, 8
    %v2390 = vpop.permute.xlu0 %2389
    %2395 = vrot.lane.b32.xlu0 %v2112, 16
    %v2396 = vpop.permute.xlu0 %2395
    %2397 = vrot.lane.b32.xlu0 %v2160, 16
    %v2398 = vpop.permute.xlu0 %2397
    %2403 = vrot.lane.b32.xlu0 %v2332, 24
    %v2404 = vpop.permute.xlu0 %2403
    %2405 = vrot.lane.b32.xlu0 %v2380, 24
    %v2406 = vpop.permute.xlu0 %2405
    %v2409 = vsel %vm217, %v1672, %v2388
    %v2410 = vsel %vm217, %v1720, %v2390
    %v2411 = vsel %vm1119, %v2409, %v2396
    %v2412 = vsel %vm1119, %v2410, %v2398
    %v2413 = vsel %vm1122, %v2411, %v2404
    %v2414 = vsel %vm1122, %v2412, %v2406
    %v2415 = vpack.c.bf16 %v2414, %v2413
    %v2416 = vlaneseq
    %v2417 = vshrl.u32 %v2416, 7
    %v2418 = vsub.s32 0, %v2417
    %v2419 = vrot.slane %v1415, %v2418
    %v2424 = vunpack.c.l.b16 %v1426
    %v2425 = vunpack.c.l.b16 %v1427
    %v2426 = vunpack.c.l.b16 %v1428
    %v2427 = vunpack.c.l.b16 %v1429
    %v2428 = vpack.c.b16 %v2425, %v2424
    %v2429 = vpack.c.b16 %v2427, %v2426
    %v2433 = vsel %vm80, %v2415, 0
    %2435 = vmatprep.subr.bf16.mxu0 0
    %2436 = vmatpush1.bf16.msra.mxu0 0
    %2437 = vmatprep.subr.bf16.mxu0 0
    %2438 = vmatpush1.bf16.msra.mxu0 0
    %2439 = vmatprep.subr.bf16.mxu0 0
    %2440 = vmatpush1.bf16.msra.mxu0 0
    %2441 = vmatprep.subr.bf16.mxu0 0
    %2442 = vmatpush1.bf16.msra.mxu0 0
    %2443 = vmatprep.subr.bf16.mxu0 0
    %2444 = vmatpush1.bf16.msra.mxu0 0
    %2445 = vmatprep.subr.bf16.mxu0 0
    %2446 = vmatpush1.bf16.msra.mxu0 0
    %2447 = vmatprep.subr.bf16.mxu0 0
    %2448 = vmatpush1.bf16.msra.mxu0 %v2429
    %2449 = vmatprep.subr.bf16.mxu0 0
    %2450 = vmatpush1.bf16.msra.mxu0 %v2428
    %2451 = vmatprep.subr.bf16.mxu0 0
    %2452 = vmatpush2.bf16.msra.mxu0 0
    %2453 = vmatprep.subr.bf16.mxu0 0
    %2454 = vmatpush2.bf16.msra.mxu0 0
    %2455 = vmatprep.subr.bf16.mxu0 0
    %2456 = vmatpush2.bf16.msra.mxu0 0
    %2457 = vmatprep.subr.bf16.mxu0 0
    %2458 = vmatpush2.bf16.msra.mxu0 0
    %2459 = vmatprep.subr.bf16.mxu0 0
    %2460 = vmatpush2.bf16.msra.mxu0 0
    %2461 = vmatprep.subr.bf16.mxu0 0
    %2462 = vmatpush2.bf16.msra.mxu0 0
    %2463 = vmatprep.subr.bf16.mxu0 0
    %2464 = vmatpush2.bf16.msra.mxu0 0
    %2465 = vmatprep.subr.bf16.mxu0 0
    %2466 = vmatpush2.bf16.msra.mxu0 0
    %2467 = vmatprep.mubr.bf16.mxu0 0
    %2468 = vmatmul.mubr.bf16.gmra.mxu0 %v2433
    %v2469 = vpop.f32.mrf.mxu0
    %v2470 = vadd.f32 %v2419, %v2469
    %v2471 = vpop.f32.mrf.mxu0
    %v2472 = vpop.f32.mrf.mxu0
    %v2473 = vadd.f32 %v2419, %v2472
    %v2474 = vpop.f32.mrf.mxu0
    %2475 = vdwg.mxu0
    %v2476 = vadd.f32 %v2470, %v1409
    %v2477 = vadd.f32 %v2473, %v1410
    %v2478 = vsel %vm80, %v2476, 0.0
    %2479 = vadd.xlane.f32.xlu0 %v2478
    %v2480 = vpop.xlane.xlu0 %2479
    %v2481 = vsel %vm80, %v2477, 0.0
    %2482 = vadd.xlane.f32.xlu0 %v2481
    %v2483 = vpop.xlane.xlu0 %2482
    %v2484 = vmul.f32 %v2480, %v87
    %v2485 = vmul.f32 %v2483, %v87
    %v2486 = vsub.f32 %v2476, %v2484
    %v2487 = vsub.f32 %v2477, %v2485
    %v2488 = vmul.f32 %v2486, %v2486
    %v2489 = vmul.f32 %v2487, %v2487
    %v2490 = vsel %vm80, %v2488, 0.0
    %2491 = vadd.xlane.f32.xlu0 %v2490
    %v2492 = vpop.xlane.xlu0 %2491
    %v2493 = vsel %vm80, %v2489, 0.0
    %2494 = vadd.xlane.f32.xlu0 %v2493
    %v2495 = vpop.xlane.xlu0 %2494
    %v2496 = vmul.f32 %v2492, %v87
    %v2497 = vmul.f32 %v2495, %v87
    %v2498 = vadd.f32 %v2496, 1e-12
    %v2499 = vadd.f32 %v2497, 1e-12
    %v2500 = vrsqrt.pop %v2498
    %v2501 = vrsqrt.pop %v2499
    %v2502 = vmul.f32 %v2486, %v2500
    %v2503 = vmul.f32 %v2487, %v2501
    %v2504 = vlaneseq
    %v2505 = vshrl.u32 %v2504, 7
    %v2506 = vsub.s32 0, %v2505
    %v2507 = vrot.slane %v1416, %v2506
    %v2508 = vmul.f32 %v2507, %v2502
    %v2509 = vmul.f32 %v2507, %v2503
    %v2510 = vlaneseq
    %v2511 = vshrl.u32 %v2510, 7
    %v2512 = vsub.s32 0, %v2511
    %v2513 = vrot.slane %v1417, %v2512
    %v2514 = vadd.f32 %v2508, %v2513
    %v2515 = vadd.f32 %v2509, %v2513
    %v2516 = vpack.c.bf16 %v2515, %v2514
    %v2517 = vlaneseq
    %v2518 = vshrl.u32 %v2517, 7
    %v2519 = vsub.s32 0, %v2518
    %v2520 = vrot.slane %v1414, %v2519
    %v2525 = vunpack.c.l.b16 %v1430
    %v2526 = vunpack.c.l.b16 %v1431
    %v2527 = vunpack.c.l.b16 %v1432
    %v2528 = vunpack.c.l.b16 %v1433
    %v2529 = vpack.c.b16 %v2526, %v2525
    %v2530 = vpack.c.b16 %v2528, %v2527
    %v2534 = vsel %vm80, %v2516, 0
    %2536 = vmatprep.subr.bf16.mxu0 0
    %2537 = vmatpush1.bf16.msra.mxu0 0
    %2538 = vmatprep.subr.bf16.mxu0 0
    %2539 = vmatpush1.bf16.msra.mxu0 0
    %2540 = vmatprep.subr.bf16.mxu0 0
    %2541 = vmatpush1.bf16.msra.mxu0 0
    %2542 = vmatprep.subr.bf16.mxu0 0
    %2543 = vmatpush1.bf16.msra.mxu0 0
    %2544 = vmatprep.subr.bf16.mxu0 0
    %2545 = vmatpush1.bf16.msra.mxu0 0
    %2546 = vmatprep.subr.bf16.mxu0 0
    %2547 = vmatpush1.bf16.msra.mxu0 0
    %2548 = vmatprep.subr.bf16.mxu0 0
    %2549 = vmatpush1.bf16.msra.mxu0 %v2530
    %2550 = vmatprep.subr.bf16.mxu0 0
    %2551 = vmatpush1.bf16.msra.mxu0 %v2529
    %2552 = vmatprep.subr.bf16.mxu0 0
    %2553 = vmatpush2.bf16.msra.mxu0 0
    %2554 = vmatprep.subr.bf16.mxu0 0
    %2555 = vmatpush2.bf16.msra.mxu0 0
    %2556 = vmatprep.subr.bf16.mxu0 0
    %2557 = vmatpush2.bf16.msra.mxu0 0
    %2558 = vmatprep.subr.bf16.mxu0 0
    %2559 = vmatpush2.bf16.msra.mxu0 0
    %2560 = vmatprep.subr.bf16.mxu0 0
    %2561 = vmatpush2.bf16.msra.mxu0 0
    %2562 = vmatprep.subr.bf16.mxu0 0
    %2563 = vmatpush2.bf16.msra.mxu0 0
    %2564 = vmatprep.subr.bf16.mxu0 0
    %2565 = vmatpush2.bf16.msra.mxu0 0
    %2566 = vmatprep.subr.bf16.mxu0 0
    %2567 = vmatpush2.bf16.msra.mxu0 0
    %2568 = vmatprep.mubr.bf16.mxu0 0
    %2569 = vmatmul.mubr.bf16.gmra.mxu0 %v2534
    %v2570 = vpop.f32.mrf.mxu0
    %v2571 = vadd.f32 %v2520, %v2570
    %v2572 = vpop.f32.mrf.mxu0
    %v2573 = vpop.f32.mrf.mxu0
    %v2574 = vadd.f32 %v2520, %v2573
    %v2575 = vpop.f32.mrf.mxu0
    %2576 = vdwg.mxu0
    %v2577 = vmul.f32 %v2571, 0.5
    %v2578 = vmul.f32 %v2574, 0.5
    %v2579 = vmul.f32 %v2571, 0.70710677
    %v2580 = vmul.f32 %v2574, 0.70710677
    %v2581 = verf.f32.pop %v2579
    %v2582 = verf.f32.pop %v2580
    %v2583 = vadd.f32 %v2581, 1.0
    %v2584 = vadd.f32 %v2582, 1.0
    %v2585 = vmul.f32 %v2577, %v2583
    %v2586 = vmul.f32 %v2578, %v2584
    %v2587 = vpack.c.bf16 %v2586, %v2585
    %v2588 = vlaneseq
    %v2589 = vshrl.u32 %v2588, 7
    %v2590 = vsub.s32 0, %v2589
    %v2591 = vrot.slane %v1418, %v2590
    %v2600 = vunpack.c.l.b16 %v1434
    %v2601 = vunpack.c.l.b16 %v1435
    %v2602 = vunpack.c.l.b16 %v1436
    %v2603 = vunpack.c.l.b16 %v1437
    %v2604 = vunpack.c.l.b16 %v1438
    %v2605 = vunpack.c.l.b16 %v1439
    %v2606 = vunpack.c.l.b16 %v1440
    %v2607 = vunpack.c.l.b16 %v1441
    %v2608 = vpack.c.b16 %v2601, %v2600
    %v2609 = vpack.c.b16 %v2603, %v2602
    %v2610 = vpack.c.b16 %v2605, %v2604
    %v2611 = vpack.c.b16 %v2607, %v2606
    %v2617 = vsel %vm1326, %v2587, 0
    %2619 = vmatprep.subr.bf16.mxu0 0
    %2620 = vmatpush1.bf16.msra.mxu0 0
    %2621 = vmatprep.subr.bf16.mxu0 0
    %2622 = vmatpush1.bf16.msra.mxu0 0
    %2623 = vmatprep.subr.bf16.mxu0 0
    %2624 = vmatpush1.bf16.msra.mxu0 0
    %2625 = vmatprep.subr.bf16.mxu0 0
    %2626 = vmatpush1.bf16.msra.mxu0 0
    %2627 = vmatprep.subr.bf16.mxu0 0
    %2628 = vmatpush1.bf16.msra.mxu0 %v2611
    %2629 = vmatprep.subr.bf16.mxu0 0
    %2630 = vmatpush1.bf16.msra.mxu0 %v2610
    %2631 = vmatprep.subr.bf16.mxu0 0
    %2632 = vmatpush1.bf16.msra.mxu0 %v2609
    %2633 = vmatprep.subr.bf16.mxu0 0
    %2634 = vmatpush1.bf16.msra.mxu0 %v2608
    %2635 = vmatprep.subr.bf16.mxu0 0
    %2636 = vmatpush2.bf16.msra.mxu0 0
    %2637 = vmatprep.subr.bf16.mxu0 0
    %2638 = vmatpush2.bf16.msra.mxu0 0
    %2639 = vmatprep.subr.bf16.mxu0 0
    %2640 = vmatpush2.bf16.msra.mxu0 0
    %2641 = vmatprep.subr.bf16.mxu0 0
    %2642 = vmatpush2.bf16.msra.mxu0 0
    %2643 = vmatprep.subr.bf16.mxu0 0
    %2644 = vmatpush2.bf16.msra.mxu0 0
    %2645 = vmatprep.subr.bf16.mxu0 0
    %2646 = vmatpush2.bf16.msra.mxu0 0
    %2647 = vmatprep.subr.bf16.mxu0 0
    %2648 = vmatpush2.bf16.msra.mxu0 0
    %2649 = vmatprep.subr.bf16.mxu0 0
    %2650 = vmatpush2.bf16.msra.mxu0 0
    %2651 = vmatprep.mubr.bf16.mxu0 0
    %2652 = vmatmul.mubr.bf16.gmra.mxu0 %v2617
    %v2653 = vpop.f32.mrf.mxu0
    %v2654 = vadd.f32 %v2591, %v2653
    %v2655 = vpop.f32.mrf.mxu0
    %v2656 = vpop.f32.mrf.mxu0
    %v2657 = vadd.f32 %v2591, %v2656
    %v2658 = vpop.f32.mrf.mxu0
    %2659 = vdwg.mxu0
    %v2660 = vadd.f32 %v2654, %v2514
    %v2661 = vadd.f32 %v2657, %v2515
    %v2662 = vsel %vm80, %v2660, 0.0
    %2663 = vadd.xlane.f32.xlu0 %v2662
    %v2664 = vpop.xlane.xlu0 %2663
    %v2665 = vsel %vm80, %v2661, 0.0
    %2666 = vadd.xlane.f32.xlu0 %v2665
    %v2667 = vpop.xlane.xlu0 %2666
    %v2668 = vmul.f32 %v2664, %v87
    %v2669 = vmul.f32 %v2667, %v87
    %v2670 = vsub.f32 %v2660, %v2668
    %v2671 = vsub.f32 %v2661, %v2669
    %v2672 = vmul.f32 %v2670, %v2670
    %v2673 = vmul.f32 %v2671, %v2671
    %v2674 = vsel %vm80, %v2672, 0.0
    %2675 = vadd.xlane.f32.xlu0 %v2674
    %v2676 = vpop.xlane.xlu0 %2675
    %v2677 = vsel %vm80, %v2673, 0.0
    %2678 = vadd.xlane.f32.xlu0 %v2677
    %v2679 = vpop.xlane.xlu0 %2678
    %v2680 = vmul.f32 %v2676, %v87
    %v2681 = vmul.f32 %v2679, %v87
    %v2682 = vadd.f32 %v2680, 1e-12
    %v2683 = vadd.f32 %v2681, 1e-12
    %v2684 = vrsqrt.pop %v2682
    %v2685 = vrsqrt.pop %v2683
    %v2686 = vmul.f32 %v2670, %v2684
    %v2687 = vmul.f32 %v2671, %v2685
    %v2688 = vlaneseq
    %v2689 = vshrl.u32 %v2688, 7
    %v2690 = vsub.s32 0, %v2689
    %v2691 = vrot.slane %v1419, %v2690
    %v2692 = vmul.f32 %v2691, %v2686
    %v2693 = vmul.f32 %v2691, %v2687
    %v2694 = vlaneseq
    %v2695 = vshrl.u32 %v2694, 7
    %v2696 = vsub.s32 0, %v2695
    %v2697 = vrot.slane %v1420, %v2696
    %v2698 = vadd.f32 %v2692, %v2697
    %v2699 = vadd.f32 %v2693, %v2697
    %s2700 = scalar_lea.vmem [#allocation10], 16
    %2701 = vst.msk [vmem:[%s2700] sm:$0xff] %vm80, %v2698
    %2702 = vst.msk [vmem:[%s2700 + $0x8] sm:$0xff] %vm80, %v2699
    // Predicated region
    $region34: #{_forward_impl.1} parent=1 // pred_check
      _
    $region35: #{_forward_impl.1} parent=1 // pred_check_branch
      %2704 = sbr.rel (0) target = $region37
    $region36: #{_forward_impl.1} parent=1 // pred_region
      %s2706 = ssub.s32 512, 512
      %2707 = vsyncadd [#allocation4], %s2706
      %s2708 = sshll.u32 [#allocation10], 4
      %s2709 = int_to_ptr.vmem [resolvable:$true] %s2708
      %2714 = dma.vmem_to_hbm [thread:$0]  %s2709, 512, %s4, [#allocation4], 128, 128, 8
    $region37: #{_forward_impl.1} parent=1 // pred_fallthru
      _
    // Predicated region
    $region38: #{_forward_impl.1} parent=1 // pred_check
      _
    $region39: #{_forward_impl.1} parent=1 // pred_check_branch
      %2716 = sbr.rel (0) target = $region41
    $region40: #{_forward_impl.1} parent=1 // pred_region
      %2717 = dma.done [#allocation4], 512
    $region41: #{_forward_impl.1} parent=1 // pred_fallthru
      _
    %2718 = vsyncpa [#allocation3], 1
    %2719 = vsyncpa [#allocation6], 1
    %2720 = vsyncpa [#allocation9], 1
    %2721 = vsyncpa [#allocation4], 1

</llo_original>
